<compile_context>
chip_gen: v6e
topology: v6e:2x2x1
jax: 0.10.0
libtpu: 0.0.40
codegen_flags: <defaults>
</compile_context>

<pallas_src>
import jax
import jax.numpy as jnp
import numpy as np
from jax.experimental import pallas as pl
from jax.experimental.pallas import tpu as pltpu

EPS = 1e-5
PTOP = 8          # vertical zero-pad rows above/below the resident activation
NEG = -1e30       # -inf stand-in for masked max-pool taps

# name -> (kind, kernel_size, padding, dilation)
_OP_CFG = {
    'sepconv3x3': ('sep', 3, 1, 1),
    'sepconv5x5': ('sep', 5, 2, 1),
    'dilconv3x3': ('dil', 3, 2, 2),
    'dilconv5x5': ('dil', 5, 4, 2),
}


def _const_index_map(nd):
    return lambda b: (0,) * nd


def _make_kernel(program, *, H, W, Cin, C, Bb, n_classes, n_params):
    """Whole-path fused kernel.  `program` is a static tuple of steps:
       ('preproc',) | ('conv', K, pad, dil) | ('maxpool',) | ('avgpool',) |
       ('head',).  Param counts per step: preproc/conv/head = 2, pools = 3."""
    WC, WCin = W * C, W * Cin
    n_steps = len(program)
    bh = H // 4

    def kernel(*refs):
        x_ref = refs[0]
        prefs = refs[1:1 + n_params]
        o_ref = refs[1 + n_params]
        xp_ref = refs[2 + n_params]      # (Bb, H+2*PTOP, W*C)   resident activation
        xin_ref = refs[3 + n_params]     # (Bb, H+2*PTOP, W*Cin) padded input

        def write_center(y, relu):
            # ReLU is applied exactly once, here, iff the statically-known next
            # step is a conv (ReLU(0-pad) == 0-pad(ReLU) keeps borders valid).
            if relu:
                y = jnp.maximum(y, 0.0)
            xp_ref[:, PTOP:PTOP + H, :] = y

        def shift_w(x, dw):
            # out[..., w*C+c] = x[..., (w-dw)*C+c]; lanes with no source hold
            # wrapped garbage and are killed by the additive NEG mask.
            s = dw * C
            if s == 0:
                return x
            if s > 0:
                return jnp.concatenate([x[..., WC - s:], x[..., :WC - s]], -1)
            s = -s
            return jnp.concatenate([x[..., s:], x[..., :s]], -1)

        # Zero only the border rows convs/pools ever read; the center region is
        # fully rewritten by every layer (no full-buffer memset).
        zc = jnp.zeros((Bb, PTOP, WC), jnp.float32)
        xp_ref[:, 0:PTOP, :] = zc
        xp_ref[:, PTOP + H:2 * PTOP + H, :] = zc
        zi = jnp.zeros((Bb, PTOP, WCin), jnp.float32)
        xin_ref[:, 0:PTOP, :] = zi
        xin_ref[:, PTOP + H:2 * PTOP + H, :] = zi
        xin_ref[:, PTOP:PTOP + H, :] = x_ref[...]

        pi = 0
        for si, step in enumerate(program):
            kind = step[0]
            relu_next = (si + 1 < n_steps) and (program[si + 1][0] == 'conv')

            if kind in ('preproc', 'conv'):
                if kind == 'preproc':
                    K, p, d, src, srcw = 3, 1, 1, xin_ref, WCin
                else:
                    _, K, p, d = step
                    src, srcw = xp_ref, WC
                w_ref, b_ref = prefs[pi], prefs[pi + 1]
                pi += 2
                acc = None
                for kh in range(K):
                    off = PTOP - p + kh * d
                    rows = src[:, off:off + H, :].reshape(Bb * H, srcw)
                    term = jnp.dot(rows, w_ref[kh],
                                   preferred_element_type=jnp.float32)
                    acc = term if acc is None else acc + term
                y = acc.reshape(Bb, H, WC) + b_ref[...]
                write_center(y, relu_next)

            elif kind == 'maxpool':
                m_ref, s_ref, sh_ref = prefs[pi], prefs[pi + 1], prefs[pi + 2]
                pi += 3
                acc = None
                t = 0
                for kh in range(3):
                    rows = xp_ref[:, PTOP - 1 + kh:PTOP - 1 + kh + H, :]
                    for kw in range(3):
                        tap = shift_w(rows, 1 - kw) + m_ref[t]
                        acc = tap if acc is None else jnp.maximum(acc, tap)
                        t += 1
                write_center(acc * s_ref[...] + sh_ref[...], relu_next)

            elif kind == 'avgpool':
                a_ref, s_ref, sh_ref = prefs[pi], prefs[pi + 1], prefs[pi + 2]
                pi += 3
                vsum = (xp_ref[:, PTOP - 1:PTOP - 1 + H, :] +
                        xp_ref[:, PTOP:PTOP + H, :] +
                        xp_ref[:, PTOP + 1:PTOP + 1 + H, :])
                hsum = jnp.dot(vsum.reshape(Bb * H, WC), a_ref[...],
                               preferred_element_type=jnp.float32)
                # s_ref = 1/valid-count map (count_include_pad=False); BN scale
                # is folded into the columns of a_ref.
                y = hsum.reshape(Bb, H, WC) * s_ref[...] + sh_ref[...]
                write_center(y, relu_next)

            else:  # 'head': AdaptiveAvgPool2d(4) + flatten + Linear (folded).
                hw_ref, hb_ref = prefs[pi], prefs[pi + 1]
                pi += 2
                cur = xp_ref[:, PTOP:PTOP + H, :]
                res = None
                for i in range(4):
                    s = cur[:, i * bh, :]
                    for r in range(1, bh):
                        s = s + cur[:, i * bh + r, :]
                    term = jnp.dot(s, hw_ref[i],
                                   preferred_element_type=jnp.float32)
                    res = term if res is None else res + term
                res = res + hb_ref[...]
                o_ref[...] = res.reshape(Bb, 1, n_classes)

    return kernel


class MPNASPallas:
    """MPNAS forward (inference-mode BN) as one fused Pallas TPU kernel."""

    def __init__(self, key, input_size, input_channels, channels, layers,
                 nodes_per_layer, n_classes=10, num_domains=1):
        assert input_size % 4 == 0, "AdaptiveAvgPool2d(4): exact-division case only"
        # TODO(synk): general (non-divisible) adaptive pooling not implemented.
        self.H = self.W = input_size
        self.Cin = input_channels
        self.C = channels
        self.n_layers = layers
        self.nodes_per_layer = nodes_per_layer
        self.n_classes = n_classes
        self.num_domains = num_domains
        self._key = key
        self._ctr = 0

        H, W, C, Cin = self.H, self.W, channels, input_channels
        WC = W * C

        # --- preproc conv(3x3, bias=False) + BN(affine), folded into per-kh matrices ---
        w = self._normal((C, Cin, 3, 3), 0.2)                  # torch OIHW
        self.preproc = []
        for _ in range(num_domains):
            scale, shift = self._bn_fold(C, affine=True)
            wfull = np.transpose(w, (2, 3, 1, 0)) * scale[None, None, None, :]
            self.preproc.append((self._fold_conv(wfull, 1, 1, Cin),
                                 self._tile_c(shift)))

        # --- max-pool additive -inf masks (geometry only, shared) ---
        mask = np.zeros((9, H, WC), np.float32)
        t = 0
        for kh in range(3):
            for kw in range(3):
                for h in range(H):
                    hbad = not (0 <= h + kh - 1 < H)
                    for wo in range(W):
                        if hbad or not (0 <= wo + kw - 1 < W):
                            mask[t, h, wo * C:(wo + 1) * C] = NEG
                t += 1
        self._mp_mask = jnp.asarray(mask)

        # --- avg-pool 1/valid-count map (count_include_pad=False), shared ---
        ones = np.pad(np.ones((H, W), np.float32), ((1, 1), (1, 1)))
        cnt = sum(ones[kh:kh + H, kw:kw + W]
                  for kh in range(3) for kw in range(3))
        self._avg_invcnt = jnp.asarray(
            np.repeat((1.0 / cnt).astype(np.float32), C, axis=1).reshape(1, H, WC))

        # --- head: GAP(4) + flatten + Linear folded into 4 (W*C, n_classes) blocks ---
        bhh, bww = H // 4, W // 4
        self.head = []
        for _ in range(num_domains):
            wt = self._normal((n_classes, C * 16), 0.05)       # torch (out, in)
            bt = self._normal((n_classes,), 0.05)
            hw = np.zeros((4, WC, n_classes), np.float32)
            for i in range(4):
                for wo in range(W):
                    j = wo // bww
                    for c in range(C):
                        hw[i, wo * C + c, :] = wt[:, c * 16 + i * 4 + j] / float(bhh * bww)
            self.head.append((jnp.asarray(hw), jnp.asarray(bt.reshape(1, n_classes))))

        self._op_params = {}   # lazy, deterministic per (name, layer, from, to)

    # ---- deterministic parameter helpers (host-side numpy) ----
    def _normal(self, shape, scale=0.1):
        k = jax.random.fold_in(self._key, self._ctr)
        self._ctr += 1
        return np.asarray(scale * jax.random.normal(k, shape, jnp.float32))

    def _bn_fold(self, C, affine):
        mean = self._normal((C,), 0.1)
        var = np.abs(self._normal((C,), 0.1)) + 1.0
        if affine:
            gamma = 1.0 + self._normal((C,), 0.1)
            beta = self._normal((C,), 0.1)
        else:
            gamma = np.ones((C,), np.float32)
            beta = np.zeros((C,), np.float32)
        scale = (gamma / np.sqrt(var + EPS)).astype(np.float32)
        shift = (beta - mean * scale).astype(np.float32)
        return scale, shift

    def _tile_c(self, vec_c):
        """Per-channel vector -> (1, 1, W*C) lane-dense bias/scale."""
        return jnp.asarray(np.tile(vec_c, self.W).reshape(1, 1, self.W * self.C))

    def _fold_conv(self, wfull, pad, dil, cin):
        """wfull: (kh, kw, cin, C) numpy, BN scale already folded into last axis.
        Returns (K, W*cin, W*C): per-kh matrices implementing the horizontal
        taps (zero padding) of the conv as a single MXU matmul."""
        K = wfull.shape[0]
        W, C = self.W, self.C
        M = np.zeros((K, W * cin, W * C), np.float32)
        for kh in range(K):
            for kw in range(K):
                blk = wfull[kh, kw]                            # (cin, C)
                for wo in range(W):
                    wi = wo + kw * dil - pad
                    if 0 <= wi < W:
                        M[kh, wi * cin:(wi + 1) * cin, wo * C:(wo + 1) * C] += blk
        return jnp.asarray(M)

    def _conv_block(self, K, pad, dil):
        """ReLU -> depthwise KxK -> pointwise 1x1 -> BN(affine=False), folded
        into per-kh matmul matrices + a (1,1,W*C) bias, per domain."""
        C = self.C
        wdw = self._normal((C, 1, K, K), 0.3)                  # torch depthwise
        wpw = self._normal((C, C, 1, 1), 0.3).reshape(C, C)    # torch (cout, cin)
        wdw_k = np.transpose(wdw[:, 0], (1, 2, 0))             # (kh, kw, cin)
        base = wdw_k[:, :, :, None] * wpw.T[None, None, :, :]  # (kh, kw, cin, cout)
        per = []
        for _ in range(self.num_domains):
            scale, shift = self._bn_fold(C, affine=False)
            per.append((self._fold_conv(base * scale[None, None, None, :],
                                        pad, dil, C),
                        self._tile_c(shift)))
        return per

    def _get_op(self, name, layer_idx, from_idx, to_idx):
        key = (name, layer_idx, from_idx, to_idx)
        if key in self._op_params:
            return self._op_params[key]
        C, W = self.C, self.W
        if name == 'maxpool':
            per = []
            for _ in range(self.num_domains):
                s, sh = self._bn_fold(C, affine=False)
                per.append((self._tile_c(s), self._tile_c(sh)))
            p = dict(bn=per)
        elif name == 'avgpool':
            per = []
            for _ in range(self.num_domains):
                s, sh = self._bn_fold(C, affine=False)
                A = np.zeros((W * C, W * C), np.float32)
                for kw in range(3):
                    for wo in range(W):
                        wi = wo + kw - 1
                        if 0 <= wi < W:
                            A[wi * C:(wi + 1) * C, wo * C:(wo + 1) * C] += np.diag(s)
                per.append((jnp.asarray(A), self._tile_c(sh)))
            p = dict(bn=per)
        elif name == 'skipconnect':
            p = {}
        else:
            kind, K, pad, dil = _OP_CFG[name]
            blocks = [self._conv_block(K, pad, dil)]
            if kind == 'sep':
                blocks.append(self._conv_block(K, pad, dil))
            p = dict(blocks=blocks)
        self._op_params[key] = p
        return p

    @staticmethod
    def _pick_bb(B):
        # Amortize per-grid-step overhead but keep >= 2 grid steps when
        # possible so both v7x TensorCores get work.
        for cand in (8, 4, 2):
            if B % cand == 0 and B // cand >= 2:
                return cand
        return 1

    # ---- forward ----
    def forward(self, x_nchw, path, domain_idx=0):
        assert len(path) == self.n_layers
        H, W, Cin, C, nc = self.H, self.W, self.Cin, self.C, self.n_classes
        WC, WCin = W * C, W * Cin
        B = x_nchw.shape[0]
        # NCHW -> NHWC, then fold (W, Cin) into the lane dim (lane-dense input).
        x = jnp.transpose(x_nchw, (0, 2, 3, 1)).astype(jnp.float32)
        x = x.reshape(B, H, WCin)

        # Build the static per-path program + flat parameter list.
        program = [('preproc',)]
        params = list(self.preproc[domain_idx])
        for i, (from_idx, to_idx, name) in enumerate(path):
            if name == 'skipconnect':
                continue
            op = self._get_op(name, i + 1, from_idx, to_idx)
            if name == 'maxpool':
                s, sh = op['bn'][domain_idx]
                program.append(('maxpool',))
                params += [self._mp_mask, s, sh]
            elif name == 'avgpool':
                A, sh = op['bn'][domain_idx]
                program.append(('avgpool',))
                params += [A, self._avg_invcnt, sh]
            else:
                _, K, pad, dil = _OP_CFG[name]
                for blk in op['blocks']:
                    M, b = blk[domain_idx]
                    program.append(('conv', K, pad, dil))
                    params += [M, b]
        program.append(('head',))
        params += list(self.head[domain_idx])

        Bb = self._pick_bb(B)
        kernel = _make_kernel(tuple(program), H=H, W=W, Cin=Cin, C=C, Bb=Bb,
                              n_classes=nc, n_params=len(params))

        in_specs = [pl.BlockSpec((Bb, H, WCin), lambda b: (b, 0, 0))]
        in_specs += [pl.BlockSpec(p.shape, _const_index_map(p.ndim)) for p in params]

        out = pl.pallas_call(
            kernel,
            out_shape=jax.ShapeDtypeStruct((B, 1, nc), jnp.float32),
            grid=(B // Bb,),
            in_specs=in_specs,
            out_specs=pl.BlockSpec((Bb, 1, nc), lambda b: (b, 0, 0)),
            scratch_shapes=[
                pltpu.VMEM((Bb, H + 2 * PTOP, WC), jnp.float32),
                pltpu.VMEM((Bb, H + 2 * PTOP, WCin), jnp.float32),
            ],
            compiler_params=pltpu.CompilerParams(
                dimension_semantics=("parallel",),
                vmem_limit_bytes=48 * 1024 * 1024),
        )(x, *params)
        return out.reshape(B, nc)


if __name__ == "__main__":
    key = jax.random.PRNGKey(0)
    k_params, k_x = jax.random.split(key)

    B, Cin, H, W = 2, 4, 16, 16
    channels = 8
    layers = 7
    nodes_per_layer = 2
    n_classes = 10

    path = [
        (0, 0, 'sepconv3x3'),
        (0, 1, 'sepconv5x5'),
        (1, 0, 'dilconv3x3'),
        (1, 1, 'dilconv5x5'),
        (0, 0, 'maxpool'),
        (0, 1, 'avgpool'),
        (1, 1, 'skipconnect'),
    ]

    model = MPNASPallas(k_params, H, Cin, channels, layers, nodes_per_layer,
                        n_classes=n_classes, num_domains=1)
    x = jax.random.normal(k_x, (B, Cin, H, W), jnp.float32)

    out = model.forward(x, path, domain_idx=0)
    out = jax.block_until_ready(out)
    assert out.shape == (B, n_classes), out.shape
    assert bool(jnp.all(jnp.isfinite(out)))
    print("KERNEL_OK")
</pallas_src>

<mosaic_0001>
module attributes {stable_mosaic.version = 11 : i64} {
  func.func @kernel(%arg0: i32, %arg1: memref<1x16x64xf32, #tpu.memory_space<vmem>>, %arg2: memref<3x64x128xf32, #tpu.memory_space<vmem>>, %arg3: memref<1x1x128xf32, #tpu.memory_space<vmem>>, %arg4: memref<3x128x128xf32, #tpu.memory_space<vmem>>, %arg5: memref<1x1x128xf32, #tpu.memory_space<vmem>>, %arg6: memref<3x128x128xf32, #tpu.memory_space<vmem>>, %arg7: memref<1x1x128xf32, #tpu.memory_space<vmem>>, %arg8: memref<5x128x128xf32, #tpu.memory_space<vmem>>, %arg9: memref<1x1x128xf32, #tpu.memory_space<vmem>>, %arg10: memref<5x128x128xf32, #tpu.memory_space<vmem>>, %arg11: memref<1x1x128xf32, #tpu.memory_space<vmem>>, %arg12: memref<3x128x128xf32, #tpu.memory_space<vmem>>, %arg13: memref<1x1x128xf32, #tpu.memory_space<vmem>>, %arg14: memref<5x128x128xf32, #tpu.memory_space<vmem>>, %arg15: memref<1x1x128xf32, #tpu.memory_space<vmem>>, %arg16: memref<9x16x128xf32, #tpu.memory_space<vmem>>, %arg17: memref<1x1x128xf32, #tpu.memory_space<vmem>>, %arg18: memref<1x1x128xf32, #tpu.memory_space<vmem>>, %arg19: memref<128x128xf32, #tpu.memory_space<vmem>>, %arg20: memref<1x16x128xf32, #tpu.memory_space<vmem>>, %arg21: memref<1x1x128xf32, #tpu.memory_space<vmem>>, %arg22: memref<4x128x10xf32, #tpu.memory_space<vmem>>, %arg23: memref<1x10xf32, #tpu.memory_space<vmem>>, %arg24: memref<1x1x10xf32, #tpu.memory_space<vmem>>, %arg25: memref<1x32x128xf32, #tpu.memory_space<vmem>>, %arg26: memref<1x32x64xf32, #tpu.memory_space<vmem>>) attributes {dimension_semantics = [#tpu.dimension_semantics<parallel>], iteration_bounds = array<i64: 2>, scalar_prefetch = 0 : i64, scratch_operands = 2 : i64, tpu.core_type = #tpu.core_type<tc>, window_params = [{transform_indices = @transform_0, window_bounds = array<i64: 1, 16, 64>}, {pipeline_mode = #tpu.pipeline_mode<synchronous>, transform_indices = @transform_1, window_bounds = array<i64: 3, 64, 128>}, {pipeline_mode = #tpu.pipeline_mode<synchronous>, transform_indices = @transform_2, window_bounds = array<i64: 1, 1, 128>}, {pipeline_mode = #tpu.pipeline_mode<synchronous>, transform_indices = @transform_3, window_bounds = array<i64: 3, 128, 128>}, {pipeline_mode = #tpu.pipeline_mode<synchronous>, transform_indices = @transform_4, window_bounds = array<i64: 1, 1, 128>}, {pipeline_mode = #tpu.pipeline_mode<synchronous>, transform_indices = @transform_5, window_bounds = array<i64: 3, 128, 128>}, {pipeline_mode = #tpu.pipeline_mode<synchronous>, transform_indices = @transform_6, window_bounds = array<i64: 1, 1, 128>}, {pipeline_mode = #tpu.pipeline_mode<synchronous>, transform_indices = @transform_7, window_bounds = array<i64: 5, 128, 128>}, {pipeline_mode = #tpu.pipeline_mode<synchronous>, transform_indices = @transform_8, window_bounds = array<i64: 1, 1, 128>}, {pipeline_mode = #tpu.pipeline_mode<synchronous>, transform_indices = @transform_9, window_bounds = array<i64: 5, 128, 128>}, {pipeline_mode = #tpu.pipeline_mode<synchronous>, transform_indices = @transform_10, window_bounds = array<i64: 1, 1, 128>}, {pipeline_mode = #tpu.pipeline_mode<synchronous>, transform_indices = @transform_11, window_bounds = array<i64: 3, 128, 128>}, {pipeline_mode = #tpu.pipeline_mode<synchronous>, transform_indices = @transform_12, window_bounds = array<i64: 1, 1, 128>}, {pipeline_mode = #tpu.pipeline_mode<synchronous>, transform_indices = @transform_13, window_bounds = array<i64: 5, 128, 128>}, {pipeline_mode = #tpu.pipeline_mode<synchronous>, transform_indices = @transform_14, window_bounds = array<i64: 1, 1, 128>}, {pipeline_mode = #tpu.pipeline_mode<synchronous>, transform_indices = @transform_15, window_bounds = array<i64: 9, 16, 128>}, {pipeline_mode = #tpu.pipeline_mode<synchronous>, transform_indices = @transform_16, window_bounds = array<i64: 1, 1, 128>}, {pipeline_mode = #tpu.pipeline_mode<synchronous>, transform_indices = @transform_17, window_bounds = array<i64: 1, 1, 128>}, {pipeline_mode = #tpu.pipeline_mode<synchronous>, transform_indices = @transform_18, window_bounds = array<i64: 128, 128>}, {pipeline_mode = #tpu.pipeline_mode<synchronous>, transform_indices = @transform_19, window_bounds = array<i64: 1, 16, 128>}, {pipeline_mode = #tpu.pipeline_mode<synchronous>, transform_indices = @transform_20, window_bounds = array<i64: 1, 1, 128>}, {pipeline_mode = #tpu.pipeline_mode<synchronous>, transform_indices = @transform_21, window_bounds = array<i64: 4, 128, 10>}, {pipeline_mode = #tpu.pipeline_mode<synchronous>, transform_indices = @transform_22, window_bounds = array<i64: 1, 10>}, {transform_indices = @transform_23, window_bounds = array<i64: 1, 1, 10>}]} {
    %cst = arith.constant 0.000000e+00 : f32
    %0 = vector.broadcast %cst : f32 to vector<1x8x128xf32>
    %c0 = arith.constant 0 : index
    %c0_0 = arith.constant 0 : index
    %c0_1 = arith.constant 0 : index
    %1 = vector.load %arg25[%c0, %c0_0, %c0_1] : memref<1x32x128xf32, #tpu.memory_space<vmem>>, vector<1x8x128xf32>
    tpu.vector_store %arg25[%c0, %c0_0, %c0_1], %0 {strides = array<i32>} : memref<1x32x128xf32, #tpu.memory_space<vmem>>, vector<1x8x128xf32>,
    %c0_2 = arith.constant 0 : index
    %c24 = arith.constant 24 : index
    %c0_3 = arith.constant 0 : index
    %2 = vector.load %arg25[%c0_2, %c24, %c0_3] : memref<1x32x128xf32, #tpu.memory_space<vmem>>, vector<1x8x128xf32>
    tpu.vector_store %arg25[%c0_2, %c24, %c0_3], %0 {strides = array<i32>} : memref<1x32x128xf32, #tpu.memory_space<vmem>>, vector<1x8x128xf32>,
    %cst_4 = arith.constant 0.000000e+00 : f32
    %3 = vector.broadcast %cst_4 : f32 to vector<1x8x64xf32>
    %c0_5 = arith.constant 0 : index
    %c0_6 = arith.constant 0 : index
    %c0_7 = arith.constant 0 : index
    %4 = vector.load %arg26[%c0_5, %c0_6, %c0_7] : memref<1x32x64xf32, #tpu.memory_space<vmem>>, vector<1x8x64xf32>
    tpu.vector_store %arg26[%c0_5, %c0_6, %c0_7], %3 {strides = array<i32>} : memref<1x32x64xf32, #tpu.memory_space<vmem>>, vector<1x8x64xf32>,
    %c0_8 = arith.constant 0 : index
    %c24_9 = arith.constant 24 : index
    %c0_10 = arith.constant 0 : index
    %5 = vector.load %arg26[%c0_8, %c24_9, %c0_10] : memref<1x32x64xf32, #tpu.memory_space<vmem>>, vector<1x8x64xf32>
    tpu.vector_store %arg26[%c0_8, %c24_9, %c0_10], %3 {strides = array<i32>} : memref<1x32x64xf32, #tpu.memory_space<vmem>>, vector<1x8x64xf32>,
    %c0_11 = arith.constant 0 : index
    %c0_12 = arith.constant 0 : index
    %c0_13 = arith.constant 0 : index
    %6 = vector.load %arg1[%c0_11, %c0_12, %c0_13] : memref<1x16x64xf32, #tpu.memory_space<vmem>>, vector<1x16x64xf32>
    %c0_14 = arith.constant 0 : index
    %c8 = arith.constant 8 : index
    %c0_15 = arith.constant 0 : index
    %7 = vector.load %arg26[%c0_14, %c8, %c0_15] : memref<1x32x64xf32, #tpu.memory_space<vmem>>, vector<1x16x64xf32>
    tpu.vector_store %arg26[%c0_14, %c8, %c0_15], %6 {strides = array<i32>} : memref<1x32x64xf32, #tpu.memory_space<vmem>>, vector<1x16x64xf32>,
    %c0_16 = arith.constant 0 : index
    %c7 = arith.constant 7 : index
    %c0_17 = arith.constant 0 : index
    %8 = vector.load %arg26[%c0_16, %c7, %c0_17] : memref<1x32x64xf32, #tpu.memory_space<vmem>>, vector<1x16x64xf32>
    %9 = vector.shape_cast %8 : vector<1x16x64xf32> to vector<16x64xf32>
    %c0_18 = arith.constant 0 : index
    %c0_19 = arith.constant 0 : index
    %c0_20 = arith.constant 0 : index
    %10 = vector.load %arg2[%c0_18, %c0_19, %c0_20] : memref<3x64x128xf32, #tpu.memory_space<vmem>>, vector<1x64x128xf32>
    %11 = vector.shape_cast %10 : vector<1x64x128xf32> to vector<64x128xf32>
    %cst_21 = arith.constant dense<0.000000e+00> : vector<16x128xf32>
    %12 = tpu.matmul %9, %11, %cst_21 {dimension_numbers = #tpu.dot_dimension_numbers<[1], [0], [0], [1], [0, 0, 1, 1], [], []>} : vector<16x64xf32>, vector<64x128xf32>, vector<16x128xf32> -> vector<16x128xf32>
    %c0_22 = arith.constant 0 : index
    %c8_23 = arith.constant 8 : index
    %c0_24 = arith.constant 0 : index
    %13 = vector.load %arg26[%c0_22, %c8_23, %c0_24] : memref<1x32x64xf32, #tpu.memory_space<vmem>>, vector<1x16x64xf32>
    %14 = vector.shape_cast %13 : vector<1x16x64xf32> to vector<16x64xf32>
    %c1 = arith.constant 1 : index
    %c0_25 = arith.constant 0 : index
    %c0_26 = arith.constant 0 : index
    %15 = vector.load %arg2[%c1, %c0_25, %c0_26] : memref<3x64x128xf32, #tpu.memory_space<vmem>>, vector<1x64x128xf32>
    %16 = vector.shape_cast %15 : vector<1x64x128xf32> to vector<64x128xf32>
    %cst_27 = arith.constant dense<0.000000e+00> : vector<16x128xf32>
    %17 = tpu.matmul %14, %16, %cst_27 {dimension_numbers = #tpu.dot_dimension_numbers<[1], [0], [0], [1], [0, 0, 1, 1], [], []>} : vector<16x64xf32>, vector<64x128xf32>, vector<16x128xf32> -> vector<16x128xf32>
    %18 = arith.addf %12, %17 : vector<16x128xf32>
    %c0_28 = arith.constant 0 : index
    %c9 = arith.constant 9 : index
    %c0_29 = arith.constant 0 : index
    %19 = vector.load %arg26[%c0_28, %c9, %c0_29] : memref<1x32x64xf32, #tpu.memory_space<vmem>>, vector<1x16x64xf32>
    %20 = vector.shape_cast %19 : vector<1x16x64xf32> to vector<16x64xf32>
    %c2 = arith.constant 2 : index
    %c0_30 = arith.constant 0 : index
    %c0_31 = arith.constant 0 : index
    %21 = vector.load %arg2[%c2, %c0_30, %c0_31] : memref<3x64x128xf32, #tpu.memory_space<vmem>>, vector<1x64x128xf32>
    %22 = vector.shape_cast %21 : vector<1x64x128xf32> to vector<64x128xf32>
    %cst_32 = arith.constant dense<0.000000e+00> : vector<16x128xf32>
    %23 = tpu.matmul %20, %22, %cst_32 {dimension_numbers = #tpu.dot_dimension_numbers<[1], [0], [0], [1], [0, 0, 1, 1], [], []>} : vector<16x64xf32>, vector<64x128xf32>, vector<16x128xf32> -> vector<16x128xf32>
    %24 = arith.addf %18, %23 : vector<16x128xf32>
    %25 = vector.shape_cast %24 : vector<16x128xf32> to vector<1x16x128xf32>
    %c0_33 = arith.constant 0 : index
    %c0_34 = arith.constant 0 : index
    %c0_35 = arith.constant 0 : index
    %26 = vector.load %arg3[%c0_33, %c0_34, %c0_35] : memref<1x1x128xf32, #tpu.memory_space<vmem>>, vector<1x1x128xf32>
    %27 = vector.broadcast %26 : vector<1x1x128xf32> to vector<1x16x128xf32>
    %28 = arith.addf %25, %27 : vector<1x16x128xf32>
    %cst_36 = arith.constant 0.000000e+00 : f32
    %29 = vector.broadcast %cst_36 : f32 to vector<1x16x128xf32>
    %30 = arith.maximumf %28, %29 : vector<1x16x128xf32>
    %c0_37 = arith.constant 0 : index
    %c8_38 = arith.constant 8 : index
    %c0_39 = arith.constant 0 : index
    %31 = vector.load %arg25[%c0_37, %c8_38, %c0_39] : memref<1x32x128xf32, #tpu.memory_space<vmem>>, vector<1x16x128xf32>
    tpu.vector_store %arg25[%c0_37, %c8_38, %c0_39], %30 {strides = array<i32>} : memref<1x32x128xf32, #tpu.memory_space<vmem>>, vector<1x16x128xf32>,
    %c0_40 = arith.constant 0 : index
    %c7_41 = arith.constant 7 : index
    %c0_42 = arith.constant 0 : index
    %32 = vector.load %arg25[%c0_40, %c7_41, %c0_42] : memref<1x32x128xf32, #tpu.memory_space<vmem>>, vector<1x16x128xf32>
    %33 = vector.shape_cast %32 : vector<1x16x128xf32> to vector<16x128xf32>
    %c0_43 = arith.constant 0 : index
    %c0_44 = arith.constant 0 : index
    %c0_45 = arith.constant 0 : index
    %34 = vector.load %arg4[%c0_43, %c0_44, %c0_45] : memref<3x128x128xf32, #tpu.memory_space<vmem>>, vector<1x128x128xf32>
    %35 = vector.shape_cast %34 : vector<1x128x128xf32> to vector<128x128xf32>
    %cst_46 = arith.constant dense<0.000000e+00> : vector<16x128xf32>
    %36 = tpu.matmul %33, %35, %cst_46 {dimension_numbers = #tpu.dot_dimension_numbers<[1], [0], [0], [1], [0, 0, 1, 1], [], []>} : vector<16x128xf32>, vector<128x128xf32>, vector<16x128xf32> -> vector<16x128xf32>
    %c0_47 = arith.constant 0 : index
    %c8_48 = arith.constant 8 : index
    %c0_49 = arith.constant 0 : index
    %37 = vector.load %arg25[%c0_47, %c8_48, %c0_49] : memref<1x32x128xf32, #tpu.memory_space<vmem>>, vector<1x16x128xf32>
    %38 = vector.shape_cast %37 : vector<1x16x128xf32> to vector<16x128xf32>
    %c1_50 = arith.constant 1 : index
    %c0_51 = arith.constant 0 : index
    %c0_52 = arith.constant 0 : index
    %39 = vector.load %arg4[%c1_50, %c0_51, %c0_52] : memref<3x128x128xf32, #tpu.memory_space<vmem>>, vector<1x128x128xf32>
    %40 = vector.shape_cast %39 : vector<1x128x128xf32> to vector<128x128xf32>
    %cst_53 = arith.constant dense<0.000000e+00> : vector<16x128xf32>
    %41 = tpu.matmul %38, %40, %cst_53 {dimension_numbers = #tpu.dot_dimension_numbers<[1], [0], [0], [1], [0, 0, 1, 1], [], []>} : vector<16x128xf32>, vector<128x128xf32>, vector<16x128xf32> -> vector<16x128xf32>
    %42 = arith.addf %36, %41 : vector<16x128xf32>
    %c0_54 = arith.constant 0 : index
    %c9_55 = arith.constant 9 : index
    %c0_56 = arith.constant 0 : index
    %43 = vector.load %arg25[%c0_54, %c9_55, %c0_56] : memref<1x32x128xf32, #tpu.memory_space<vmem>>, vector<1x16x128xf32>
    %44 = vector.shape_cast %43 : vector<1x16x128xf32> to vector<16x128xf32>
    %c2_57 = arith.constant 2 : index
    %c0_58 = arith.constant 0 : index
    %c0_59 = arith.constant 0 : index
    %45 = vector.load %arg4[%c2_57, %c0_58, %c0_59] : memref<3x128x128xf32, #tpu.memory_space<vmem>>, vector<1x128x128xf32>
    %46 = vector.shape_cast %45 : vector<1x128x128xf32> to vector<128x128xf32>
    %cst_60 = arith.constant dense<0.000000e+00> : vector<16x128xf32>
    %47 = tpu.matmul %44, %46, %cst_60 {dimension_numbers = #tpu.dot_dimension_numbers<[1], [0], [0], [1], [0, 0, 1, 1], [], []>} : vector<16x128xf32>, vector<128x128xf32>, vector<16x128xf32> -> vector<16x128xf32>
    %48 = arith.addf %42, %47 : vector<16x128xf32>
    %49 = vector.shape_cast %48 : vector<16x128xf32> to vector<1x16x128xf32>
    %c0_61 = arith.constant 0 : index
    %c0_62 = arith.constant 0 : index
    %c0_63 = arith.constant 0 : index
    %50 = vector.load %arg5[%c0_61, %c0_62, %c0_63] : memref<1x1x128xf32, #tpu.memory_space<vmem>>, vector<1x1x128xf32>
    %51 = vector.broadcast %50 : vector<1x1x128xf32> to vector<1x16x128xf32>
    %52 = arith.addf %49, %51 : vector<1x16x128xf32>
    %cst_64 = arith.constant 0.000000e+00 : f32
    %53 = vector.broadcast %cst_64 : f32 to vector<1x16x128xf32>
    %54 = arith.maximumf %52, %53 : vector<1x16x128xf32>
    %c0_65 = arith.constant 0 : index
    %c8_66 = arith.constant 8 : index
    %c0_67 = arith.constant 0 : index
    %55 = vector.load %arg25[%c0_65, %c8_66, %c0_67] : memref<1x32x128xf32, #tpu.memory_space<vmem>>, vector<1x16x128xf32>
    tpu.vector_store %arg25[%c0_65, %c8_66, %c0_67], %54 {strides = array<i32>} : memref<1x32x128xf32, #tpu.memory_space<vmem>>, vector<1x16x128xf32>,
    %c0_68 = arith.constant 0 : index
    %c7_69 = arith.constant 7 : index
    %c0_70 = arith.constant 0 : index
    %56 = vector.load %arg25[%c0_68, %c7_69, %c0_70] : memref<1x32x128xf32, #tpu.memory_space<vmem>>, vector<1x16x128xf32>
    %57 = vector.shape_cast %56 : vector<1x16x128xf32> to vector<16x128xf32>
    %c0_71 = arith.constant 0 : index
    %c0_72 = arith.constant 0 : index
    %c0_73 = arith.constant 0 : index
    %58 = vector.load %arg6[%c0_71, %c0_72, %c0_73] : memref<3x128x128xf32, #tpu.memory_space<vmem>>, vector<1x128x128xf32>
    %59 = vector.shape_cast %58 : vector<1x128x128xf32> to vector<128x128xf32>
    %cst_74 = arith.constant dense<0.000000e+00> : vector<16x128xf32>
    %60 = tpu.matmul %57, %59, %cst_74 {dimension_numbers = #tpu.dot_dimension_numbers<[1], [0], [0], [1], [0, 0, 1, 1], [], []>} : vector<16x128xf32>, vector<128x128xf32>, vector<16x128xf32> -> vector<16x128xf32>
    %c0_75 = arith.constant 0 : index
    %c8_76 = arith.constant 8 : index
    %c0_77 = arith.constant 0 : index
    %61 = vector.load %arg25[%c0_75, %c8_76, %c0_77] : memref<1x32x128xf32, #tpu.memory_space<vmem>>, vector<1x16x128xf32>
    %62 = vector.shape_cast %61 : vector<1x16x128xf32> to vector<16x128xf32>
    %c1_78 = arith.constant 1 : index
    %c0_79 = arith.constant 0 : index
    %c0_80 = arith.constant 0 : index
    %63 = vector.load %arg6[%c1_78, %c0_79, %c0_80] : memref<3x128x128xf32, #tpu.memory_space<vmem>>, vector<1x128x128xf32>
    %64 = vector.shape_cast %63 : vector<1x128x128xf32> to vector<128x128xf32>
    %cst_81 = arith.constant dense<0.000000e+00> : vector<16x128xf32>
    %65 = tpu.matmul %62, %64, %cst_81 {dimension_numbers = #tpu.dot_dimension_numbers<[1], [0], [0], [1], [0, 0, 1, 1], [], []>} : vector<16x128xf32>, vector<128x128xf32>, vector<16x128xf32> -> vector<16x128xf32>
    %66 = arith.addf %60, %65 : vector<16x128xf32>
    %c0_82 = arith.constant 0 : index
    %c9_83 = arith.constant 9 : index
    %c0_84 = arith.constant 0 : index
    %67 = vector.load %arg25[%c0_82, %c9_83, %c0_84] : memref<1x32x128xf32, #tpu.memory_space<vmem>>, vector<1x16x128xf32>
    %68 = vector.shape_cast %67 : vector<1x16x128xf32> to vector<16x128xf32>
    %c2_85 = arith.constant 2 : index
    %c0_86 = arith.constant 0 : index
    %c0_87 = arith.constant 0 : index
    %69 = vector.load %arg6[%c2_85, %c0_86, %c0_87] : memref<3x128x128xf32, #tpu.memory_space<vmem>>, vector<1x128x128xf32>
    %70 = vector.shape_cast %69 : vector<1x128x128xf32> to vector<128x128xf32>
    %cst_88 = arith.constant dense<0.000000e+00> : vector<16x128xf32>
    %71 = tpu.matmul %68, %70, %cst_88 {dimension_numbers = #tpu.dot_dimension_numbers<[1], [0], [0], [1], [0, 0, 1, 1], [], []>} : vector<16x128xf32>, vector<128x128xf32>, vector<16x128xf32> -> vector<16x128xf32>
    %72 = arith.addf %66, %71 : vector<16x128xf32>
    %73 = vector.shape_cast %72 : vector<16x128xf32> to vector<1x16x128xf32>
    %c0_89 = arith.constant 0 : index
    %c0_90 = arith.constant 0 : index
    %c0_91 = arith.constant 0 : index
    %74 = vector.load %arg7[%c0_89, %c0_90, %c0_91] : memref<1x1x128xf32, #tpu.memory_space<vmem>>, vector<1x1x128xf32>
    %75 = vector.broadcast %74 : vector<1x1x128xf32> to vector<1x16x128xf32>
    %76 = arith.addf %73, %75 : vector<1x16x128xf32>
    %cst_92 = arith.constant 0.000000e+00 : f32
    %77 = vector.broadcast %cst_92 : f32 to vector<1x16x128xf32>
    %78 = arith.maximumf %76, %77 : vector<1x16x128xf32>
    %c0_93 = arith.constant 0 : index
    %c8_94 = arith.constant 8 : index
    %c0_95 = arith.constant 0 : index
    %79 = vector.load %arg25[%c0_93, %c8_94, %c0_95] : memref<1x32x128xf32, #tpu.memory_space<vmem>>, vector<1x16x128xf32>
    tpu.vector_store %arg25[%c0_93, %c8_94, %c0_95], %78 {strides = array<i32>} : memref<1x32x128xf32, #tpu.memory_space<vmem>>, vector<1x16x128xf32>,
    %c0_96 = arith.constant 0 : index
    %c6 = arith.constant 6 : index
    %c0_97 = arith.constant 0 : index
    %80 = vector.load %arg25[%c0_96, %c6, %c0_97] : memref<1x32x128xf32, #tpu.memory_space<vmem>>, vector<1x16x128xf32>
    %81 = vector.shape_cast %80 : vector<1x16x128xf32> to vector<16x128xf32>
    %c0_98 = arith.constant 0 : index
    %c0_99 = arith.constant 0 : index
    %c0_100 = arith.constant 0 : index
    %82 = vector.load %arg8[%c0_98, %c0_99, %c0_100] : memref<5x128x128xf32, #tpu.memory_space<vmem>>, vector<1x128x128xf32>
    %83 = vector.shape_cast %82 : vector<1x128x128xf32> to vector<128x128xf32>
    %cst_101 = arith.constant dense<0.000000e+00> : vector<16x128xf32>
    %84 = tpu.matmul %81, %83, %cst_101 {dimension_numbers = #tpu.dot_dimension_numbers<[1], [0], [0], [1], [0, 0, 1, 1], [], []>} : vector<16x128xf32>, vector<128x128xf32>, vector<16x128xf32> -> vector<16x128xf32>
    %c0_102 = arith.constant 0 : index
    %c7_103 = arith.constant 7 : index
    %c0_104 = arith.constant 0 : index
    %85 = vector.load %arg25[%c0_102, %c7_103, %c0_104] : memref<1x32x128xf32, #tpu.memory_space<vmem>>, vector<1x16x128xf32>
    %86 = vector.shape_cast %85 : vector<1x16x128xf32> to vector<16x128xf32>
    %c1_105 = arith.constant 1 : index
    %c0_106 = arith.constant 0 : index
    %c0_107 = arith.constant 0 : index
    %87 = vector.load %arg8[%c1_105, %c0_106, %c0_107] : memref<5x128x128xf32, #tpu.memory_space<vmem>>, vector<1x128x128xf32>
    %88 = vector.shape_cast %87 : vector<1x128x128xf32> to vector<128x128xf32>
    %cst_108 = arith.constant dense<0.000000e+00> : vector<16x128xf32>
    %89 = tpu.matmul %86, %88, %cst_108 {dimension_numbers = #tpu.dot_dimension_numbers<[1], [0], [0], [1], [0, 0, 1, 1], [], []>} : vector<16x128xf32>, vector<128x128xf32>, vector<16x128xf32> -> vector<16x128xf32>
    %90 = arith.addf %84, %89 : vector<16x128xf32>
    %c0_109 = arith.constant 0 : index
    %c8_110 = arith.constant 8 : index
    %c0_111 = arith.constant 0 : index
    %91 = vector.load %arg25[%c0_109, %c8_110, %c0_111] : memref<1x32x128xf32, #tpu.memory_space<vmem>>, vector<1x16x128xf32>
    %92 = vector.shape_cast %91 : vector<1x16x128xf32> to vector<16x128xf32>
    %c2_112 = arith.constant 2 : index
    %c0_113 = arith.constant 0 : index
    %c0_114 = arith.constant 0 : index
    %93 = vector.load %arg8[%c2_112, %c0_113, %c0_114] : memref<5x128x128xf32, #tpu.memory_space<vmem>>, vector<1x128x128xf32>
    %94 = vector.shape_cast %93 : vector<1x128x128xf32> to vector<128x128xf32>
    %cst_115 = arith.constant dense<0.000000e+00> : vector<16x128xf32>
    %95 = tpu.matmul %92, %94, %cst_115 {dimension_numbers = #tpu.dot_dimension_numbers<[1], [0], [0], [1], [0, 0, 1, 1], [], []>} : vector<16x128xf32>, vector<128x128xf32>, vector<16x128xf32> -> vector<16x128xf32>
    %96 = arith.addf %90, %95 : vector<16x128xf32>
    %c0_116 = arith.constant 0 : index
    %c9_117 = arith.constant 9 : index
    %c0_118 = arith.constant 0 : index
    %97 = vector.load %arg25[%c0_116, %c9_117, %c0_118] : memref<1x32x128xf32, #tpu.memory_space<vmem>>, vector<1x16x128xf32>
    %98 = vector.shape_cast %97 : vector<1x16x128xf32> to vector<16x128xf32>
    %c3 = arith.constant 3 : index
    %c0_119 = arith.constant 0 : index
    %c0_120 = arith.constant 0 : index
    %99 = vector.load %arg8[%c3, %c0_119, %c0_120] : memref<5x128x128xf32, #tpu.memory_space<vmem>>, vector<1x128x128xf32>
    %100 = vector.shape_cast %99 : vector<1x128x128xf32> to vector<128x128xf32>
    %cst_121 = arith.constant dense<0.000000e+00> : vector<16x128xf32>
    %101 = tpu.matmul %98, %100, %cst_121 {dimension_numbers = #tpu.dot_dimension_numbers<[1], [0], [0], [1], [0, 0, 1, 1], [], []>} : vector<16x128xf32>, vector<128x128xf32>, vector<16x128xf32> -> vector<16x128xf32>
    %102 = arith.addf %96, %101 : vector<16x128xf32>
    %c0_122 = arith.constant 0 : index
    %c10 = arith.constant 10 : index
    %c0_123 = arith.constant 0 : index
    %103 = vector.load %arg25[%c0_122, %c10, %c0_123] : memref<1x32x128xf32, #tpu.memory_space<vmem>>, vector<1x16x128xf32>
    %104 = vector.shape_cast %103 : vector<1x16x128xf32> to vector<16x128xf32>
    %c4 = arith.constant 4 : index
    %c0_124 = arith.constant 0 : index
    %c0_125 = arith.constant 0 : index
    %105 = vector.load %arg8[%c4, %c0_124, %c0_125] : memref<5x128x128xf32, #tpu.memory_space<vmem>>, vector<1x128x128xf32>
    %106 = vector.shape_cast %105 : vector<1x128x128xf32> to vector<128x128xf32>
    %cst_126 = arith.constant dense<0.000000e+00> : vector<16x128xf32>
    %107 = tpu.matmul %104, %106, %cst_126 {dimension_numbers = #tpu.dot_dimension_numbers<[1], [0], [0], [1], [0, 0, 1, 1], [], []>} : vector<16x128xf32>, vector<128x128xf32>, vector<16x128xf32> -> vector<16x128xf32>
    %108 = arith.addf %102, %107 : vector<16x128xf32>
    %109 = vector.shape_cast %108 : vector<16x128xf32> to vector<1x16x128xf32>
    %c0_127 = arith.constant 0 : index
    %c0_128 = arith.constant 0 : index
    %c0_129 = arith.constant 0 : index
    %110 = vector.load %arg9[%c0_127, %c0_128, %c0_129] : memref<1x1x128xf32, #tpu.memory_space<vmem>>, vector<1x1x128xf32>
    %111 = vector.broadcast %110 : vector<1x1x128xf32> to vector<1x16x128xf32>
    %112 = arith.addf %109, %111 : vector<1x16x128xf32>
    %cst_130 = arith.constant 0.000000e+00 : f32
    %113 = vector.broadcast %cst_130 : f32 to vector<1x16x128xf32>
    %114 = arith.maximumf %112, %113 : vector<1x16x128xf32>
    %c0_131 = arith.constant 0 : index
    %c8_132 = arith.constant 8 : index
    %c0_133 = arith.constant 0 : index
    %115 = vector.load %arg25[%c0_131, %c8_132, %c0_133] : memref<1x32x128xf32, #tpu.memory_space<vmem>>, vector<1x16x128xf32>
    tpu.vector_store %arg25[%c0_131, %c8_132, %c0_133], %114 {strides = array<i32>} : memref<1x32x128xf32, #tpu.memory_space<vmem>>, vector<1x16x128xf32>,
    %c0_134 = arith.constant 0 : index
    %c6_135 = arith.constant 6 : index
    %c0_136 = arith.constant 0 : index
    %116 = vector.load %arg25[%c0_134, %c6_135, %c0_136] : memref<1x32x128xf32, #tpu.memory_space<vmem>>, vector<1x16x128xf32>
    %117 = vector.shape_cast %116 : vector<1x16x128xf32> to vector<16x128xf32>
    %c0_137 = arith.constant 0 : index
    %c0_138 = arith.constant 0 : index
    %c0_139 = arith.constant 0 : index
    %118 = vector.load %arg10[%c0_137, %c0_138, %c0_139] : memref<5x128x128xf32, #tpu.memory_space<vmem>>, vector<1x128x128xf32>
    %119 = vector.shape_cast %118 : vector<1x128x128xf32> to vector<128x128xf32>
    %cst_140 = arith.constant dense<0.000000e+00> : vector<16x128xf32>
    %120 = tpu.matmul %117, %119, %cst_140 {dimension_numbers = #tpu.dot_dimension_numbers<[1], [0], [0], [1], [0, 0, 1, 1], [], []>} : vector<16x128xf32>, vector<128x128xf32>, vector<16x128xf32> -> vector<16x128xf32>
    %c0_141 = arith.constant 0 : index
    %c7_142 = arith.constant 7 : index
    %c0_143 = arith.constant 0 : index
    %121 = vector.load %arg25[%c0_141, %c7_142, %c0_143] : memref<1x32x128xf32, #tpu.memory_space<vmem>>, vector<1x16x128xf32>
    %122 = vector.shape_cast %121 : vector<1x16x128xf32> to vector<16x128xf32>
    %c1_144 = arith.constant 1 : index
    %c0_145 = arith.constant 0 : index
    %c0_146 = arith.constant 0 : index
    %123 = vector.load %arg10[%c1_144, %c0_145, %c0_146] : memref<5x128x128xf32, #tpu.memory_space<vmem>>, vector<1x128x128xf32>
    %124 = vector.shape_cast %123 : vector<1x128x128xf32> to vector<128x128xf32>
    %cst_147 = arith.constant dense<0.000000e+00> : vector<16x128xf32>
    %125 = tpu.matmul %122, %124, %cst_147 {dimension_numbers = #tpu.dot_dimension_numbers<[1], [0], [0], [1], [0, 0, 1, 1], [], []>} : vector<16x128xf32>, vector<128x128xf32>, vector<16x128xf32> -> vector<16x128xf32>
    %126 = arith.addf %120, %125 : vector<16x128xf32>
    %c0_148 = arith.constant 0 : index
    %c8_149 = arith.constant 8 : index
    %c0_150 = arith.constant 0 : index
    %127 = vector.load %arg25[%c0_148, %c8_149, %c0_150] : memref<1x32x128xf32, #tpu.memory_space<vmem>>, vector<1x16x128xf32>
    %128 = vector.shape_cast %127 : vector<1x16x128xf32> to vector<16x128xf32>
    %c2_151 = arith.constant 2 : index
    %c0_152 = arith.constant 0 : index
    %c0_153 = arith.constant 0 : index
    %129 = vector.load %arg10[%c2_151, %c0_152, %c0_153] : memref<5x128x128xf32, #tpu.memory_space<vmem>>, vector<1x128x128xf32>
    %130 = vector.shape_cast %129 : vector<1x128x128xf32> to vector<128x128xf32>
    %cst_154 = arith.constant dense<0.000000e+00> : vector<16x128xf32>
    %131 = tpu.matmul %128, %130, %cst_154 {dimension_numbers = #tpu.dot_dimension_numbers<[1], [0], [0], [1], [0, 0, 1, 1], [], []>} : vector<16x128xf32>, vector<128x128xf32>, vector<16x128xf32> -> vector<16x128xf32>
    %132 = arith.addf %126, %131 : vector<16x128xf32>
    %c0_155 = arith.constant 0 : index
    %c9_156 = arith.constant 9 : index
    %c0_157 = arith.constant 0 : index
    %133 = vector.load %arg25[%c0_155, %c9_156, %c0_157] : memref<1x32x128xf32, #tpu.memory_space<vmem>>, vector<1x16x128xf32>
    %134 = vector.shape_cast %133 : vector<1x16x128xf32> to vector<16x128xf32>
    %c3_158 = arith.constant 3 : index
    %c0_159 = arith.constant 0 : index
    %c0_160 = arith.constant 0 : index
    %135 = vector.load %arg10[%c3_158, %c0_159, %c0_160] : memref<5x128x128xf32, #tpu.memory_space<vmem>>, vector<1x128x128xf32>
    %136 = vector.shape_cast %135 : vector<1x128x128xf32> to vector<128x128xf32>
    %cst_161 = arith.constant dense<0.000000e+00> : vector<16x128xf32>
    %137 = tpu.matmul %134, %136, %cst_161 {dimension_numbers = #tpu.dot_dimension_numbers<[1], [0], [0], [1], [0, 0, 1, 1], [], []>} : vector<16x128xf32>, vector<128x128xf32>, vector<16x128xf32> -> vector<16x128xf32>
    %138 = arith.addf %132, %137 : vector<16x128xf32>
    %c0_162 = arith.constant 0 : index
    %c10_163 = arith.constant 10 : index
    %c0_164 = arith.constant 0 : index
    %139 = vector.load %arg25[%c0_162, %c10_163, %c0_164] : memref<1x32x128xf32, #tpu.memory_space<vmem>>, vector<1x16x128xf32>
    %140 = vector.shape_cast %139 : vector<1x16x128xf32> to vector<16x128xf32>
    %c4_165 = arith.constant 4 : index
    %c0_166 = arith.constant 0 : index
    %c0_167 = arith.constant 0 : index
    %141 = vector.load %arg10[%c4_165, %c0_166, %c0_167] : memref<5x128x128xf32, #tpu.memory_space<vmem>>, vector<1x128x128xf32>
    %142 = vector.shape_cast %141 : vector<1x128x128xf32> to vector<128x128xf32>
    %cst_168 = arith.constant dense<0.000000e+00> : vector<16x128xf32>
    %143 = tpu.matmul %140, %142, %cst_168 {dimension_numbers = #tpu.dot_dimension_numbers<[1], [0], [0], [1], [0, 0, 1, 1], [], []>} : vector<16x128xf32>, vector<128x128xf32>, vector<16x128xf32> -> vector<16x128xf32>
    %144 = arith.addf %138, %143 : vector<16x128xf32>
    %145 = vector.shape_cast %144 : vector<16x128xf32> to vector<1x16x128xf32>
    %c0_169 = arith.constant 0 : index
    %c0_170 = arith.constant 0 : index
    %c0_171 = arith.constant 0 : index
    %146 = vector.load %arg11[%c0_169, %c0_170, %c0_171] : memref<1x1x128xf32, #tpu.memory_space<vmem>>, vector<1x1x128xf32>
    %147 = vector.broadcast %146 : vector<1x1x128xf32> to vector<1x16x128xf32>
    %148 = arith.addf %145, %147 : vector<1x16x128xf32>
    %cst_172 = arith.constant 0.000000e+00 : f32
    %149 = vector.broadcast %cst_172 : f32 to vector<1x16x128xf32>
    %150 = arith.maximumf %148, %149 : vector<1x16x128xf32>
    %c0_173 = arith.constant 0 : index
    %c8_174 = arith.constant 8 : index
    %c0_175 = arith.constant 0 : index
    %151 = vector.load %arg25[%c0_173, %c8_174, %c0_175] : memref<1x32x128xf32, #tpu.memory_space<vmem>>, vector<1x16x128xf32>
    tpu.vector_store %arg25[%c0_173, %c8_174, %c0_175], %150 {strides = array<i32>} : memref<1x32x128xf32, #tpu.memory_space<vmem>>, vector<1x16x128xf32>,
    %c0_176 = arith.constant 0 : index
    %c6_177 = arith.constant 6 : index
    %c0_178 = arith.constant 0 : index
    %152 = vector.load %arg25[%c0_176, %c6_177, %c0_178] : memref<1x32x128xf32, #tpu.memory_space<vmem>>, vector<1x16x128xf32>
    %153 = vector.shape_cast %152 : vector<1x16x128xf32> to vector<16x128xf32>
    %c0_179 = arith.constant 0 : index
    %c0_180 = arith.constant 0 : index
    %c0_181 = arith.constant 0 : index
    %154 = vector.load %arg12[%c0_179, %c0_180, %c0_181] : memref<3x128x128xf32, #tpu.memory_space<vmem>>, vector<1x128x128xf32>
    %155 = vector.shape_cast %154 : vector<1x128x128xf32> to vector<128x128xf32>
    %cst_182 = arith.constant dense<0.000000e+00> : vector<16x128xf32>
    %156 = tpu.matmul %153, %155, %cst_182 {dimension_numbers = #tpu.dot_dimension_numbers<[1], [0], [0], [1], [0, 0, 1, 1], [], []>} : vector<16x128xf32>, vector<128x128xf32>, vector<16x128xf32> -> vector<16x128xf32>
    %c0_183 = arith.constant 0 : index
    %c8_184 = arith.constant 8 : index
    %c0_185 = arith.constant 0 : index
    %157 = vector.load %arg25[%c0_183, %c8_184, %c0_185] : memref<1x32x128xf32, #tpu.memory_space<vmem>>, vector<1x16x128xf32>
    %158 = vector.shape_cast %157 : vector<1x16x128xf32> to vector<16x128xf32>
    %c1_186 = arith.constant 1 : index
    %c0_187 = arith.constant 0 : index
    %c0_188 = arith.constant 0 : index
    %159 = vector.load %arg12[%c1_186, %c0_187, %c0_188] : memref<3x128x128xf32, #tpu.memory_space<vmem>>, vector<1x128x128xf32>
    %160 = vector.shape_cast %159 : vector<1x128x128xf32> to vector<128x128xf32>
    %cst_189 = arith.constant dense<0.000000e+00> : vector<16x128xf32>
    %161 = tpu.matmul %158, %160, %cst_189 {dimension_numbers = #tpu.dot_dimension_numbers<[1], [0], [0], [1], [0, 0, 1, 1], [], []>} : vector<16x128xf32>, vector<128x128xf32>, vector<16x128xf32> -> vector<16x128xf32>
    %162 = arith.addf %156, %161 : vector<16x128xf32>
    %c0_190 = arith.constant 0 : index
    %c10_191 = arith.constant 10 : index
    %c0_192 = arith.constant 0 : index
    %163 = vector.load %arg25[%c0_190, %c10_191, %c0_192] : memref<1x32x128xf32, #tpu.memory_space<vmem>>, vector<1x16x128xf32>
    %164 = vector.shape_cast %163 : vector<1x16x128xf32> to vector<16x128xf32>
    %c2_193 = arith.constant 2 : index
    %c0_194 = arith.constant 0 : index
    %c0_195 = arith.constant 0 : index
    %165 = vector.load %arg12[%c2_193, %c0_194, %c0_195] : memref<3x128x128xf32, #tpu.memory_space<vmem>>, vector<1x128x128xf32>
    %166 = vector.shape_cast %165 : vector<1x128x128xf32> to vector<128x128xf32>
    %cst_196 = arith.constant dense<0.000000e+00> : vector<16x128xf32>
    %167 = tpu.matmul %164, %166, %cst_196 {dimension_numbers = #tpu.dot_dimension_numbers<[1], [0], [0], [1], [0, 0, 1, 1], [], []>} : vector<16x128xf32>, vector<128x128xf32>, vector<16x128xf32> -> vector<16x128xf32>
    %168 = arith.addf %162, %167 : vector<16x128xf32>
    %169 = vector.shape_cast %168 : vector<16x128xf32> to vector<1x16x128xf32>
    %c0_197 = arith.constant 0 : index
    %c0_198 = arith.constant 0 : index
    %c0_199 = arith.constant 0 : index
    %170 = vector.load %arg13[%c0_197, %c0_198, %c0_199] : memref<1x1x128xf32, #tpu.memory_space<vmem>>, vector<1x1x128xf32>
    %171 = vector.broadcast %170 : vector<1x1x128xf32> to vector<1x16x128xf32>
    %172 = arith.addf %169, %171 : vector<1x16x128xf32>
    %cst_200 = arith.constant 0.000000e+00 : f32
    %173 = vector.broadcast %cst_200 : f32 to vector<1x16x128xf32>
    %174 = arith.maximumf %172, %173 : vector<1x16x128xf32>
    %c0_201 = arith.constant 0 : index
    %c8_202 = arith.constant 8 : index
    %c0_203 = arith.constant 0 : index
    %175 = vector.load %arg25[%c0_201, %c8_202, %c0_203] : memref<1x32x128xf32, #tpu.memory_space<vmem>>, vector<1x16x128xf32>
    tpu.vector_store %arg25[%c0_201, %c8_202, %c0_203], %174 {strides = array<i32>} : memref<1x32x128xf32, #tpu.memory_space<vmem>>, vector<1x16x128xf32>,
    %c0_204 = arith.constant 0 : index
    %c4_205 = arith.constant 4 : index
    %c0_206 = arith.constant 0 : index
    %176 = vector.load %arg25[%c0_204, %c4_205, %c0_206] : memref<1x32x128xf32, #tpu.memory_space<vmem>>, vector<1x16x128xf32>
    %177 = vector.shape_cast %176 : vector<1x16x128xf32> to vector<16x128xf32>
    %c0_207 = arith.constant 0 : index
    %c0_208 = arith.constant 0 : index
    %c0_209 = arith.constant 0 : index
    %178 = vector.load %arg14[%c0_207, %c0_208, %c0_209] : memref<5x128x128xf32, #tpu.memory_space<vmem>>, vector<1x128x128xf32>
    %179 = vector.shape_cast %178 : vector<1x128x128xf32> to vector<128x128xf32>
    %cst_210 = arith.constant dense<0.000000e+00> : vector<16x128xf32>
    %180 = tpu.matmul %177, %179, %cst_210 {dimension_numbers = #tpu.dot_dimension_numbers<[1], [0], [0], [1], [0, 0, 1, 1], [], []>} : vector<16x128xf32>, vector<128x128xf32>, vector<16x128xf32> -> vector<16x128xf32>
    %c0_211 = arith.constant 0 : index
    %c6_212 = arith.constant 6 : index
    %c0_213 = arith.constant 0 : index
    %181 = vector.load %arg25[%c0_211, %c6_212, %c0_213] : memref<1x32x128xf32, #tpu.memory_space<vmem>>, vector<1x16x128xf32>
    %182 = vector.shape_cast %181 : vector<1x16x128xf32> to vector<16x128xf32>
    %c1_214 = arith.constant 1 : index
    %c0_215 = arith.constant 0 : index
    %c0_216 = arith.constant 0 : index
    %183 = vector.load %arg14[%c1_214, %c0_215, %c0_216] : memref<5x128x128xf32, #tpu.memory_space<vmem>>, vector<1x128x128xf32>
    %184 = vector.shape_cast %183 : vector<1x128x128xf32> to vector<128x128xf32>
    %cst_217 = arith.constant dense<0.000000e+00> : vector<16x128xf32>
    %185 = tpu.matmul %182, %184, %cst_217 {dimension_numbers = #tpu.dot_dimension_numbers<[1], [0], [0], [1], [0, 0, 1, 1], [], []>} : vector<16x128xf32>, vector<128x128xf32>, vector<16x128xf32> -> vector<16x128xf32>
    %186 = arith.addf %180, %185 : vector<16x128xf32>
    %c0_218 = arith.constant 0 : index
    %c8_219 = arith.constant 8 : index
    %c0_220 = arith.constant 0 : index
    %187 = vector.load %arg25[%c0_218, %c8_219, %c0_220] : memref<1x32x128xf32, #tpu.memory_space<vmem>>, vector<1x16x128xf32>
    %188 = vector.shape_cast %187 : vector<1x16x128xf32> to vector<16x128xf32>
    %c2_221 = arith.constant 2 : index
    %c0_222 = arith.constant 0 : index
    %c0_223 = arith.constant 0 : index
    %189 = vector.load %arg14[%c2_221, %c0_222, %c0_223] : memref<5x128x128xf32, #tpu.memory_space<vmem>>, vector<1x128x128xf32>
    %190 = vector.shape_cast %189 : vector<1x128x128xf32> to vector<128x128xf32>
    %cst_224 = arith.constant dense<0.000000e+00> : vector<16x128xf32>
    %191 = tpu.matmul %188, %190, %cst_224 {dimension_numbers = #tpu.dot_dimension_numbers<[1], [0], [0], [1], [0, 0, 1, 1], [], []>} : vector<16x128xf32>, vector<128x128xf32>, vector<16x128xf32> -> vector<16x128xf32>
    %192 = arith.addf %186, %191 : vector<16x128xf32>
    %c0_225 = arith.constant 0 : index
    %c10_226 = arith.constant 10 : index
    %c0_227 = arith.constant 0 : index
    %193 = vector.load %arg25[%c0_225, %c10_226, %c0_227] : memref<1x32x128xf32, #tpu.memory_space<vmem>>, vector<1x16x128xf32>
    %194 = vector.shape_cast %193 : vector<1x16x128xf32> to vector<16x128xf32>
    %c3_228 = arith.constant 3 : index
    %c0_229 = arith.constant 0 : index
    %c0_230 = arith.constant 0 : index
    %195 = vector.load %arg14[%c3_228, %c0_229, %c0_230] : memref<5x128x128xf32, #tpu.memory_space<vmem>>, vector<1x128x128xf32>
    %196 = vector.shape_cast %195 : vector<1x128x128xf32> to vector<128x128xf32>
    %cst_231 = arith.constant dense<0.000000e+00> : vector<16x128xf32>
    %197 = tpu.matmul %194, %196, %cst_231 {dimension_numbers = #tpu.dot_dimension_numbers<[1], [0], [0], [1], [0, 0, 1, 1], [], []>} : vector<16x128xf32>, vector<128x128xf32>, vector<16x128xf32> -> vector<16x128xf32>
    %198 = arith.addf %192, %197 : vector<16x128xf32>
    %c0_232 = arith.constant 0 : index
    %c12 = arith.constant 12 : index
    %c0_233 = arith.constant 0 : index
    %199 = vector.load %arg25[%c0_232, %c12, %c0_233] : memref<1x32x128xf32, #tpu.memory_space<vmem>>, vector<1x16x128xf32>
    %200 = vector.shape_cast %199 : vector<1x16x128xf32> to vector<16x128xf32>
    %c4_234 = arith.constant 4 : index
    %c0_235 = arith.constant 0 : index
    %c0_236 = arith.constant 0 : index
    %201 = vector.load %arg14[%c4_234, %c0_235, %c0_236] : memref<5x128x128xf32, #tpu.memory_space<vmem>>, vector<1x128x128xf32>
    %202 = vector.shape_cast %201 : vector<1x128x128xf32> to vector<128x128xf32>
    %cst_237 = arith.constant dense<0.000000e+00> : vector<16x128xf32>
    %203 = tpu.matmul %200, %202, %cst_237 {dimension_numbers = #tpu.dot_dimension_numbers<[1], [0], [0], [1], [0, 0, 1, 1], [], []>} : vector<16x128xf32>, vector<128x128xf32>, vector<16x128xf32> -> vector<16x128xf32>
    %204 = arith.addf %198, %203 : vector<16x128xf32>
    %205 = vector.shape_cast %204 : vector<16x128xf32> to vector<1x16x128xf32>
    %c0_238 = arith.constant 0 : index
    %c0_239 = arith.constant 0 : index
    %c0_240 = arith.constant 0 : index
    %206 = vector.load %arg15[%c0_238, %c0_239, %c0_240] : memref<1x1x128xf32, #tpu.memory_space<vmem>>, vector<1x1x128xf32>
    %207 = vector.broadcast %206 : vector<1x1x128xf32> to vector<1x16x128xf32>
    %208 = arith.addf %205, %207 : vector<1x16x128xf32>
    %c0_241 = arith.constant 0 : index
    %c8_242 = arith.constant 8 : index
    %c0_243 = arith.constant 0 : index
    %209 = vector.load %arg25[%c0_241, %c8_242, %c0_243] : memref<1x32x128xf32, #tpu.memory_space<vmem>>, vector<1x16x128xf32>
    tpu.vector_store %arg25[%c0_241, %c8_242, %c0_243], %208 {strides = array<i32>} : memref<1x32x128xf32, #tpu.memory_space<vmem>>, vector<1x16x128xf32>,
    %c0_244 = arith.constant 0 : index
    %c7_245 = arith.constant 7 : index
    %c0_246 = arith.constant 0 : index
    %210 = vector.load %arg25[%c0_244, %c7_245, %c0_246] : memref<1x32x128xf32, #tpu.memory_space<vmem>>, vector<1x16x128xf32>
    %211 = vector.extract_strided_slice %210 {offsets = [0, 0, 120], sizes = [1, 16, 8], strides = [1, 1, 1]} : vector<1x16x128xf32> to vector<1x16x8xf32>
    %212 = vector.extract_strided_slice %210 {offsets = [0, 0, 0], sizes = [1, 16, 120], strides = [1, 1, 1]} : vector<1x16x128xf32> to vector<1x16x120xf32>
    %213 = tpu.concatenate %211, %212 in 2 : vector<1x16x8xf32>, vector<1x16x120xf32> -> vector<1x16x128xf32>
    %c0_247 = arith.constant 0 : index
    %c0_248 = arith.constant 0 : index
    %c0_249 = arith.constant 0 : index
    %214 = vector.load %arg16[%c0_247, %c0_248, %c0_249] : memref<9x16x128xf32, #tpu.memory_space<vmem>>, vector<1x16x128xf32>
    %215 = vector.shape_cast %214 : vector<1x16x128xf32> to vector<16x128xf32>
    %216 = vector.shape_cast %215 : vector<16x128xf32> to vector<1x16x128xf32>
    %217 = arith.addf %213, %216 : vector<1x16x128xf32>
    %c1_250 = arith.constant 1 : index
    %c0_251 = arith.constant 0 : index
    %c0_252 = arith.constant 0 : index
    %218 = vector.load %arg16[%c1_250, %c0_251, %c0_252] : memref<9x16x128xf32, #tpu.memory_space<vmem>>, vector<1x16x128xf32>
    %219 = vector.shape_cast %218 : vector<1x16x128xf32> to vector<16x128xf32>
    %220 = vector.shape_cast %219 : vector<16x128xf32> to vector<1x16x128xf32>
    %221 = arith.addf %210, %220 : vector<1x16x128xf32>
    %222 = arith.maximumf %217, %221 : vector<1x16x128xf32>
    %223 = vector.extract_strided_slice %210 {offsets = [0, 0, 8], sizes = [1, 16, 120], strides = [1, 1, 1]} : vector<1x16x128xf32> to vector<1x16x120xf32>
    %224 = vector.extract_strided_slice %210 {offsets = [0, 0, 0], sizes = [1, 16, 8], strides = [1, 1, 1]} : vector<1x16x128xf32> to vector<1x16x8xf32>
    %225 = tpu.concatenate %223, %224 in 2 : vector<1x16x120xf32>, vector<1x16x8xf32> -> vector<1x16x128xf32>
    %c2_253 = arith.constant 2 : index
    %c0_254 = arith.constant 0 : index
    %c0_255 = arith.constant 0 : index
    %226 = vector.load %arg16[%c2_253, %c0_254, %c0_255] : memref<9x16x128xf32, #tpu.memory_space<vmem>>, vector<1x16x128xf32>
    %227 = vector.shape_cast %226 : vector<1x16x128xf32> to vector<16x128xf32>
    %228 = vector.shape_cast %227 : vector<16x128xf32> to vector<1x16x128xf32>
    %229 = arith.addf %225, %228 : vector<1x16x128xf32>
    %230 = arith.maximumf %222, %229 : vector<1x16x128xf32>
    %c0_256 = arith.constant 0 : index
    %c8_257 = arith.constant 8 : index
    %c0_258 = arith.constant 0 : index
    %231 = vector.load %arg25[%c0_256, %c8_257, %c0_258] : memref<1x32x128xf32, #tpu.memory_space<vmem>>, vector<1x16x128xf32>
    %232 = vector.extract_strided_slice %231 {offsets = [0, 0, 120], sizes = [1, 16, 8], strides = [1, 1, 1]} : vector<1x16x128xf32> to vector<1x16x8xf32>
    %233 = vector.extract_strided_slice %231 {offsets = [0, 0, 0], sizes = [1, 16, 120], strides = [1, 1, 1]} : vector<1x16x128xf32> to vector<1x16x120xf32>
    %234 = tpu.concatenate %232, %233 in 2 : vector<1x16x8xf32>, vector<1x16x120xf32> -> vector<1x16x128xf32>
    %c3_259 = arith.constant 3 : index
    %c0_260 = arith.constant 0 : index
    %c0_261 = arith.constant 0 : index
    %235 = vector.load %arg16[%c3_259, %c0_260, %c0_261] : memref<9x16x128xf32, #tpu.memory_space<vmem>>, vector<1x16x128xf32>
    %236 = vector.shape_cast %235 : vector<1x16x128xf32> to vector<16x128xf32>
    %237 = vector.shape_cast %236 : vector<16x128xf32> to vector<1x16x128xf32>
    %238 = arith.addf %234, %237 : vector<1x16x128xf32>
    %239 = arith.maximumf %230, %238 : vector<1x16x128xf32>
    %c4_262 = arith.constant 4 : index
    %c0_263 = arith.constant 0 : index
    %c0_264 = arith.constant 0 : index
    %240 = vector.load %arg16[%c4_262, %c0_263, %c0_264] : memref<9x16x128xf32, #tpu.memory_space<vmem>>, vector<1x16x128xf32>
    %241 = vector.shape_cast %240 : vector<1x16x128xf32> to vector<16x128xf32>
    %242 = vector.shape_cast %241 : vector<16x128xf32> to vector<1x16x128xf32>
    %243 = arith.addf %231, %242 : vector<1x16x128xf32>
    %244 = arith.maximumf %239, %243 : vector<1x16x128xf32>
    %245 = vector.extract_strided_slice %231 {offsets = [0, 0, 8], sizes = [1, 16, 120], strides = [1, 1, 1]} : vector<1x16x128xf32> to vector<1x16x120xf32>
    %246 = vector.extract_strided_slice %231 {offsets = [0, 0, 0], sizes = [1, 16, 8], strides = [1, 1, 1]} : vector<1x16x128xf32> to vector<1x16x8xf32>
    %247 = tpu.concatenate %245, %246 in 2 : vector<1x16x120xf32>, vector<1x16x8xf32> -> vector<1x16x128xf32>
    %c5 = arith.constant 5 : index
    %c0_265 = arith.constant 0 : index
    %c0_266 = arith.constant 0 : index
    %248 = vector.load %arg16[%c5, %c0_265, %c0_266] : memref<9x16x128xf32, #tpu.memory_space<vmem>>, vector<1x16x128xf32>
    %249 = vector.shape_cast %248 : vector<1x16x128xf32> to vector<16x128xf32>
    %250 = vector.shape_cast %249 : vector<16x128xf32> to vector<1x16x128xf32>
    %251 = arith.addf %247, %250 : vector<1x16x128xf32>
    %252 = arith.maximumf %244, %251 : vector<1x16x128xf32>
    %c0_267 = arith.constant 0 : index
    %c9_268 = arith.constant 9 : index
    %c0_269 = arith.constant 0 : index
    %253 = vector.load %arg25[%c0_267, %c9_268, %c0_269] : memref<1x32x128xf32, #tpu.memory_space<vmem>>, vector<1x16x128xf32>
    %254 = vector.extract_strided_slice %253 {offsets = [0, 0, 120], sizes = [1, 16, 8], strides = [1, 1, 1]} : vector<1x16x128xf32> to vector<1x16x8xf32>
    %255 = vector.extract_strided_slice %253 {offsets = [0, 0, 0], sizes = [1, 16, 120], strides = [1, 1, 1]} : vector<1x16x128xf32> to vector<1x16x120xf32>
    %256 = tpu.concatenate %254, %255 in 2 : vector<1x16x8xf32>, vector<1x16x120xf32> -> vector<1x16x128xf32>
    %c6_270 = arith.constant 6 : index
    %c0_271 = arith.constant 0 : index
    %c0_272 = arith.constant 0 : index
    %257 = vector.load %arg16[%c6_270, %c0_271, %c0_272] : memref<9x16x128xf32, #tpu.memory_space<vmem>>, vector<1x16x128xf32>
    %258 = vector.shape_cast %257 : vector<1x16x128xf32> to vector<16x128xf32>
    %259 = vector.shape_cast %258 : vector<16x128xf32> to vector<1x16x128xf32>
    %260 = arith.addf %256, %259 : vector<1x16x128xf32>
    %261 = arith.maximumf %252, %260 : vector<1x16x128xf32>
    %c7_273 = arith.constant 7 : index
    %c0_274 = arith.constant 0 : index
    %c0_275 = arith.constant 0 : index
    %262 = vector.load %arg16[%c7_273, %c0_274, %c0_275] : memref<9x16x128xf32, #tpu.memory_space<vmem>>, vector<1x16x128xf32>
    %263 = vector.shape_cast %262 : vector<1x16x128xf32> to vector<16x128xf32>
    %264 = vector.shape_cast %263 : vector<16x128xf32> to vector<1x16x128xf32>
    %265 = arith.addf %253, %264 : vector<1x16x128xf32>
    %266 = arith.maximumf %261, %265 : vector<1x16x128xf32>
    %267 = vector.extract_strided_slice %253 {offsets = [0, 0, 8], sizes = [1, 16, 120], strides = [1, 1, 1]} : vector<1x16x128xf32> to vector<1x16x120xf32>
    %268 = vector.extract_strided_slice %253 {offsets = [0, 0, 0], sizes = [1, 16, 8], strides = [1, 1, 1]} : vector<1x16x128xf32> to vector<1x16x8xf32>
    %269 = tpu.concatenate %267, %268 in 2 : vector<1x16x120xf32>, vector<1x16x8xf32> -> vector<1x16x128xf32>
    %c8_276 = arith.constant 8 : index
    %c0_277 = arith.constant 0 : index
    %c0_278 = arith.constant 0 : index
    %270 = vector.load %arg16[%c8_276, %c0_277, %c0_278] : memref<9x16x128xf32, #tpu.memory_space<vmem>>, vector<1x16x128xf32>
    %271 = vector.shape_cast %270 : vector<1x16x128xf32> to vector<16x128xf32>
    %272 = vector.shape_cast %271 : vector<16x128xf32> to vector<1x16x128xf32>
    %273 = arith.addf %269, %272 : vector<1x16x128xf32>
    %274 = arith.maximumf %266, %273 : vector<1x16x128xf32>
    %c0_279 = arith.constant 0 : index
    %c0_280 = arith.constant 0 : index
    %c0_281 = arith.constant 0 : index
    %275 = vector.load %arg17[%c0_279, %c0_280, %c0_281] : memref<1x1x128xf32, #tpu.memory_space<vmem>>, vector<1x1x128xf32>
    %276 = vector.broadcast %275 : vector<1x1x128xf32> to vector<1x16x128xf32>
    %277 = arith.mulf %274, %276 : vector<1x16x128xf32>
    %c0_282 = arith.constant 0 : index
    %c0_283 = arith.constant 0 : index
    %c0_284 = arith.constant 0 : index
    %278 = vector.load %arg18[%c0_282, %c0_283, %c0_284] : memref<1x1x128xf32, #tpu.memory_space<vmem>>, vector<1x1x128xf32>
    %279 = vector.broadcast %278 : vector<1x1x128xf32> to vector<1x16x128xf32>
    %280 = arith.addf %277, %279 : vector<1x16x128xf32>
    %c0_285 = arith.constant 0 : index
    %c8_286 = arith.constant 8 : index
    %c0_287 = arith.constant 0 : index
    %281 = vector.load %arg25[%c0_285, %c8_286, %c0_287] : memref<1x32x128xf32, #tpu.memory_space<vmem>>, vector<1x16x128xf32>
    tpu.vector_store %arg25[%c0_285, %c8_286, %c0_287], %280 {strides = array<i32>} : memref<1x32x128xf32, #tpu.memory_space<vmem>>, vector<1x16x128xf32>,
    %c0_288 = arith.constant 0 : index
    %c7_289 = arith.constant 7 : index
    %c0_290 = arith.constant 0 : index
    %282 = vector.load %arg25[%c0_288, %c7_289, %c0_290] : memref<1x32x128xf32, #tpu.memory_space<vmem>>, vector<1x16x128xf32>
    %c0_291 = arith.constant 0 : index
    %c8_292 = arith.constant 8 : index
    %c0_293 = arith.constant 0 : index
    %283 = vector.load %arg25[%c0_291, %c8_292, %c0_293] : memref<1x32x128xf32, #tpu.memory_space<vmem>>, vector<1x16x128xf32>
    %284 = arith.addf %282, %283 : vector<1x16x128xf32>
    %c0_294 = arith.constant 0 : index
    %c9_295 = arith.constant 9 : index
    %c0_296 = arith.constant 0 : index
    %285 = vector.load %arg25[%c0_294, %c9_295, %c0_296] : memref<1x32x128xf32, #tpu.memory_space<vmem>>, vector<1x16x128xf32>
    %286 = arith.addf %284, %285 : vector<1x16x128xf32>
    %287 = vector.shape_cast %286 : vector<1x16x128xf32> to vector<16x128xf32>
    %c0_297 = arith.constant 0 : index
    %c0_298 = arith.constant 0 : index
    %288 = vector.load %arg19[%c0_297, %c0_298] : memref<128x128xf32, #tpu.memory_space<vmem>>, vector<128x128xf32>
    %cst_299 = arith.constant dense<0.000000e+00> : vector<16x128xf32>
    %289 = tpu.matmul %287, %288, %cst_299 {dimension_numbers = #tpu.dot_dimension_numbers<[1], [0], [0], [1], [0, 0, 1, 1], [], []>} : vector<16x128xf32>, vector<128x128xf32>, vector<16x128xf32> -> vector<16x128xf32>
    %290 = vector.shape_cast %289 : vector<16x128xf32> to vector<1x16x128xf32>
    %c0_300 = arith.constant 0 : index
    %c0_301 = arith.constant 0 : index
    %c0_302 = arith.constant 0 : index
    %291 = vector.load %arg20[%c0_300, %c0_301, %c0_302] : memref<1x16x128xf32, #tpu.memory_space<vmem>>, vector<1x16x128xf32>
    %292 = arith.mulf %290, %291 : vector<1x16x128xf32>
    %c0_303 = arith.constant 0 : index
    %c0_304 = arith.constant 0 : index
    %c0_305 = arith.constant 0 : index
    %293 = vector.load %arg21[%c0_303, %c0_304, %c0_305] : memref<1x1x128xf32, #tpu.memory_space<vmem>>, vector<1x1x128xf32>
    %294 = vector.broadcast %293 : vector<1x1x128xf32> to vector<1x16x128xf32>
    %295 = arith.addf %292, %294 : vector<1x16x128xf32>
    %c0_306 = arith.constant 0 : index
    %c8_307 = arith.constant 8 : index
    %c0_308 = arith.constant 0 : index
    %296 = vector.load %arg25[%c0_306, %c8_307, %c0_308] : memref<1x32x128xf32, #tpu.memory_space<vmem>>, vector<1x16x128xf32>
    tpu.vector_store %arg25[%c0_306, %c8_307, %c0_308], %295 {strides = array<i32>} : memref<1x32x128xf32, #tpu.memory_space<vmem>>, vector<1x16x128xf32>,
    %c0_309 = arith.constant 0 : index
    %c8_310 = arith.constant 8 : index
    %c0_311 = arith.constant 0 : index
    %297 = vector.load %arg25[%c0_309, %c8_310, %c0_311] : memref<1x32x128xf32, #tpu.memory_space<vmem>>, vector<1x16x128xf32>
    %298 = vector.extract_strided_slice %297 {offsets = [0, 0, 0], sizes = [1, 1, 128], strides = [1, 1, 1]} : vector<1x16x128xf32> to vector<1x1x128xf32>
    %299 = vector.shape_cast %298 : vector<1x1x128xf32> to vector<1x128xf32>
    %300 = vector.extract_strided_slice %297 {offsets = [0, 1, 0], sizes = [1, 1, 128], strides = [1, 1, 1]} : vector<1x16x128xf32> to vector<1x1x128xf32>
    %301 = vector.shape_cast %300 : vector<1x1x128xf32> to vector<1x128xf32>
    %302 = arith.addf %299, %301 : vector<1x128xf32>
    %303 = vector.extract_strided_slice %297 {offsets = [0, 2, 0], sizes = [1, 1, 128], strides = [1, 1, 1]} : vector<1x16x128xf32> to vector<1x1x128xf32>
    %304 = vector.shape_cast %303 : vector<1x1x128xf32> to vector<1x128xf32>
    %305 = arith.addf %302, %304 : vector<1x128xf32>
    %306 = vector.extract_strided_slice %297 {offsets = [0, 3, 0], sizes = [1, 1, 128], strides = [1, 1, 1]} : vector<1x16x128xf32> to vector<1x1x128xf32>
    %307 = vector.shape_cast %306 : vector<1x1x128xf32> to vector<1x128xf32>
    %308 = arith.addf %305, %307 : vector<1x128xf32>
    %c0_312 = arith.constant 0 : index
    %c0_313 = arith.constant 0 : index
    %c0_314 = arith.constant 0 : index
    %309 = vector.load %arg22[%c0_312, %c0_313, %c0_314] : memref<4x128x10xf32, #tpu.memory_space<vmem>>, vector<1x128x10xf32>
    %310 = vector.shape_cast %309 : vector<1x128x10xf32> to vector<128x10xf32>
    %cst_315 = arith.constant dense<0.000000e+00> : vector<1x10xf32>
    %311 = tpu.matmul %308, %310, %cst_315 {dimension_numbers = #tpu.dot_dimension_numbers<[1], [0], [0], [1], [0, 0, 1, 1], [], []>} : vector<1x128xf32>, vector<128x10xf32>, vector<1x10xf32> -> vector<1x10xf32>
    %312 = vector.extract_strided_slice %297 {offsets = [0, 4, 0], sizes = [1, 1, 128], strides = [1, 1, 1]} : vector<1x16x128xf32> to vector<1x1x128xf32>
    %313 = vector.shape_cast %312 : vector<1x1x128xf32> to vector<1x128xf32>
    %314 = vector.extract_strided_slice %297 {offsets = [0, 5, 0], sizes = [1, 1, 128], strides = [1, 1, 1]} : vector<1x16x128xf32> to vector<1x1x128xf32>
    %315 = vector.shape_cast %314 : vector<1x1x128xf32> to vector<1x128xf32>
    %316 = arith.addf %313, %315 : vector<1x128xf32>
    %317 = vector.extract_strided_slice %297 {offsets = [0, 6, 0], sizes = [1, 1, 128], strides = [1, 1, 1]} : vector<1x16x128xf32> to vector<1x1x128xf32>
    %318 = vector.shape_cast %317 : vector<1x1x128xf32> to vector<1x128xf32>
    %319 = arith.addf %316, %318 : vector<1x128xf32>
    %320 = vector.extract_strided_slice %297 {offsets = [0, 7, 0], sizes = [1, 1, 128], strides = [1, 1, 1]} : vector<1x16x128xf32> to vector<1x1x128xf32>
    %321 = vector.shape_cast %320 : vector<1x1x128xf32> to vector<1x128xf32>
    %322 = arith.addf %319, %321 : vector<1x128xf32>
    %c1_316 = arith.constant 1 : index
    %c0_317 = arith.constant 0 : index
    %c0_318 = arith.constant 0 : index
    %323 = vector.load %arg22[%c1_316, %c0_317, %c0_318] : memref<4x128x10xf32, #tpu.memory_space<vmem>>, vector<1x128x10xf32>
    %324 = vector.shape_cast %323 : vector<1x128x10xf32> to vector<128x10xf32>
    %cst_319 = arith.constant dense<0.000000e+00> : vector<1x10xf32>
    %325 = tpu.matmul %322, %324, %cst_319 {dimension_numbers = #tpu.dot_dimension_numbers<[1], [0], [0], [1], [0, 0, 1, 1], [], []>} : vector<1x128xf32>, vector<128x10xf32>, vector<1x10xf32> -> vector<1x10xf32>
    %326 = arith.addf %311, %325 : vector<1x10xf32>
    %327 = vector.extract_strided_slice %297 {offsets = [0, 8, 0], sizes = [1, 1, 128], strides = [1, 1, 1]} : vector<1x16x128xf32> to vector<1x1x128xf32>
    %328 = vector.shape_cast %327 : vector<1x1x128xf32> to vector<1x128xf32>
    %329 = vector.extract_strided_slice %297 {offsets = [0, 9, 0], sizes = [1, 1, 128], strides = [1, 1, 1]} : vector<1x16x128xf32> to vector<1x1x128xf32>
    %330 = vector.shape_cast %329 : vector<1x1x128xf32> to vector<1x128xf32>
    %331 = arith.addf %328, %330 : vector<1x128xf32>
    %332 = vector.extract_strided_slice %297 {offsets = [0, 10, 0], sizes = [1, 1, 128], strides = [1, 1, 1]} : vector<1x16x128xf32> to vector<1x1x128xf32>
    %333 = vector.shape_cast %332 : vector<1x1x128xf32> to vector<1x128xf32>
    %334 = arith.addf %331, %333 : vector<1x128xf32>
    %335 = vector.extract_strided_slice %297 {offsets = [0, 11, 0], sizes = [1, 1, 128], strides = [1, 1, 1]} : vector<1x16x128xf32> to vector<1x1x128xf32>
    %336 = vector.shape_cast %335 : vector<1x1x128xf32> to vector<1x128xf32>
    %337 = arith.addf %334, %336 : vector<1x128xf32>
    %c2_320 = arith.constant 2 : index
    %c0_321 = arith.constant 0 : index
    %c0_322 = arith.constant 0 : index
    %338 = vector.load %arg22[%c2_320, %c0_321, %c0_322] : memref<4x128x10xf32, #tpu.memory_space<vmem>>, vector<1x128x10xf32>
    %339 = vector.shape_cast %338 : vector<1x128x10xf32> to vector<128x10xf32>
    %cst_323 = arith.constant dense<0.000000e+00> : vector<1x10xf32>
    %340 = tpu.matmul %337, %339, %cst_323 {dimension_numbers = #tpu.dot_dimension_numbers<[1], [0], [0], [1], [0, 0, 1, 1], [], []>} : vector<1x128xf32>, vector<128x10xf32>, vector<1x10xf32> -> vector<1x10xf32>
    %341 = arith.addf %326, %340 : vector<1x10xf32>
    %342 = vector.extract_strided_slice %297 {offsets = [0, 12, 0], sizes = [1, 1, 128], strides = [1, 1, 1]} : vector<1x16x128xf32> to vector<1x1x128xf32>
    %343 = vector.shape_cast %342 : vector<1x1x128xf32> to vector<1x128xf32>
    %344 = vector.extract_strided_slice %297 {offsets = [0, 13, 0], sizes = [1, 1, 128], strides = [1, 1, 1]} : vector<1x16x128xf32> to vector<1x1x128xf32>
    %345 = vector.shape_cast %344 : vector<1x1x128xf32> to vector<1x128xf32>
    %346 = arith.addf %343, %345 : vector<1x128xf32>
    %347 = vector.extract_strided_slice %297 {offsets = [0, 14, 0], sizes = [1, 1, 128], strides = [1, 1, 1]} : vector<1x16x128xf32> to vector<1x1x128xf32>
    %348 = vector.shape_cast %347 : vector<1x1x128xf32> to vector<1x128xf32>
    %349 = arith.addf %346, %348 : vector<1x128xf32>
    %350 = vector.extract_strided_slice %297 {offsets = [0, 15, 0], sizes = [1, 1, 128], strides = [1, 1, 1]} : vector<1x16x128xf32> to vector<1x1x128xf32>
    %351 = vector.shape_cast %350 : vector<1x1x128xf32> to vector<1x128xf32>
    %352 = arith.addf %349, %351 : vector<1x128xf32>
    %c3_324 = arith.constant 3 : index
    %c0_325 = arith.constant 0 : index
    %c0_326 = arith.constant 0 : index
    %353 = vector.load %arg22[%c3_324, %c0_325, %c0_326] : memref<4x128x10xf32, #tpu.memory_space<vmem>>, vector<1x128x10xf32>
    %354 = vector.shape_cast %353 : vector<1x128x10xf32> to vector<128x10xf32>
    %cst_327 = arith.constant dense<0.000000e+00> : vector<1x10xf32>
    %355 = tpu.matmul %352, %354, %cst_327 {dimension_numbers = #tpu.dot_dimension_numbers<[1], [0], [0], [1], [0, 0, 1, 1], [], []>} : vector<1x128xf32>, vector<128x10xf32>, vector<1x10xf32> -> vector<1x10xf32>
    %356 = arith.addf %341, %355 : vector<1x10xf32>
    %c0_328 = arith.constant 0 : index
    %c0_329 = arith.constant 0 : index
    %357 = vector.load %arg23[%c0_328, %c0_329] : memref<1x10xf32, #tpu.memory_space<vmem>>, vector<1x10xf32>
    %358 = arith.addf %356, %357 : vector<1x10xf32>
    %359 = vector.shape_cast %358 : vector<1x10xf32> to vector<1x1x10xf32>
    %c0_330 = arith.constant 0 : index
    %c0_331 = arith.constant 0 : index
    %c0_332 = arith.constant 0 : index
    %360 = vector.load %arg24[%c0_330, %c0_331, %c0_332] : memref<1x1x10xf32, #tpu.memory_space<vmem>>, vector<1x1x10xf32>
    tpu.vector_store %arg24[%c0_330, %c0_331, %c0_332], %359 {strides = array<i32>} : memref<1x1x10xf32, #tpu.memory_space<vmem>>, vector<1x1x10xf32>,
    return
  }
  func.func @transform_0(%arg0: i32) -> (i32, i32, i32) {
    %c0_i32 = arith.constant 0 : i32
    %c0_i32_0 = arith.constant 0 : i32
    %c0_i32_1 = arith.constant 0 : i32
    return %arg0, %c0_i32, %c0_i32_0 : i32, i32, i32
  }
  func.func @transform_1(%arg0: i32) -> (i32, i32, i32) {
    %c0_i32 = arith.constant 0 : i32
    %c0_i32_0 = arith.constant 0 : i32
    %c0_i32_1 = arith.constant 0 : i32
    %c0_i32_2 = arith.constant 0 : i32
    return %c0_i32, %c0_i32_0, %c0_i32_1 : i32, i32, i32
  }
  func.func @transform_2(%arg0: i32) -> (i32, i32, i32) {
    %c0_i32 = arith.constant 0 : i32
    %c0_i32_0 = arith.constant 0 : i32
    %c0_i32_1 = arith.constant 0 : i32
    %c0_i32_2 = arith.constant 0 : i32
    return %c0_i32, %c0_i32_0, %c0_i32_1 : i32, i32, i32
  }
  func.func @transform_3(%arg0: i32) -> (i32, i32, i32) {
    %c0_i32 = arith.constant 0 : i32
    %c0_i32_0 = arith.constant 0 : i32
    %c0_i32_1 = arith.constant 0 : i32
    %c0_i32_2 = arith.constant 0 : i32
    return %c0_i32, %c0_i32_0, %c0_i32_1 : i32, i32, i32
  }
  func.func @transform_4(%arg0: i32) -> (i32, i32, i32) {
    %c0_i32 = arith.constant 0 : i32
    %c0_i32_0 = arith.constant 0 : i32
    %c0_i32_1 = arith.constant 0 : i32
    %c0_i32_2 = arith.constant 0 : i32
    return %c0_i32, %c0_i32_0, %c0_i32_1 : i32, i32, i32
  }
  func.func @transform_5(%arg0: i32) -> (i32, i32, i32) {
    %c0_i32 = arith.constant 0 : i32
    %c0_i32_0 = arith.constant 0 : i32
    %c0_i32_1 = arith.constant 0 : i32
    %c0_i32_2 = arith.constant 0 : i32
    return %c0_i32, %c0_i32_0, %c0_i32_1 : i32, i32, i32
  }
  func.func @transform_6(%arg0: i32) -> (i32, i32, i32) {
    %c0_i32 = arith.constant 0 : i32
    %c0_i32_0 = arith.constant 0 : i32
    %c0_i32_1 = arith.constant 0 : i32
    %c0_i32_2 = arith.constant 0 : i32
    return %c0_i32, %c0_i32_0, %c0_i32_1 : i32, i32, i32
  }
  func.func @transform_7(%arg0: i32) -> (i32, i32, i32) {
    %c0_i32 = arith.constant 0 : i32
    %c0_i32_0 = arith.constant 0 : i32
    %c0_i32_1 = arith.constant 0 : i32
    %c0_i32_2 = arith.constant 0 : i32
    return %c0_i32, %c0_i32_0, %c0_i32_1 : i32, i32, i32
  }
  func.func @transform_8(%arg0: i32) -> (i32, i32, i32) {
    %c0_i32 = arith.constant 0 : i32
    %c0_i32_0 = arith.constant 0 : i32
    %c0_i32_1 = arith.constant 0 : i32
    %c0_i32_2 = arith.constant 0 : i32
    return %c0_i32, %c0_i32_0, %c0_i32_1 : i32, i32, i32
  }
  func.func @transform_9(%arg0: i32) -> (i32, i32, i32) {
    %c0_i32 = arith.constant 0 : i32
    %c0_i32_0 = arith.constant 0 : i32
    %c0_i32_1 = arith.constant 0 : i32
    %c0_i32_2 = arith.constant 0 : i32
    return %c0_i32, %c0_i32_0, %c0_i32_1 : i32, i32, i32
  }
  func.func @transform_10(%arg0: i32) -> (i32, i32, i32) {
    %c0_i32 = arith.constant 0 : i32
    %c0_i32_0 = arith.constant 0 : i32
    %c0_i32_1 = arith.constant 0 : i32
    %c0_i32_2 = arith.constant 0 : i32
    return %c0_i32, %c0_i32_0, %c0_i32_1 : i32, i32, i32
  }
  func.func @transform_11(%arg0: i32) -> (i32, i32, i32) {
    %c0_i32 = arith.constant 0 : i32
    %c0_i32_0 = arith.constant 0 : i32
    %c0_i32_1 = arith.constant 0 : i32
    %c0_i32_2 = arith.constant 0 : i32
    return %c0_i32, %c0_i32_0, %c0_i32_1 : i32, i32, i32
  }
  func.func @transform_12(%arg0: i32) -> (i32, i32, i32) {
    %c0_i32 = arith.constant 0 : i32
    %c0_i32_0 = arith.constant 0 : i32
    %c0_i32_1 = arith.constant 0 : i32
    %c0_i32_2 = arith.constant 0 : i32
    return %c0_i32, %c0_i32_0, %c0_i32_1 : i32, i32, i32
  }
  func.func @transform_13(%arg0: i32) -> (i32, i32, i32) {
    %c0_i32 = arith.constant 0 : i32
    %c0_i32_0 = arith.constant 0 : i32
    %c0_i32_1 = arith.constant 0 : i32
    %c0_i32_2 = arith.constant 0 : i32
    return %c0_i32, %c0_i32_0, %c0_i32_1 : i32, i32, i32
  }
  func.func @transform_14(%arg0: i32) -> (i32, i32, i32) {
    %c0_i32 = arith.constant 0 : i32
    %c0_i32_0 = arith.constant 0 : i32
    %c0_i32_1 = arith.constant 0 : i32
    %c0_i32_2 = arith.constant 0 : i32
    return %c0_i32, %c0_i32_0, %c0_i32_1 : i32, i32, i32
  }
  func.func @transform_15(%arg0: i32) -> (i32, i32, i32) {
    %c0_i32 = arith.constant 0 : i32
    %c0_i32_0 = arith.constant 0 : i32
    %c0_i32_1 = arith.constant 0 : i32
    %c0_i32_2 = arith.constant 0 : i32
    return %c0_i32, %c0_i32_0, %c0_i32_1 : i32, i32, i32
  }
  func.func @transform_16(%arg0: i32) -> (i32, i32, i32) {
    %c0_i32 = arith.constant 0 : i32
    %c0_i32_0 = arith.constant 0 : i32
    %c0_i32_1 = arith.constant 0 : i32
    %c0_i32_2 = arith.constant 0 : i32
    return %c0_i32, %c0_i32_0, %c0_i32_1 : i32, i32, i32
  }
  func.func @transform_17(%arg0: i32) -> (i32, i32, i32) {
    %c0_i32 = arith.constant 0 : i32
    %c0_i32_0 = arith.constant 0 : i32
    %c0_i32_1 = arith.constant 0 : i32
    %c0_i32_2 = arith.constant 0 : i32
    return %c0_i32, %c0_i32_0, %c0_i32_1 : i32, i32, i32
  }
  func.func @transform_18(%arg0: i32) -> (i32, i32) {
    %c0_i32 = arith.constant 0 : i32
    %c0_i32_0 = arith.constant 0 : i32
    %c0_i32_1 = arith.constant 0 : i32
    return %c0_i32, %c0_i32_0 : i32, i32
  }
  func.func @transform_19(%arg0: i32) -> (i32, i32, i32) {
    %c0_i32 = arith.constant 0 : i32
    %c0_i32_0 = arith.constant 0 : i32
    %c0_i32_1 = arith.constant 0 : i32
    %c0_i32_2 = arith.constant 0 : i32
    return %c0_i32, %c0_i32_0, %c0_i32_1 : i32, i32, i32
  }
  func.func @transform_20(%arg0: i32) -> (i32, i32, i32) {
    %c0_i32 = arith.constant 0 : i32
    %c0_i32_0 = arith.constant 0 : i32
    %c0_i32_1 = arith.constant 0 : i32
    %c0_i32_2 = arith.constant 0 : i32
    return %c0_i32, %c0_i32_0, %c0_i32_1 : i32, i32, i32
  }
  func.func @transform_21(%arg0: i32) -> (i32, i32, i32) {
    %c0_i32 = arith.constant 0 : i32
    %c0_i32_0 = arith.constant 0 : i32
    %c0_i32_1 = arith.constant 0 : i32
    %c0_i32_2 = arith.constant 0 : i32
    return %c0_i32, %c0_i32_0, %c0_i32_1 : i32, i32, i32
  }
  func.func @transform_22(%arg0: i32) -> (i32, i32) {
    %c0_i32 = arith.constant 0 : i32
    %c0_i32_0 = arith.constant 0 : i32
    %c0_i32_1 = arith.constant 0 : i32
    return %c0_i32, %c0_i32_0 : i32, i32
  }
  func.func @transform_23(%arg0: i32) -> (i32, i32, i32) {
    %c0_i32 = arith.constant 0 : i32
    %c0_i32_0 = arith.constant 0 : i32
    %c0_i32_1 = arith.constant 0 : i32
    return %arg0, %c0_i32, %c0_i32_0 : i32, i32, i32
  }
}

</mosaic_0001>

<llo_original>
// kernel: tpu_custom_call.1
$region0: #{tpu_custom_call.1}
  #allocation0 [shape = 'u32[]', space=smem, size = 0x4, offset = 0x4, fixed_abs, tag = 'smem constant byte address 0x4 - core index']
  #allocation1 [shape = 'u32[144,128]{1,0:T(1,128)}', space=vmem, size = 0x12000, scoped, tag = 'internal scratch']
  #allocation2 [shape = 'f32[1,32,128]{2,1,0:T(8,128)}', space=vmem, size = 0x4000, scoped, tag = 'scratch operand']
  #allocation3 [shape = 'f32[1,32,64]{2,1,0:T(8,128)}', space=vmem, size = 0x4000, scoped, tag = 'scratch operand']
  %s0 = inlined_call_operand.hbm [shape: f32[2,16,64], index: 0, kind: input, shape index: {}]
  %s1 = inlined_call_operand.hbm [shape: f32[3,64,128], index: 1, kind: input, shape index: {}]
  %s2 = inlined_call_operand.vmem [shape: f32[1,1,128], index: 2, kind: input, shape index: {}]
  %s3 = inlined_call_operand.vmem [shape: f32[3,128,128], index: 3, kind: input, shape index: {}]
  %s4 = inlined_call_operand.vmem [shape: f32[1,1,128], index: 4, kind: input, shape index: {}]
  %s5 = inlined_call_operand.hbm [shape: f32[3,128,128], index: 5, kind: input, shape index: {}]
  %s6 = inlined_call_operand.vmem [shape: f32[1,1,128], index: 6, kind: input, shape index: {}]
  %s7 = inlined_call_operand.hbm [shape: f32[5,128,128], index: 7, kind: input, shape index: {}]
  %s8 = inlined_call_operand.vmem [shape: f32[1,1,128], index: 8, kind: input, shape index: {}]
  %s9 = inlined_call_operand.hbm [shape: f32[5,128,128], index: 9, kind: input, shape index: {}]
  %s10 = inlined_call_operand.vmem [shape: f32[1,1,128], index: 10, kind: input, shape index: {}]
  %s11 = inlined_call_operand.hbm [shape: f32[3,128,128], index: 11, kind: input, shape index: {}]
  %s12 = inlined_call_operand.vmem [shape: f32[1,1,128], index: 12, kind: input, shape index: {}]
  %s13 = inlined_call_operand.hbm [shape: f32[5,128,128], index: 13, kind: input, shape index: {}]
  %s14 = inlined_call_operand.vmem [shape: f32[1,1,128], index: 14, kind: input, shape index: {}]
  %s15 = inlined_call_operand.vmem [shape: f32[9,16,128], index: 15, kind: input, shape index: {}]
  %s16 = inlined_call_operand.vmem [shape: f32[1,1,128], index: 16, kind: input, shape index: {}]
  %s17 = inlined_call_operand.vmem [shape: f32[1,1,128], index: 17, kind: input, shape index: {}]
  %s18 = inlined_call_operand.hbm [shape: f32[128,128], index: 18, kind: input, shape index: {}]
  %s19 = inlined_call_operand.vmem [shape: f32[1,16,128], index: 19, kind: input, shape index: {}]
  %s20 = inlined_call_operand.vmem [shape: f32[1,1,128], index: 20, kind: input, shape index: {}]
  %s21 = inlined_call_operand.vmem [shape: f32[4,128,10], index: 21, kind: input, shape index: {}]
  %s22 = inlined_call_operand.vmem [shape: f32[1,10], index: 22, kind: input, shape index: {}]
  %s23 = inlined_call_operand.hbm [shape: f32[2,1,10], index: 23, kind: output, shape index: {}]
  %s24 = sld [smem:[#allocation0]]
  $region157: #{tpu_custom_call.1} parent=0
    _
  %s26 = ssub.s32 1, %s24
  %s27 = scalar_select 0, %s26, %s24
  $region1: #{tpu_custom_call.1} parent=0
    #allocation4 [shape = 'u8[16384]{0}', space=vmem, size = 0x4000, scoped, tag = 'input window, operand 0']
    #allocation5 [shape = 's32[2]{0}', space=sflag, size = 0x8, scoped, tag = 'scoped memory for tpu_custom_call.1']
    #allocation6 [shape = 's32[2]{0}', space=sflag, size = 0x8, scoped, tag = 'scoped memory for tpu_custom_call.1']
    #allocation7 [shape = 'u8[98304]{0}', space=vmem, size = 0x18000, scoped, tag = 'input window, operand 1, single buffered']
    #allocation8 [shape = 's32[1]{0}', space=sflag, size = 0x4, scoped, tag = 'scoped memory for tpu_custom_call.1']
    #allocation9 [shape = 'u8[196608]{0}', space=vmem, size = 0x30000, scoped, tag = 'input window, operand 5, single buffered']
    #allocation10 [shape = 'u8[327680]{0}', space=vmem, size = 0x50000, scoped, tag = 'input window, operand 7, single buffered']
    #allocation11 [shape = 's32[1]{0}', space=sflag, size = 0x4, scoped, tag = 'scoped memory for tpu_custom_call.1']
    #allocation12 [shape = 'u8[327680]{0}', space=vmem, size = 0x50000, scoped, tag = 'input window, operand 9, single buffered']
    #allocation13 [shape = 'u8[196608]{0}', space=vmem, size = 0x30000, scoped, tag = 'input window, operand 11, single buffered']
    #allocation14 [shape = 's32[1]{0}', space=sflag, size = 0x4, scoped, tag = 'scoped memory for tpu_custom_call.1']
    #allocation15 [shape = 'u8[327680]{0}', space=vmem, size = 0x50000, scoped, tag = 'input window, operand 13, single buffered']
    #allocation16 [shape = 'u8[65536]{0}', space=vmem, size = 0x10000, scoped, tag = 'input window, operand 18, single buffered']
    #allocation17 [shape = 's32[1]{0}', space=sflag, size = 0x4, scoped, tag = 'scoped memory for tpu_custom_call.1']
    #allocation18 [shape = 'u8[1024]{0}', space=vmem, size = 0x400, scoped, tag = 'output window, operand 0']
    %28 = vsyncpa [#allocation5], 0
    %s29 = scalar_lea.sflag [#allocation5], 1
    %30 = vsyncpa %s29, 0
    %31 = vsyncpa [#allocation8], 0
    %32 = vsyncpa [#allocation11], 0
    %33 = vsyncpa [#allocation14], 0
    %34 = vsyncpa [#allocation17], 0
    %35 = vsyncpa [#allocation6], 0
    %s36 = scalar_lea.sflag [#allocation6], 1
    %37 = vsyncpa %s36, 0
    loop: start=0, step=1, limit=4
    $region2: #{tpu_custom_call.1} parent=1 // loop_pre_header
      _
    $region3: #{tpu_custom_call.1} parent=1 // loop_header
      %s39 = sphi 0, %s43
      %p40 = scmp.ge.s32.totalorder %s39, 4
      %s49 = sphi 0, %s51
      %s52 = sphi 0, %s49
      %s53 = sphi 0, %s52
      %s69 = sphi 0, %s53
      %s73 = sphi 0, %s73
      %s75 = sphi 0, %s73
      %s76 = sphi 0, %s75
      %s90 = sphi 0, %s76
      %s94 = sphi 0, %s94
      %s96 = sphi 0, %s94
      %s97 = sphi 0, %s96
      %s111 = sphi 0, %s97
      %s115 = sphi 0, %s115
      %s117 = sphi 0, %s115
      %s118 = sphi 0, %s117
      %s132 = sphi 0, %s118
      %s136 = sphi 0, %s136
      %s138 = sphi 0, %s136
      %s139 = sphi 0, %s138
      %s153 = sphi 0, %s139
      %s157 = sphi 0, %s157
      %s159 = sphi 0, %s157
      %s160 = sphi 0, %s159
      %s174 = sphi 0, %s160
      %s178 = sphi 0, %s178
      %s180 = sphi 0, %s178
      %s181 = sphi 0, %s180
      %s195 = sphi 0, %s181
      %s199 = sphi 0, %s199
      %s201 = sphi 0, %s199
      %s202 = sphi 0, %s201
      %s216 = sphi 0, %s202
      %s220 = sphi 0, %s220
      %s222 = sphi 0, %s220
      %s223 = sphi 0, %s222
      %s237 = sphi 0, %s223
      %s241 = sphi 0, %s241
      %s243 = sphi 0, %s241
      %s244 = sphi 0, %s243
      %s258 = sphi 0, %s244
      %s262 = sphi 0, %s262
      %s264 = sphi 0, %s262
      %s265 = sphi 0, %s264
      %s279 = sphi 0, %s265
      %s283 = sphi 0, %s283
      %s285 = sphi 0, %s283
      %s286 = sphi 0, %s285
      %s300 = sphi 0, %s286
      %s304 = sphi 0, %s304
      %s306 = sphi 0, %s304
      %s307 = sphi 0, %s306
      %s321 = sphi 0, %s307
      %s325 = sphi 0, %s325
      %s327 = sphi 0, %s325
      %s328 = sphi 0, %s327
      %s342 = sphi 0, %s328
      %s346 = sphi 0, %s346
      %s348 = sphi 0, %s346
      %s349 = sphi 0, %s348
      %s363 = sphi 0, %s349
      %s367 = sphi 0, %s367
      %s369 = sphi 0, %s367
      %s370 = sphi 0, %s369
      %s384 = sphi 0, %s370
      %s388 = sphi 0, %s388
      %s390 = sphi 0, %s388
      %s391 = sphi 0, %s390
      %s405 = sphi 0, %s391
      %s409 = sphi 0, %s409
      %s411 = sphi 0, %s409
      %s412 = sphi 0, %s411
      %s426 = sphi 0, %s412
      %s430 = sphi 0, %s430
      %s432 = sphi 0, %s430
      %s433 = sphi 0, %s432
      %s447 = sphi 0, %s433
      %s451 = sphi 0, %s451
      %s453 = sphi 0, %s451
      %s454 = sphi 0, %s453
      %s468 = sphi 0, %s454
      %s472 = sphi 0, %s472
      %s474 = sphi 0, %s472
      %s475 = sphi 0, %s474
      %s489 = sphi 0, %s475
      %s493 = sphi 0, %s493
      %s495 = sphi 0, %s493
      %s496 = sphi 0, %s495
      %s510 = sphi 0, %s496
      %s514 = sphi 0, %s514
      %s516 = sphi 0, %s514
      %s517 = sphi 0, %s516
      %s531 = sphi 0, %s517
      %s537 = sphi 0, %s539
      %s540 = sphi 0, %s537
      %s541 = sphi 0, %s540
      %s557 = sphi 0, %s541
    $region4: #{tpu_custom_call.1} parent=1 // loop_header_branch
      %42 = sbr.rel (%p40) target = $region8
    $region5: #{tpu_custom_call.1} parent=1 // loop_body
      %s44 = ssub.s32 %s39, 1
      %s45 = ssub.s32 %s39, 2
      %s46 = sadd.s32 %s39, 1
      %s47 = ssub.s32 %s39, %s46
      %p48 = scmp.eq.s32.totalorder %s47, 0
      %s50 = sadd.s32 %s49, 1
      %s51 = scalar_select %p48, %s49, %s50
      %p54 = pneg %p48
      %p55 = scmp.eq.s32.totalorder %s39, 1
      %p56 = por %p54, %p55
      %p57 = scmp.ne.s32.totalorder %s49, %s52
      %p58 = scmp.eq.s32.totalorder %s39, 0
      %p59 = por %p57, %p58
      %p60 = scmp.ne.s32.totalorder %s49, %s52
      %p61 = scmp.eq.s32.totalorder %s44, 1
      %p62 = por %p60, %p61
      %p63 = scmp.ne.s32.totalorder %s52, %s53
      %p64 = scmp.eq.s32.totalorder %s44, 0
      %p65 = por %p63, %p64
      %p66 = scmp.ne.s32.totalorder %s52, %s53
      %p67 = scmp.eq.s32.totalorder %s45, 1
      %p68 = por %p66, %p67
      %p70 = scmp.ne.s32.totalorder %s53, %s69
      %p71 = scmp.eq.s32.totalorder %s45, 0
      %p72 = por %p70, %p71
      %s74 = sadd.s32 %s73, 1
      %p77 = scmp.eq.s32.totalorder %s39, 1
      %p78 = scmp.ne.s32.totalorder %s73, %s75
      %p79 = scmp.eq.s32.totalorder %s39, 0
      %p80 = por %p78, %p79
      %p81 = scmp.ne.s32.totalorder %s73, %s75
      %p82 = scmp.eq.s32.totalorder %s44, 1
      %p83 = por %p81, %p82
      %p84 = scmp.ne.s32.totalorder %s75, %s76
      %p85 = scmp.eq.s32.totalorder %s44, 0
      %p86 = por %p84, %p85
      %p87 = scmp.ne.s32.totalorder %s75, %s76
      %p88 = scmp.eq.s32.totalorder %s45, 1
      %p89 = por %p87, %p88
      %p91 = scmp.ne.s32.totalorder %s76, %s90
      %p92 = scmp.eq.s32.totalorder %s45, 0
      %p93 = por %p91, %p92
      %s95 = sadd.s32 %s94, 1
      %p98 = scmp.eq.s32.totalorder %s39, 1
      %p99 = scmp.ne.s32.totalorder %s94, %s96
      %p100 = scmp.eq.s32.totalorder %s39, 0
      %p101 = por %p99, %p100
      %p102 = scmp.ne.s32.totalorder %s94, %s96
      %p103 = scmp.eq.s32.totalorder %s44, 1
      %p104 = por %p102, %p103
      %p105 = scmp.ne.s32.totalorder %s96, %s97
      %p106 = scmp.eq.s32.totalorder %s44, 0
      %p107 = por %p105, %p106
      %p108 = scmp.ne.s32.totalorder %s96, %s97
      %p109 = scmp.eq.s32.totalorder %s45, 1
      %p110 = por %p108, %p109
      %p112 = scmp.ne.s32.totalorder %s97, %s111
      %p113 = scmp.eq.s32.totalorder %s45, 0
      %p114 = por %p112, %p113
      %s116 = sadd.s32 %s115, 1
      %p119 = scmp.eq.s32.totalorder %s39, 1
      %p120 = scmp.ne.s32.totalorder %s115, %s117
      %p121 = scmp.eq.s32.totalorder %s39, 0
      %p122 = por %p120, %p121
      %p123 = scmp.ne.s32.totalorder %s115, %s117
      %p124 = scmp.eq.s32.totalorder %s44, 1
      %p125 = por %p123, %p124
      %p126 = scmp.ne.s32.totalorder %s117, %s118
      %p127 = scmp.eq.s32.totalorder %s44, 0
      %p128 = por %p126, %p127
      %p129 = scmp.ne.s32.totalorder %s117, %s118
      %p130 = scmp.eq.s32.totalorder %s45, 1
      %p131 = por %p129, %p130
      %p133 = scmp.ne.s32.totalorder %s118, %s132
      %p134 = scmp.eq.s32.totalorder %s45, 0
      %p135 = por %p133, %p134
      %s137 = sadd.s32 %s136, 1
      %p140 = scmp.eq.s32.totalorder %s39, 1
      %p141 = scmp.ne.s32.totalorder %s136, %s138
      %p142 = scmp.eq.s32.totalorder %s39, 0
      %p143 = por %p141, %p142
      %p144 = scmp.ne.s32.totalorder %s136, %s138
      %p145 = scmp.eq.s32.totalorder %s44, 1
      %p146 = por %p144, %p145
      %p147 = scmp.ne.s32.totalorder %s138, %s139
      %p148 = scmp.eq.s32.totalorder %s44, 0
      %p149 = por %p147, %p148
      %p150 = scmp.ne.s32.totalorder %s138, %s139
      %p151 = scmp.eq.s32.totalorder %s45, 1
      %p152 = por %p150, %p151
      %p154 = scmp.ne.s32.totalorder %s139, %s153
      %p155 = scmp.eq.s32.totalorder %s45, 0
      %p156 = por %p154, %p155
      %s158 = sadd.s32 %s157, 1
      %p161 = scmp.eq.s32.totalorder %s39, 1
      %p162 = scmp.ne.s32.totalorder %s157, %s159
      %p163 = scmp.eq.s32.totalorder %s39, 0
      %p164 = por %p162, %p163
      %p165 = scmp.ne.s32.totalorder %s157, %s159
      %p166 = scmp.eq.s32.totalorder %s44, 1
      %p167 = por %p165, %p166
      %p168 = scmp.ne.s32.totalorder %s159, %s160
      %p169 = scmp.eq.s32.totalorder %s44, 0
      %p170 = por %p168, %p169
      %p171 = scmp.ne.s32.totalorder %s159, %s160
      %p172 = scmp.eq.s32.totalorder %s45, 1
      %p173 = por %p171, %p172
      %p175 = scmp.ne.s32.totalorder %s160, %s174
      %p176 = scmp.eq.s32.totalorder %s45, 0
      %p177 = por %p175, %p176
      %s179 = sadd.s32 %s178, 1
      %p182 = scmp.eq.s32.totalorder %s39, 1
      %p183 = scmp.ne.s32.totalorder %s178, %s180
      %p184 = scmp.eq.s32.totalorder %s39, 0
      %p185 = por %p183, %p184
      %p186 = scmp.ne.s32.totalorder %s178, %s180
      %p187 = scmp.eq.s32.totalorder %s44, 1
      %p188 = por %p186, %p187
      %p189 = scmp.ne.s32.totalorder %s180, %s181
      %p190 = scmp.eq.s32.totalorder %s44, 0
      %p191 = por %p189, %p190
      %p192 = scmp.ne.s32.totalorder %s180, %s181
      %p193 = scmp.eq.s32.totalorder %s45, 1
      %p194 = por %p192, %p193
      %p196 = scmp.ne.s32.totalorder %s181, %s195
      %p197 = scmp.eq.s32.totalorder %s45, 0
      %p198 = por %p196, %p197
      %s200 = sadd.s32 %s199, 1
      %p203 = scmp.eq.s32.totalorder %s39, 1
      %p204 = scmp.ne.s32.totalorder %s199, %s201
      %p205 = scmp.eq.s32.totalorder %s39, 0
      %p206 = por %p204, %p205
      %p207 = scmp.ne.s32.totalorder %s199, %s201
      %p208 = scmp.eq.s32.totalorder %s44, 1
      %p209 = por %p207, %p208
      %p210 = scmp.ne.s32.totalorder %s201, %s202
      %p211 = scmp.eq.s32.totalorder %s44, 0
      %p212 = por %p210, %p211
      %p213 = scmp.ne.s32.totalorder %s201, %s202
      %p214 = scmp.eq.s32.totalorder %s45, 1
      %p215 = por %p213, %p214
      %p217 = scmp.ne.s32.totalorder %s202, %s216
      %p218 = scmp.eq.s32.totalorder %s45, 0
      %p219 = por %p217, %p218
      %s221 = sadd.s32 %s220, 1
      %p224 = scmp.eq.s32.totalorder %s39, 1
      %p225 = scmp.ne.s32.totalorder %s220, %s222
      %p226 = scmp.eq.s32.totalorder %s39, 0
      %p227 = por %p225, %p226
      %p228 = scmp.ne.s32.totalorder %s220, %s222
      %p229 = scmp.eq.s32.totalorder %s44, 1
      %p230 = por %p228, %p229
      %p231 = scmp.ne.s32.totalorder %s222, %s223
      %p232 = scmp.eq.s32.totalorder %s44, 0
      %p233 = por %p231, %p232
      %p234 = scmp.ne.s32.totalorder %s222, %s223
      %p235 = scmp.eq.s32.totalorder %s45, 1
      %p236 = por %p234, %p235
      %p238 = scmp.ne.s32.totalorder %s223, %s237
      %p239 = scmp.eq.s32.totalorder %s45, 0
      %p240 = por %p238, %p239
      %s242 = sadd.s32 %s241, 1
      %p245 = scmp.eq.s32.totalorder %s39, 1
      %p246 = scmp.ne.s32.totalorder %s241, %s243
      %p247 = scmp.eq.s32.totalorder %s39, 0
      %p248 = por %p246, %p247
      %p249 = scmp.ne.s32.totalorder %s241, %s243
      %p250 = scmp.eq.s32.totalorder %s44, 1
      %p251 = por %p249, %p250
      %p252 = scmp.ne.s32.totalorder %s243, %s244
      %p253 = scmp.eq.s32.totalorder %s44, 0
      %p254 = por %p252, %p253
      %p255 = scmp.ne.s32.totalorder %s243, %s244
      %p256 = scmp.eq.s32.totalorder %s45, 1
      %p257 = por %p255, %p256
      %p259 = scmp.ne.s32.totalorder %s244, %s258
      %p260 = scmp.eq.s32.totalorder %s45, 0
      %p261 = por %p259, %p260
      %s263 = sadd.s32 %s262, 1
      %p266 = scmp.eq.s32.totalorder %s39, 1
      %p267 = scmp.ne.s32.totalorder %s262, %s264
      %p268 = scmp.eq.s32.totalorder %s39, 0
      %p269 = por %p267, %p268
      %p270 = scmp.ne.s32.totalorder %s262, %s264
      %p271 = scmp.eq.s32.totalorder %s44, 1
      %p272 = por %p270, %p271
      %p273 = scmp.ne.s32.totalorder %s264, %s265
      %p274 = scmp.eq.s32.totalorder %s44, 0
      %p275 = por %p273, %p274
      %p276 = scmp.ne.s32.totalorder %s264, %s265
      %p277 = scmp.eq.s32.totalorder %s45, 1
      %p278 = por %p276, %p277
      %p280 = scmp.ne.s32.totalorder %s265, %s279
      %p281 = scmp.eq.s32.totalorder %s45, 0
      %p282 = por %p280, %p281
      %s284 = sadd.s32 %s283, 1
      %p287 = scmp.eq.s32.totalorder %s39, 1
      %p288 = scmp.ne.s32.totalorder %s283, %s285
      %p289 = scmp.eq.s32.totalorder %s39, 0
      %p290 = por %p288, %p289
      %p291 = scmp.ne.s32.totalorder %s283, %s285
      %p292 = scmp.eq.s32.totalorder %s44, 1
      %p293 = por %p291, %p292
      %p294 = scmp.ne.s32.totalorder %s285, %s286
      %p295 = scmp.eq.s32.totalorder %s44, 0
      %p296 = por %p294, %p295
      %p297 = scmp.ne.s32.totalorder %s285, %s286
      %p298 = scmp.eq.s32.totalorder %s45, 1
      %p299 = por %p297, %p298
      %p301 = scmp.ne.s32.totalorder %s286, %s300
      %p302 = scmp.eq.s32.totalorder %s45, 0
      %p303 = por %p301, %p302
      %s305 = sadd.s32 %s304, 1
      %p308 = scmp.eq.s32.totalorder %s39, 1
      %p309 = scmp.ne.s32.totalorder %s304, %s306
      %p310 = scmp.eq.s32.totalorder %s39, 0
      %p311 = por %p309, %p310
      %p312 = scmp.ne.s32.totalorder %s304, %s306
      %p313 = scmp.eq.s32.totalorder %s44, 1
      %p314 = por %p312, %p313
      %p315 = scmp.ne.s32.totalorder %s306, %s307
      %p316 = scmp.eq.s32.totalorder %s44, 0
      %p317 = por %p315, %p316
      %p318 = scmp.ne.s32.totalorder %s306, %s307
      %p319 = scmp.eq.s32.totalorder %s45, 1
      %p320 = por %p318, %p319
      %p322 = scmp.ne.s32.totalorder %s307, %s321
      %p323 = scmp.eq.s32.totalorder %s45, 0
      %p324 = por %p322, %p323
      %s326 = sadd.s32 %s325, 1
      %p329 = scmp.eq.s32.totalorder %s39, 1
      %p330 = scmp.ne.s32.totalorder %s325, %s327
      %p331 = scmp.eq.s32.totalorder %s39, 0
      %p332 = por %p330, %p331
      %p333 = scmp.ne.s32.totalorder %s325, %s327
      %p334 = scmp.eq.s32.totalorder %s44, 1
      %p335 = por %p333, %p334
      %p336 = scmp.ne.s32.totalorder %s327, %s328
      %p337 = scmp.eq.s32.totalorder %s44, 0
      %p338 = por %p336, %p337
      %p339 = scmp.ne.s32.totalorder %s327, %s328
      %p340 = scmp.eq.s32.totalorder %s45, 1
      %p341 = por %p339, %p340
      %p343 = scmp.ne.s32.totalorder %s328, %s342
      %p344 = scmp.eq.s32.totalorder %s45, 0
      %p345 = por %p343, %p344
      %s347 = sadd.s32 %s346, 1
      %p350 = scmp.eq.s32.totalorder %s39, 1
      %p351 = scmp.ne.s32.totalorder %s346, %s348
      %p352 = scmp.eq.s32.totalorder %s39, 0
      %p353 = por %p351, %p352
      %p354 = scmp.ne.s32.totalorder %s346, %s348
      %p355 = scmp.eq.s32.totalorder %s44, 1
      %p356 = por %p354, %p355
      %p357 = scmp.ne.s32.totalorder %s348, %s349
      %p358 = scmp.eq.s32.totalorder %s44, 0
      %p359 = por %p357, %p358
      %p360 = scmp.ne.s32.totalorder %s348, %s349
      %p361 = scmp.eq.s32.totalorder %s45, 1
      %p362 = por %p360, %p361
      %p364 = scmp.ne.s32.totalorder %s349, %s363
      %p365 = scmp.eq.s32.totalorder %s45, 0
      %p366 = por %p364, %p365
      %s368 = sadd.s32 %s367, 1
      %p371 = scmp.eq.s32.totalorder %s39, 1
      %p372 = scmp.ne.s32.totalorder %s367, %s369
      %p373 = scmp.eq.s32.totalorder %s39, 0
      %p374 = por %p372, %p373
      %p375 = scmp.ne.s32.totalorder %s367, %s369
      %p376 = scmp.eq.s32.totalorder %s44, 1
      %p377 = por %p375, %p376
      %p378 = scmp.ne.s32.totalorder %s369, %s370
      %p379 = scmp.eq.s32.totalorder %s44, 0
      %p380 = por %p378, %p379
      %p381 = scmp.ne.s32.totalorder %s369, %s370
      %p382 = scmp.eq.s32.totalorder %s45, 1
      %p383 = por %p381, %p382
      %p385 = scmp.ne.s32.totalorder %s370, %s384
      %p386 = scmp.eq.s32.totalorder %s45, 0
      %p387 = por %p385, %p386
      %s389 = sadd.s32 %s388, 1
      %p392 = scmp.eq.s32.totalorder %s39, 1
      %p393 = scmp.ne.s32.totalorder %s388, %s390
      %p394 = scmp.eq.s32.totalorder %s39, 0
      %p395 = por %p393, %p394
      %p396 = scmp.ne.s32.totalorder %s388, %s390
      %p397 = scmp.eq.s32.totalorder %s44, 1
      %p398 = por %p396, %p397
      %p399 = scmp.ne.s32.totalorder %s390, %s391
      %p400 = scmp.eq.s32.totalorder %s44, 0
      %p401 = por %p399, %p400
      %p402 = scmp.ne.s32.totalorder %s390, %s391
      %p403 = scmp.eq.s32.totalorder %s45, 1
      %p404 = por %p402, %p403
      %p406 = scmp.ne.s32.totalorder %s391, %s405
      %p407 = scmp.eq.s32.totalorder %s45, 0
      %p408 = por %p406, %p407
      %s410 = sadd.s32 %s409, 1
      %p413 = scmp.eq.s32.totalorder %s39, 1
      %p414 = scmp.ne.s32.totalorder %s409, %s411
      %p415 = scmp.eq.s32.totalorder %s39, 0
      %p416 = por %p414, %p415
      %p417 = scmp.ne.s32.totalorder %s409, %s411
      %p418 = scmp.eq.s32.totalorder %s44, 1
      %p419 = por %p417, %p418
      %p420 = scmp.ne.s32.totalorder %s411, %s412
      %p421 = scmp.eq.s32.totalorder %s44, 0
      %p422 = por %p420, %p421
      %p423 = scmp.ne.s32.totalorder %s411, %s412
      %p424 = scmp.eq.s32.totalorder %s45, 1
      %p425 = por %p423, %p424
      %p427 = scmp.ne.s32.totalorder %s412, %s426
      %p428 = scmp.eq.s32.totalorder %s45, 0
      %p429 = por %p427, %p428
      %s431 = sadd.s32 %s430, 1
      %p434 = scmp.eq.s32.totalorder %s39, 1
      %p435 = scmp.ne.s32.totalorder %s430, %s432
      %p436 = scmp.eq.s32.totalorder %s39, 0
      %p437 = por %p435, %p436
      %p438 = scmp.ne.s32.totalorder %s430, %s432
      %p439 = scmp.eq.s32.totalorder %s44, 1
      %p440 = por %p438, %p439
      %p441 = scmp.ne.s32.totalorder %s432, %s433
      %p442 = scmp.eq.s32.totalorder %s44, 0
      %p443 = por %p441, %p442
      %p444 = scmp.ne.s32.totalorder %s432, %s433
      %p445 = scmp.eq.s32.totalorder %s45, 1
      %p446 = por %p444, %p445
      %p448 = scmp.ne.s32.totalorder %s433, %s447
      %p449 = scmp.eq.s32.totalorder %s45, 0
      %p450 = por %p448, %p449
      %s452 = sadd.s32 %s451, 1
      %p455 = scmp.eq.s32.totalorder %s39, 1
      %p456 = scmp.ne.s32.totalorder %s451, %s453
      %p457 = scmp.eq.s32.totalorder %s39, 0
      %p458 = por %p456, %p457
      %p459 = scmp.ne.s32.totalorder %s451, %s453
      %p460 = scmp.eq.s32.totalorder %s44, 1
      %p461 = por %p459, %p460
      %p462 = scmp.ne.s32.totalorder %s453, %s454
      %p463 = scmp.eq.s32.totalorder %s44, 0
      %p464 = por %p462, %p463
      %p465 = scmp.ne.s32.totalorder %s453, %s454
      %p466 = scmp.eq.s32.totalorder %s45, 1
      %p467 = por %p465, %p466
      %p469 = scmp.ne.s32.totalorder %s454, %s468
      %p470 = scmp.eq.s32.totalorder %s45, 0
      %p471 = por %p469, %p470
      %s473 = sadd.s32 %s472, 1
      %p476 = scmp.eq.s32.totalorder %s39, 1
      %p477 = scmp.ne.s32.totalorder %s472, %s474
      %p478 = scmp.eq.s32.totalorder %s39, 0
      %p479 = por %p477, %p478
      %p480 = scmp.ne.s32.totalorder %s472, %s474
      %p481 = scmp.eq.s32.totalorder %s44, 1
      %p482 = por %p480, %p481
      %p483 = scmp.ne.s32.totalorder %s474, %s475
      %p484 = scmp.eq.s32.totalorder %s44, 0
      %p485 = por %p483, %p484
      %p486 = scmp.ne.s32.totalorder %s474, %s475
      %p487 = scmp.eq.s32.totalorder %s45, 1
      %p488 = por %p486, %p487
      %p490 = scmp.ne.s32.totalorder %s475, %s489
      %p491 = scmp.eq.s32.totalorder %s45, 0
      %p492 = por %p490, %p491
      %s494 = sadd.s32 %s493, 1
      %p497 = scmp.eq.s32.totalorder %s39, 1
      %p498 = scmp.ne.s32.totalorder %s493, %s495
      %p499 = scmp.eq.s32.totalorder %s39, 0
      %p500 = por %p498, %p499
      %p501 = scmp.ne.s32.totalorder %s493, %s495
      %p502 = scmp.eq.s32.totalorder %s44, 1
      %p503 = por %p501, %p502
      %p504 = scmp.ne.s32.totalorder %s495, %s496
      %p505 = scmp.eq.s32.totalorder %s44, 0
      %p506 = por %p504, %p505
      %p507 = scmp.ne.s32.totalorder %s495, %s496
      %p508 = scmp.eq.s32.totalorder %s45, 1
      %p509 = por %p507, %p508
      %p511 = scmp.ne.s32.totalorder %s496, %s510
      %p512 = scmp.eq.s32.totalorder %s45, 0
      %p513 = por %p511, %p512
      %s515 = sadd.s32 %s514, 1
      %p518 = scmp.eq.s32.totalorder %s39, 1
      %p519 = scmp.ne.s32.totalorder %s514, %s516
      %p520 = scmp.eq.s32.totalorder %s39, 0
      %p521 = por %p519, %p520
      %p522 = scmp.ne.s32.totalorder %s514, %s516
      %p523 = scmp.eq.s32.totalorder %s44, 1
      %p524 = por %p522, %p523
      %p525 = scmp.ne.s32.totalorder %s516, %s517
      %p526 = scmp.eq.s32.totalorder %s44, 0
      %p527 = por %p525, %p526
      %p528 = scmp.ne.s32.totalorder %s516, %s517
      %p529 = scmp.eq.s32.totalorder %s45, 1
      %p530 = por %p528, %p529
      %p532 = scmp.ne.s32.totalorder %s517, %s531
      %p533 = scmp.eq.s32.totalorder %s45, 0
      %p534 = por %p532, %p533
      %s535 = ssub.s32 %s39, %s46
      %p536 = scmp.eq.s32.totalorder %s535, 0
      %s538 = sadd.s32 %s537, 1
      %s539 = scalar_select %p536, %s537, %s538
      %p542 = pneg %p536
      %p543 = scmp.eq.s32.totalorder %s39, 1
      %p544 = por %p542, %p543
      %p545 = scmp.ne.s32.totalorder %s537, %s540
      %p546 = scmp.eq.s32.totalorder %s39, 0
      %p547 = por %p545, %p546
      %p548 = scmp.ne.s32.totalorder %s537, %s540
      %p549 = scmp.eq.s32.totalorder %s44, 1
      %p550 = por %p548, %p549
      %p551 = scmp.ne.s32.totalorder %s540, %s541
      %p552 = scmp.eq.s32.totalorder %s44, 0
      %p553 = por %p551, %p552
      %p554 = scmp.ne.s32.totalorder %s540, %s541
      %p555 = scmp.eq.s32.totalorder %s45, 1
      %p556 = por %p554, %p555
      %p558 = scmp.ne.s32.totalorder %s541, %s557
      %p559 = scmp.eq.s32.totalorder %s45, 0
      %p560 = por %p558, %p559
      %p561 = scmp.le.s32.totalorder 1, %s39
      %p562 = scmp.lt.s32.totalorder %s39, 3
      %p563 = pnand %p561, %p562
      %p564 = pneg %p563
      // Predicated region
      $region9: #{tpu_custom_call.1} parent=5 // pred_check
        _
      $region10: #{tpu_custom_call.1} parent=5 // pred_check_branch
        %566 = sbr.rel (%p563) target = $region12
      $region11: #{tpu_custom_call.1} parent=5 // pred_region
        %s567 = ssub.s32 %s39, 1
        // Predicated region
        $region13: #{tpu_custom_call.1} parent=11 // pred_check
          %p568 = pneg %p86
        $region14: #{tpu_custom_call.1} parent=11 // pred_check_branch
          %570 = sbr.rel (%p568) target = $region16
        $region15: #{tpu_custom_call.1} parent=11 // pred_region
          %s572 = ssub.s32 3072, 3072
          %573 = vsyncadd [#allocation8], %s572
          %s574 = sshll.u32 [#allocation7], 4
          %s575 = int_to_ptr.vmem [resolvable:$true] %s574
          %580 = dma.hbm_to_vmem [thread:$0]  %s1, 3072, %s575, [#allocation8], 128, 128, 8
        $region16: #{tpu_custom_call.1} parent=11 // pred_fallthru
          _
        // Predicated region
        $region17: #{tpu_custom_call.1} parent=11 // pred_check
          %p581 = pneg %p107
        $region18: #{tpu_custom_call.1} parent=11 // pred_check_branch
          %583 = sbr.rel (%p581) target = $region20
        $region19: #{tpu_custom_call.1} parent=11 // pred_region
          _
        $region20: #{tpu_custom_call.1} parent=11 // pred_fallthru
          _
        // Predicated region
        $region21: #{tpu_custom_call.1} parent=11 // pred_check
          %p584 = pneg %p128
        $region22: #{tpu_custom_call.1} parent=11 // pred_check_branch
          %586 = sbr.rel (%p584) target = $region24
        $region23: #{tpu_custom_call.1} parent=11 // pred_region
          _
        $region24: #{tpu_custom_call.1} parent=11 // pred_fallthru
          _
        // Predicated region
        $region25: #{tpu_custom_call.1} parent=11 // pred_check
          %p587 = pneg %p149
        $region26: #{tpu_custom_call.1} parent=11 // pred_check_branch
          %589 = sbr.rel (%p587) target = $region28
        $region27: #{tpu_custom_call.1} parent=11 // pred_region
          _
        $region28: #{tpu_custom_call.1} parent=11 // pred_fallthru
          _
        // Predicated region
        $region29: #{tpu_custom_call.1} parent=11 // pred_check
          %p590 = pneg %p170
        $region30: #{tpu_custom_call.1} parent=11 // pred_check_branch
          %592 = sbr.rel (%p590) target = $region32
        $region31: #{tpu_custom_call.1} parent=11 // pred_region
          %s594 = ssub.s32 6144, 6144
          %595 = vsyncadd [#allocation8], %s594
          %s596 = sshll.u32 [#allocation9], 4
          %s597 = int_to_ptr.vmem [resolvable:$true] %s596
          %602 = dma.hbm_to_vmem [thread:$0]  %s5, 6144, %s597, [#allocation8], 128, 128, 8
        $region32: #{tpu_custom_call.1} parent=11 // pred_fallthru
          _
        // Predicated region
        $region33: #{tpu_custom_call.1} parent=11 // pred_check
          %p603 = pneg %p191
        $region34: #{tpu_custom_call.1} parent=11 // pred_check_branch
          %605 = sbr.rel (%p603) target = $region36
        $region35: #{tpu_custom_call.1} parent=11 // pred_region
          _
        $region36: #{tpu_custom_call.1} parent=11 // pred_fallthru
          _
        // Predicated region
        $region37: #{tpu_custom_call.1} parent=11 // pred_check
          %p606 = pneg %p212
        $region38: #{tpu_custom_call.1} parent=11 // pred_check_branch
          %608 = sbr.rel (%p606) target = $region40
        $region39: #{tpu_custom_call.1} parent=11 // pred_region
          %s610 = ssub.s32 10240, 10240
          %611 = vsyncadd [#allocation11], %s610
          %s612 = sshll.u32 [#allocation10], 4
          %s613 = int_to_ptr.vmem [resolvable:$true] %s612
          %618 = dma.hbm_to_vmem [thread:$0]  %s7, 10240, %s613, [#allocation11], 128, 128, 8
        $region40: #{tpu_custom_call.1} parent=11 // pred_fallthru
          _
        // Predicated region
        $region41: #{tpu_custom_call.1} parent=11 // pred_check
          %p619 = pneg %p233
        $region42: #{tpu_custom_call.1} parent=11 // pred_check_branch
          %621 = sbr.rel (%p619) target = $region44
        $region43: #{tpu_custom_call.1} parent=11 // pred_region
          _
        $region44: #{tpu_custom_call.1} parent=11 // pred_fallthru
          _
        // Predicated region
        $region45: #{tpu_custom_call.1} parent=11 // pred_check
          %p622 = pneg %p254
        $region46: #{tpu_custom_call.1} parent=11 // pred_check_branch
          %624 = sbr.rel (%p622) target = $region48
        $region47: #{tpu_custom_call.1} parent=11 // pred_region
          %s626 = ssub.s32 10240, 10240
          %627 = vsyncadd [#allocation11], %s626
          %s628 = sshll.u32 [#allocation12], 4
          %s629 = int_to_ptr.vmem [resolvable:$true] %s628
          %634 = dma.hbm_to_vmem [thread:$0]  %s9, 10240, %s629, [#allocation11], 128, 128, 8
        $region48: #{tpu_custom_call.1} parent=11 // pred_fallthru
          _
        // Predicated region
        $region49: #{tpu_custom_call.1} parent=11 // pred_check
          %p635 = pneg %p275
        $region50: #{tpu_custom_call.1} parent=11 // pred_check_branch
          %637 = sbr.rel (%p635) target = $region52
        $region51: #{tpu_custom_call.1} parent=11 // pred_region
          _
        $region52: #{tpu_custom_call.1} parent=11 // pred_fallthru
          _
        // Predicated region
        $region53: #{tpu_custom_call.1} parent=11 // pred_check
          %p638 = pneg %p296
        $region54: #{tpu_custom_call.1} parent=11 // pred_check_branch
          %640 = sbr.rel (%p638) target = $region56
        $region55: #{tpu_custom_call.1} parent=11 // pred_region
          %s642 = ssub.s32 6144, 6144
          %643 = vsyncadd [#allocation14], %s642
          %s644 = sshll.u32 [#allocation13], 4
          %s645 = int_to_ptr.vmem [resolvable:$true] %s644
          %650 = dma.hbm_to_vmem [thread:$0]  %s11, 6144, %s645, [#allocation14], 128, 128, 8
        $region56: #{tpu_custom_call.1} parent=11 // pred_fallthru
          _
        // Predicated region
        $region57: #{tpu_custom_call.1} parent=11 // pred_check
          %p651 = pneg %p317
        $region58: #{tpu_custom_call.1} parent=11 // pred_check_branch
          %653 = sbr.rel (%p651) target = $region60
        $region59: #{tpu_custom_call.1} parent=11 // pred_region
          _
        $region60: #{tpu_custom_call.1} parent=11 // pred_fallthru
          _
        // Predicated region
        $region61: #{tpu_custom_call.1} parent=11 // pred_check
          %p654 = pneg %p338
        $region62: #{tpu_custom_call.1} parent=11 // pred_check_branch
          %656 = sbr.rel (%p654) target = $region64
        $region63: #{tpu_custom_call.1} parent=11 // pred_region
          %s658 = ssub.s32 10240, 10240
          %659 = vsyncadd [#allocation14], %s658
          %s660 = sshll.u32 [#allocation15], 4
          %s661 = int_to_ptr.vmem [resolvable:$true] %s660
          %666 = dma.hbm_to_vmem [thread:$0]  %s13, 10240, %s661, [#allocation14], 128, 128, 8
        $region64: #{tpu_custom_call.1} parent=11 // pred_fallthru
          _
        // Predicated region
        $region65: #{tpu_custom_call.1} parent=11 // pred_check
          %p667 = pneg %p359
        $region66: #{tpu_custom_call.1} parent=11 // pred_check_branch
          %669 = sbr.rel (%p667) target = $region68
        $region67: #{tpu_custom_call.1} parent=11 // pred_region
          _
        $region68: #{tpu_custom_call.1} parent=11 // pred_fallthru
          _
        // Predicated region
        $region69: #{tpu_custom_call.1} parent=11 // pred_check
          %p670 = pneg %p380
        $region70: #{tpu_custom_call.1} parent=11 // pred_check_branch
          %672 = sbr.rel (%p670) target = $region72
        $region71: #{tpu_custom_call.1} parent=11 // pred_region
          _
        $region72: #{tpu_custom_call.1} parent=11 // pred_fallthru
          _
        // Predicated region
        $region73: #{tpu_custom_call.1} parent=11 // pred_check
          %p673 = pneg %p401
        $region74: #{tpu_custom_call.1} parent=11 // pred_check_branch
          %675 = sbr.rel (%p673) target = $region76
        $region75: #{tpu_custom_call.1} parent=11 // pred_region
          _
        $region76: #{tpu_custom_call.1} parent=11 // pred_fallthru
          _
        // Predicated region
        $region77: #{tpu_custom_call.1} parent=11 // pred_check
          %p676 = pneg %p422
        $region78: #{tpu_custom_call.1} parent=11 // pred_check_branch
          %678 = sbr.rel (%p676) target = $region80
        $region79: #{tpu_custom_call.1} parent=11 // pred_region
          _
        $region80: #{tpu_custom_call.1} parent=11 // pred_fallthru
          _
        // Predicated region
        $region81: #{tpu_custom_call.1} parent=11 // pred_check
          %p679 = pneg %p443
        $region82: #{tpu_custom_call.1} parent=11 // pred_check_branch
          %681 = sbr.rel (%p679) target = $region84
        $region83: #{tpu_custom_call.1} parent=11 // pred_region
          %s683 = ssub.s32 2048, 2048
          %684 = vsyncadd [#allocation17], %s683
          %s685 = sshll.u32 [#allocation16], 4
          %s686 = int_to_ptr.vmem [resolvable:$true] %s685
          %691 = dma.hbm_to_vmem [thread:$0]  %s18, 2048, %s686, [#allocation17], 128, 128, 8
        $region84: #{tpu_custom_call.1} parent=11 // pred_fallthru
          _
        // Predicated region
        $region85: #{tpu_custom_call.1} parent=11 // pred_check
          %p692 = pneg %p464
        $region86: #{tpu_custom_call.1} parent=11 // pred_check_branch
          %694 = sbr.rel (%p692) target = $region88
        $region87: #{tpu_custom_call.1} parent=11 // pred_region
          _
        $region88: #{tpu_custom_call.1} parent=11 // pred_fallthru
          _
        // Predicated region
        $region89: #{tpu_custom_call.1} parent=11 // pred_check
          %p695 = pneg %p485
        $region90: #{tpu_custom_call.1} parent=11 // pred_check_branch
          %697 = sbr.rel (%p695) target = $region92
        $region91: #{tpu_custom_call.1} parent=11 // pred_region
          _
        $region92: #{tpu_custom_call.1} parent=11 // pred_fallthru
          _
        // Predicated region
        $region93: #{tpu_custom_call.1} parent=11 // pred_check
          %p698 = pneg %p506
        $region94: #{tpu_custom_call.1} parent=11 // pred_check_branch
          %700 = sbr.rel (%p698) target = $region96
        $region95: #{tpu_custom_call.1} parent=11 // pred_region
          _
        $region96: #{tpu_custom_call.1} parent=11 // pred_fallthru
          _
        // Predicated region
        $region97: #{tpu_custom_call.1} parent=11 // pred_check
          %p701 = pneg %p527
        $region98: #{tpu_custom_call.1} parent=11 // pred_check_branch
          %703 = sbr.rel (%p701) target = $region100
        $region99: #{tpu_custom_call.1} parent=11 // pred_region
          _
        $region100: #{tpu_custom_call.1} parent=11 // pred_fallthru
          _
      $region12: #{tpu_custom_call.1} parent=5 // pred_fallthru
        _
      %p704 = scmp.lt.s32.totalorder %s39, 2
      // Predicated region
      $region101: #{tpu_custom_call.1} parent=5 // pred_check
        %p705 = pneg %p704
      $region102: #{tpu_custom_call.1} parent=5 // pred_check_branch
        %707 = sbr.rel (%p705) target = $region104
      $region103: #{tpu_custom_call.1} parent=5 // pred_region
        // Predicated region
        $region105: #{tpu_custom_call.1} parent=103 // pred_check
          %p708 = pneg %p59
        $region106: #{tpu_custom_call.1} parent=103 // pred_check_branch
          %710 = sbr.rel (%p708) target = $region108
        $region107: #{tpu_custom_call.1} parent=103 // pred_region
          %s711 = sand.u32 %s49, 1
          %s712 = scalar_lea.sflag [#allocation5], %s711
          %s713 = sand.u32 %s49, 1
          %s714 = smul.addr %s713, 16
          %s715 = scalar_lea.vmem [#allocation4], %s714
          %s717 = ssub.s32 256, 256
          %718 = vsyncadd %s712, %s717
          %s719 = smul.addr %s39, 2
          %s720 = smul.addr %s719, 128
          %s721 = scalar_lea.hbm %s0, %s720
          %s722 = sshll.u32 %s715, 4
          %s723 = int_to_ptr.vmem [resolvable:$true] %s722
          %728 = dma.hbm_to_vmem [thread:$0]  %s721, 256, %s723, %s712, 128, 128, 8
        $region108: #{tpu_custom_call.1} parent=103 // pred_fallthru
          _
      $region104: #{tpu_custom_call.1} parent=5 // pred_fallthru
        _
      %p729 = scmp.le.s32.totalorder 1, %s39
      %p730 = scmp.lt.s32.totalorder %s39, 3
      %p731 = pnand %p729, %p730
      %p732 = pneg %p731
      // Predicated region
      $region109: #{tpu_custom_call.1} parent=5 // pred_check
        _
      $region110: #{tpu_custom_call.1} parent=5 // pred_check_branch
        %734 = sbr.rel (%p731) target = $region112
      $region111: #{tpu_custom_call.1} parent=5 // pred_region
        %s735 = ssub.s32 %s39, 1
        %s736 = sand.u32 %s52, 1
        %s737 = scalar_lea.sflag [#allocation5], %s736
        %s738 = sand.u32 %s52, 1
        %s739 = smul.addr %s738, 16
        %s740 = scalar_lea.vmem [#allocation4], %s739
        // Predicated region
        $region113: #{tpu_custom_call.1} parent=111 // pred_check
          %p741 = pneg %p65
        $region114: #{tpu_custom_call.1} parent=111 // pred_check_branch
          %743 = sbr.rel (%p741) target = $region116
        $region115: #{tpu_custom_call.1} parent=111 // pred_region
          %744 = dma.done %s737, 256
        $region116: #{tpu_custom_call.1} parent=111 // pred_fallthru
          _
        // Predicated region
        $region117: #{tpu_custom_call.1} parent=111 // pred_check
          %p745 = pneg %p86
        $region118: #{tpu_custom_call.1} parent=111 // pred_check_branch
          %747 = sbr.rel (%p745) target = $region120
        $region119: #{tpu_custom_call.1} parent=111 // pred_region
          %748 = dma.done [#allocation8], 3072
        $region120: #{tpu_custom_call.1} parent=111 // pred_fallthru
          _
        // Predicated region
        $region121: #{tpu_custom_call.1} parent=111 // pred_check
          %p749 = pneg %p170
        $region122: #{tpu_custom_call.1} parent=111 // pred_check_branch
          %751 = sbr.rel (%p749) target = $region124
        $region123: #{tpu_custom_call.1} parent=111 // pred_region
          %752 = dma.done [#allocation8], 6144
        $region124: #{tpu_custom_call.1} parent=111 // pred_fallthru
          _
        // Predicated region
        $region125: #{tpu_custom_call.1} parent=111 // pred_check
          %p753 = pneg %p212
        $region126: #{tpu_custom_call.1} parent=111 // pred_check_branch
          %755 = sbr.rel (%p753) target = $region128
        $region127: #{tpu_custom_call.1} parent=111 // pred_region
          %756 = dma.done [#allocation11], 10240
        $region128: #{tpu_custom_call.1} parent=111 // pred_fallthru
          _
        // Predicated region
        $region129: #{tpu_custom_call.1} parent=111 // pred_check
          %p757 = pneg %p254
        $region130: #{tpu_custom_call.1} parent=111 // pred_check_branch
          %759 = sbr.rel (%p757) target = $region132
        $region131: #{tpu_custom_call.1} parent=111 // pred_region
          %760 = dma.done [#allocation11], 10240
        $region132: #{tpu_custom_call.1} parent=111 // pred_fallthru
          _
        // Predicated region
        $region133: #{tpu_custom_call.1} parent=111 // pred_check
          %p761 = pneg %p296
        $region134: #{tpu_custom_call.1} parent=111 // pred_check_branch
          %763 = sbr.rel (%p761) target = $region136
        $region135: #{tpu_custom_call.1} parent=111 // pred_region
          %764 = dma.done [#allocation14], 6144
        $region136: #{tpu_custom_call.1} parent=111 // pred_fallthru
          _
        // Predicated region
        $region137: #{tpu_custom_call.1} parent=111 // pred_check
          %p765 = pneg %p338
        $region138: #{tpu_custom_call.1} parent=111 // pred_check_branch
          %767 = sbr.rel (%p765) target = $region140
        $region139: #{tpu_custom_call.1} parent=111 // pred_region
          %768 = dma.done [#allocation14], 10240
        $region140: #{tpu_custom_call.1} parent=111 // pred_fallthru
          _
        // Predicated region
        $region141: #{tpu_custom_call.1} parent=111 // pred_check
          %p769 = pneg %p443
        $region142: #{tpu_custom_call.1} parent=111 // pred_check_branch
          %771 = sbr.rel (%p769) target = $region144
        $region143: #{tpu_custom_call.1} parent=111 // pred_region
          %772 = dma.done [#allocation17], 2048
        $region144: #{tpu_custom_call.1} parent=111 // pred_fallthru
          _
        %s773 = sand.u32 %s52, 1
        %s774 = scalar_lea.sflag [#allocation5], %s773
        %s775 = sand.u32 %s52, 1
        %s776 = smul.addr %s775, 16
        %s777 = scalar_lea.vmem [#allocation4], %s776
        %p778 = pneg %p65
        %p779 = pneg %p62
        %p780 = pneg %p86
        %p781 = pneg %p83
        %p782 = pneg %p107
        %p783 = pneg %p104
        %p784 = pneg %p128
        %p785 = pneg %p125
        %p786 = pneg %p149
        %p787 = pneg %p146
        %p788 = pneg %p170
        %p789 = pneg %p167
        %p790 = pneg %p191
        %p791 = pneg %p188
        %p792 = pneg %p212
        %p793 = pneg %p209
        %p794 = pneg %p233
        %p795 = pneg %p230
        %p796 = pneg %p254
        %p797 = pneg %p251
        %p798 = pneg %p275
        %p799 = pneg %p272
        %p800 = pneg %p296
        %p801 = pneg %p293
        %p802 = pneg %p317
        %p803 = pneg %p314
        %p804 = pneg %p338
        %p805 = pneg %p335
        %p806 = pneg %p359
        %p807 = pneg %p356
        %p808 = pneg %p380
        %p809 = pneg %p377
        %p810 = pneg %p401
        %p811 = pneg %p398
        %p812 = pneg %p422
        %p813 = pneg %p419
        %p814 = pneg %p443
        %p815 = pneg %p440
        %p816 = pneg %p464
        %p817 = pneg %p461
        %p818 = pneg %p485
        %p819 = pneg %p482
        %p820 = pneg %p506
        %p821 = pneg %p503
        %p822 = pneg %p527
        %p823 = pneg %p524
        %p824 = pneg %p553
        %p825 = pneg %p550
        %s826 = sand.u32 %s540, 1
        %s827 = scalar_lea.sflag [#allocation6], %s826
        %s828 = sand.u32 %s540, 1
        %s829 = scalar_lea.vmem [#allocation18], %s828
        %830 = vst [vmem:[#allocation2] sm:$0xff] 0.0
        %831 = vst [vmem:[#allocation2 + $0x18] sm:$0xff] 0.0
        %vm832 = vcmask 523264
        %833 = vst.msk [vmem:[#allocation3] sm:$0xff] %vm832, 0.0
        %834 = vst.msk [vmem:[#allocation3 + $0x18] sm:$0xff] %vm832, 0.0
        %v835 = vld [vmem:[%s740] sm:$0xff]
        %v836 = vld [vmem:[%s740 + $0x8] sm:$0xff]
        %837 = vst.msk [vmem:[#allocation3 + $0x8] sm:$0xff] %vm832, %v835
        %838 = vst.msk [vmem:[#allocation3 + $0x10] sm:$0xff] %vm832, %v836
        %v839 = vld [vmem:[#allocation3 + $0x7] sm:$0xff]
        %v840 = vld [vmem:[#allocation3 + $0xf] sm:$0xff]
        %v841 = vld [vmem:[#allocation7] sm:$0xff]
        %v842 = vld [vmem:[#allocation7 + $0x8] sm:$0xff]
        %v843 = vld [vmem:[#allocation7 + $0x10] sm:$0xff]
        %v844 = vld [vmem:[#allocation7 + $0x18] sm:$0xff]
        %v845 = vld [vmem:[#allocation7 + $0x20] sm:$0xff]
        %v846 = vld [vmem:[#allocation7 + $0x28] sm:$0xff]
        %v847 = vld [vmem:[#allocation7 + $0x30] sm:$0xff]
        %v848 = vld [vmem:[#allocation7 + $0x38] sm:$0xff]
        %v849 = vld [vmem:[#allocation3 + $0x8] sm:$0xff]
        %v850 = vld [vmem:[#allocation3 + $0x10] sm:$0xff]
        %s851 = scalar_lea.vmem [#allocation7], 64
        %v852 = vld [vmem:[%s851] sm:$0xff]
        %v853 = vld [vmem:[%s851 + $0x8] sm:$0xff]
        %v854 = vld [vmem:[%s851 + $0x10] sm:$0xff]
        %v855 = vld [vmem:[%s851 + $0x18] sm:$0xff]
        %v856 = vld [vmem:[%s851 + $0x20] sm:$0xff]
        %v857 = vld [vmem:[%s851 + $0x28] sm:$0xff]
        %v858 = vld [vmem:[%s851 + $0x30] sm:$0xff]
        %v859 = vld [vmem:[%s851 + $0x38] sm:$0xff]
        %v861 = vsel %vm832, %v849, 0
        %v864 = vsel %vm832, %v850, 0
        %866 = vmatprep.subr.mxu0 0.0
        %867 = vmatpush1.msra.mxu0 0.0
        %868 = vmatprep.subr.mxu0 0.0
        %869 = vmatpush1.msra.mxu0 0.0
        %870 = vmatprep.subr.mxu0 0.0
        %871 = vmatpush1.msra.mxu0 0.0
        %872 = vmatprep.subr.mxu0 0.0
        %873 = vmatpush1.msra.mxu0 0.0
        %874 = vmatprep.subr.mxu0 0.0
        %875 = vmatpush1.msra.mxu0 0.0
        %876 = vmatprep.subr.mxu0 0.0
        %877 = vmatpush1.msra.mxu0 0.0
        %878 = vmatprep.subr.mxu0 0.0
        %879 = vmatpush1.msra.mxu0 0.0
        %880 = vmatprep.subr.mxu0 0.0
        %881 = vmatpush1.msra.mxu0 0.0
        %882 = vmatprep.subr.mxu0 0.0
        %883 = vmatpush1.msra.mxu0 %v859
        %884 = vmatprep.subr.mxu0 0.0
        %885 = vmatpush1.msra.mxu0 %v858
        %886 = vmatprep.subr.mxu0 0.0
        %887 = vmatpush1.msra.mxu0 %v857
        %888 = vmatprep.subr.mxu0 0.0
        %889 = vmatpush1.msra.mxu0 %v856
        %890 = vmatprep.subr.mxu0 0.0
        %891 = vmatpush1.msra.mxu0 %v855
        %892 = vmatprep.subr.mxu0 0.0
        %893 = vmatpush1.msra.mxu0 %v854
        %894 = vmatprep.subr.mxu0 0.0
        %895 = vmatpush1.msra.mxu0 %v853
        %896 = vmatprep.subr.mxu0 0.0
        %897 = vmatpush1.msra.mxu0 %v852
        %898 = vmatprep.subr.mxu0 0.0
        %899 = vmatpush2.msra.mxu0 0.0
        %900 = vmatprep.subr.mxu0 0.0
        %901 = vmatpush2.msra.mxu0 0.0
        %902 = vmatprep.subr.mxu0 0.0
        %903 = vmatpush2.msra.mxu0 0.0
        %904 = vmatprep.subr.mxu0 0.0
        %905 = vmatpush2.msra.mxu0 0.0
        %906 = vmatprep.subr.mxu0 0.0
        %907 = vmatpush2.msra.mxu0 0.0
        %908 = vmatprep.subr.mxu0 0.0
        %909 = vmatpush2.msra.mxu0 0.0
        %910 = vmatprep.subr.mxu0 0.0
        %911 = vmatpush2.msra.mxu0 0.0
        %912 = vmatprep.subr.mxu0 0.0
        %913 = vmatpush2.msra.mxu0 0.0
        %914 = vmatprep.subr.mxu0 0.0
        %915 = vmatpush2.msra.mxu0 0.0
        %916 = vmatprep.subr.mxu0 0.0
        %917 = vmatpush2.msra.mxu0 0.0
        %918 = vmatprep.subr.mxu0 0.0
        %919 = vmatpush2.msra.mxu0 0.0
        %920 = vmatprep.subr.mxu0 0.0
        %921 = vmatpush2.msra.mxu0 0.0
        %922 = vmatprep.subr.mxu0 0.0
        %923 = vmatpush2.msra.mxu0 0.0
        %924 = vmatprep.subr.mxu0 0.0
        %925 = vmatpush2.msra.mxu0 0.0
        %926 = vmatprep.subr.mxu0 0.0
        %927 = vmatpush2.msra.mxu0 0.0
        %928 = vmatprep.subr.mxu0 0.0
        %929 = vmatpush2.msra.mxu0 0.0
        %930 = vmatprep.mubr.f32.mxu0 0.0
        %931 = vmatmul.mubr.f32.gmra.mxu0 %v861
        %v932 = vpop.f32.mrf.mxu0
        %v933 = vadd.f32 0.0, %v932
        %v934 = vpop.f32.mrf.mxu0
        %935 = vmatprep.mubr.f32.mxu0 0.0
        %936 = vmatmul.mubr.f32.gmra.mxu0 %v864
        %v937 = vpop.f32.mrf.mxu0
        %v938 = vadd.f32 0.0, %v937
        %v939 = vpop.f32.mrf.mxu0
        %940 = vdwg.mxu0
        %v942 = vsel %vm832, %v839, 0
        %v945 = vsel %vm832, %v840, 0
        %947 = vmatprep.subr.mxu0 0.0
        %948 = vmatpush1.msra.mxu0 0.0
        %949 = vmatprep.subr.mxu0 0.0
        %950 = vmatpush1.msra.mxu0 0.0
        %951 = vmatprep.subr.mxu0 0.0
        %952 = vmatpush1.msra.mxu0 0.0
        %953 = vmatprep.subr.mxu0 0.0
        %954 = vmatpush1.msra.mxu0 0.0
        %955 = vmatprep.subr.mxu0 0.0
        %956 = vmatpush1.msra.mxu0 0.0
        %957 = vmatprep.subr.mxu0 0.0
        %958 = vmatpush1.msra.mxu0 0.0
        %959 = vmatprep.subr.mxu0 0.0
        %960 = vmatpush1.msra.mxu0 0.0
        %961 = vmatprep.subr.mxu0 0.0
        %962 = vmatpush1.msra.mxu0 0.0
        %963 = vmatprep.subr.mxu0 0.0
        %964 = vmatpush1.msra.mxu0 %v848
        %965 = vmatprep.subr.mxu0 0.0
        %966 = vmatpush1.msra.mxu0 %v847
        %967 = vmatprep.subr.mxu0 0.0
        %968 = vmatpush1.msra.mxu0 %v846
        %969 = vmatprep.subr.mxu0 0.0
        %970 = vmatpush1.msra.mxu0 %v845
        %971 = vmatprep.subr.mxu0 0.0
        %972 = vmatpush1.msra.mxu0 %v844
        %973 = vmatprep.subr.mxu0 0.0
        %974 = vmatpush1.msra.mxu0 %v843
        %975 = vmatprep.subr.mxu0 0.0
        %976 = vmatpush1.msra.mxu0 %v842
        %977 = vmatprep.subr.mxu0 0.0
        %978 = vmatpush1.msra.mxu0 %v841
        %979 = vmatprep.subr.mxu0 0.0
        %980 = vmatpush2.msra.mxu0 0.0
        %981 = vmatprep.subr.mxu0 0.0
        %982 = vmatpush2.msra.mxu0 0.0
        %983 = vmatprep.subr.mxu0 0.0
        %984 = vmatpush2.msra.mxu0 0.0
        %985 = vmatprep.subr.mxu0 0.0
        %986 = vmatpush2.msra.mxu0 0.0
        %987 = vmatprep.subr.mxu0 0.0
        %988 = vmatpush2.msra.mxu0 0.0
        %989 = vmatprep.subr.mxu0 0.0
        %990 = vmatpush2.msra.mxu0 0.0
        %991 = vmatprep.subr.mxu0 0.0
        %992 = vmatpush2.msra.mxu0 0.0
        %993 = vmatprep.subr.mxu0 0.0
        %994 = vmatpush2.msra.mxu0 0.0
        %995 = vmatprep.subr.mxu0 0.0
        %996 = vmatpush2.msra.mxu0 0.0
        %997 = vmatprep.subr.mxu0 0.0
        %998 = vmatpush2.msra.mxu0 0.0
        %999 = vmatprep.subr.mxu0 0.0
        %1000 = vmatpush2.msra.mxu0 0.0
        %1001 = vmatprep.subr.mxu0 0.0
        %1002 = vmatpush2.msra.mxu0 0.0
        %1003 = vmatprep.subr.mxu0 0.0
        %1004 = vmatpush2.msra.mxu0 0.0
        %1005 = vmatprep.subr.mxu0 0.0
        %1006 = vmatpush2.msra.mxu0 0.0
        %1007 = vmatprep.subr.mxu0 0.0
        %1008 = vmatpush2.msra.mxu0 0.0
        %1009 = vmatprep.subr.mxu0 0.0
        %1010 = vmatpush2.msra.mxu0 0.0
        %1011 = vmatprep.mubr.f32.mxu0 0.0
        %1012 = vmatmul.mubr.f32.gmra.mxu0 %v942
        %v1013 = vpop.f32.mrf.mxu0
        %v1014 = vadd.f32 %v933, %v1013
        %v1015 = vpop.f32.mrf.mxu0
        %1016 = vmatprep.mubr.f32.mxu0 0.0
        %1017 = vmatmul.mubr.f32.gmra.mxu0 %v945
        %v1018 = vpop.f32.mrf.mxu0
        %v1019 = vadd.f32 %v938, %v1018
        %v1020 = vpop.f32.mrf.mxu0
        %1021 = vdwg.mxu0
        %v1022 = vld [vmem:[#allocation3 + $0x9] sm:$0xff]
        %v1023 = vld [vmem:[#allocation3 + $0x11] sm:$0xff]
        %s1024 = scalar_lea.vmem [#allocation7], 128
        %v1025 = vld [vmem:[%s1024] sm:$0xff]
        %v1026 = vld [vmem:[%s1024 + $0x8] sm:$0xff]
        %v1027 = vld [vmem:[%s1024 + $0x10] sm:$0xff]
        %v1028 = vld [vmem:[%s1024 + $0x18] sm:$0xff]
        %v1029 = vld [vmem:[%s1024 + $0x20] sm:$0xff]
        %v1030 = vld [vmem:[%s1024 + $0x28] sm:$0xff]
        %v1031 = vld [vmem:[%s1024 + $0x30] sm:$0xff]
        %v1032 = vld [vmem:[%s1024 + $0x38] sm:$0xff]
        %v1034 = vsel %vm832, %v1022, 0
        %v1037 = vsel %vm832, %v1023, 0
        %1039 = vmatprep.subr.mxu0 0.0
        %1040 = vmatpush1.msra.mxu0 0.0
        %1041 = vmatprep.subr.mxu0 0.0
        %1042 = vmatpush1.msra.mxu0 0.0
        %1043 = vmatprep.subr.mxu0 0.0
        %1044 = vmatpush1.msra.mxu0 0.0
        %1045 = vmatprep.subr.mxu0 0.0
        %1046 = vmatpush1.msra.mxu0 0.0
        %1047 = vmatprep.subr.mxu0 0.0
        %1048 = vmatpush1.msra.mxu0 0.0
        %1049 = vmatprep.subr.mxu0 0.0
        %1050 = vmatpush1.msra.mxu0 0.0
        %1051 = vmatprep.subr.mxu0 0.0
        %1052 = vmatpush1.msra.mxu0 0.0
        %1053 = vmatprep.subr.mxu0 0.0
        %1054 = vmatpush1.msra.mxu0 0.0
        %1055 = vmatprep.subr.mxu0 0.0
        %1056 = vmatpush1.msra.mxu0 %v1032
        %1057 = vmatprep.subr.mxu0 0.0
        %1058 = vmatpush1.msra.mxu0 %v1031
        %1059 = vmatprep.subr.mxu0 0.0
        %1060 = vmatpush1.msra.mxu0 %v1030
        %1061 = vmatprep.subr.mxu0 0.0
        %1062 = vmatpush1.msra.mxu0 %v1029
        %1063 = vmatprep.subr.mxu0 0.0
        %1064 = vmatpush1.msra.mxu0 %v1028
        %1065 = vmatprep.subr.mxu0 0.0
        %1066 = vmatpush1.msra.mxu0 %v1027
        %1067 = vmatprep.subr.mxu0 0.0
        %1068 = vmatpush1.msra.mxu0 %v1026
        %1069 = vmatprep.subr.mxu0 0.0
        %1070 = vmatpush1.msra.mxu0 %v1025
        %1071 = vmatprep.subr.mxu0 0.0
        %1072 = vmatpush2.msra.mxu0 0.0
        %1073 = vmatprep.subr.mxu0 0.0
        %1074 = vmatpush2.msra.mxu0 0.0
        %1075 = vmatprep.subr.mxu0 0.0
        %1076 = vmatpush2.msra.mxu0 0.0
        %1077 = vmatprep.subr.mxu0 0.0
        %1078 = vmatpush2.msra.mxu0 0.0
        %1079 = vmatprep.subr.mxu0 0.0
        %1080 = vmatpush2.msra.mxu0 0.0
        %1081 = vmatprep.subr.mxu0 0.0
        %1082 = vmatpush2.msra.mxu0 0.0
        %1083 = vmatprep.subr.mxu0 0.0
        %1084 = vmatpush2.msra.mxu0 0.0
        %1085 = vmatprep.subr.mxu0 0.0
        %1086 = vmatpush2.msra.mxu0 0.0
        %1087 = vmatprep.subr.mxu0 0.0
        %1088 = vmatpush2.msra.mxu0 0.0
        %1089 = vmatprep.subr.mxu0 0.0
        %1090 = vmatpush2.msra.mxu0 0.0
        %1091 = vmatprep.subr.mxu0 0.0
        %1092 = vmatpush2.msra.mxu0 0.0
        %1093 = vmatprep.subr.mxu0 0.0
        %1094 = vmatpush2.msra.mxu0 0.0
        %1095 = vmatprep.subr.mxu0 0.0
        %1096 = vmatpush2.msra.mxu0 0.0
        %1097 = vmatprep.subr.mxu0 0.0
        %1098 = vmatpush2.msra.mxu0 0.0
        %1099 = vmatprep.subr.mxu0 0.0
        %1100 = vmatpush2.msra.mxu0 0.0
        %1101 = vmatprep.subr.mxu0 0.0
        %1102 = vmatpush2.msra.mxu0 0.0
        %1103 = vmatprep.mubr.f32.mxu0 0.0
        %1104 = vmatmul.mubr.f32.gmra.mxu0 %v1034
        %v1105 = vpop.f32.mrf.mxu0
        %v1106 = vadd.f32 0.0, %v1105
        %v1107 = vpop.f32.mrf.mxu0
        %1108 = vmatprep.mubr.f32.mxu0 0.0
        %1109 = vmatmul.mubr.f32.gmra.mxu0 %v1037
        %v1110 = vpop.f32.mrf.mxu0
        %v1111 = vadd.f32 0.0, %v1110
        %v1112 = vpop.f32.mrf.mxu0
        %1113 = vdwg.mxu0
        %v1114 = vadd.f32 %v1014, %v1106
        %v1115 = vadd.f32 %v1019, %v1111
        %v1116 = vld [vmem:[%s2] sm:$0x1]
        %v1118 = vlaneseq
        %v1119 = vshrl.u32 %v1118, 7
        %v1120 = vsub.s32 0, %v1119
        %v1121 = vrot.slane %v1116, %v1120
        %v1123 = vadd.f32 %v1114, %v1121
        %v1124 = vadd.f32 %v1115, %v1121
        %v1125 = vmax.f32 %v1123, 0.0
        %v1126 = vmax.f32 %v1124, 0.0
        %1127 = vst [vmem:[#allocation2 + $0x8] sm:$0xff] %v1125
        %1128 = vst [vmem:[#allocation2 + $0x10] sm:$0xff] %v1126
        %v1129 = vld [vmem:[#allocation2 + $0x7] sm:$0xff]
        %v1130 = vld [vmem:[#allocation2 + $0xf] sm:$0xff]
        %v1131 = vld [vmem:[%s3] sm:$0xff]
        %v1132 = vld [vmem:[%s3 + $0x8] sm:$0xff]
        %v1133 = vld [vmem:[%s3 + $0x10] sm:$0xff]
        %v1134 = vld [vmem:[%s3 + $0x18] sm:$0xff]
        %v1135 = vld [vmem:[%s3 + $0x20] sm:$0xff]
        %v1136 = vld [vmem:[%s3 + $0x28] sm:$0xff]
        %v1137 = vld [vmem:[%s3 + $0x30] sm:$0xff]
        %v1138 = vld [vmem:[%s3 + $0x38] sm:$0xff]
        %v1139 = vld [vmem:[%s3 + $0x40] sm:$0xff]
        %v1140 = vld [vmem:[%s3 + $0x48] sm:$0xff]
        %v1141 = vld [vmem:[%s3 + $0x50] sm:$0xff]
        %v1142 = vld [vmem:[%s3 + $0x58] sm:$0xff]
        %v1143 = vld [vmem:[%s3 + $0x60] sm:$0xff]
        %v1144 = vld [vmem:[%s3 + $0x68] sm:$0xff]
        %v1145 = vld [vmem:[%s3 + $0x70] sm:$0xff]
        %v1146 = vld [vmem:[%s3 + $0x78] sm:$0xff]
        %v1147 = vld [vmem:[#allocation2 + $0x8] sm:$0xff]
        %v1148 = vld [vmem:[#allocation2 + $0x10] sm:$0xff]
        %s1149 = scalar_lea.vmem %s3, 128
        %v1150 = vld [vmem:[%s1149] sm:$0xff]
        %v1151 = vld [vmem:[%s1149 + $0x8] sm:$0xff]
        %v1152 = vld [vmem:[%s1149 + $0x10] sm:$0xff]
        %v1153 = vld [vmem:[%s1149 + $0x18] sm:$0xff]
        %v1154 = vld [vmem:[%s1149 + $0x20] sm:$0xff]
        %v1155 = vld [vmem:[%s1149 + $0x28] sm:$0xff]
        %v1156 = vld [vmem:[%s1149 + $0x30] sm:$0xff]
        %v1157 = vld [vmem:[%s1149 + $0x38] sm:$0xff]
        %v1158 = vld [vmem:[%s1149 + $0x40] sm:$0xff]
        %v1159 = vld [vmem:[%s1149 + $0x48] sm:$0xff]
        %v1160 = vld [vmem:[%s1149 + $0x50] sm:$0xff]
        %v1161 = vld [vmem:[%s1149 + $0x58] sm:$0xff]
        %v1162 = vld [vmem:[%s1149 + $0x60] sm:$0xff]
        %v1163 = vld [vmem:[%s1149 + $0x68] sm:$0xff]
        %v1164 = vld [vmem:[%s1149 + $0x70] sm:$0xff]
        %v1165 = vld [vmem:[%s1149 + $0x78] sm:$0xff]
        %1166 = vmatprep.subr.mxu0 0.0
        %1167 = vmatpush1.msra.mxu0 %v1165
        %1168 = vmatprep.subr.mxu0 0.0
        %1169 = vmatpush1.msra.mxu0 %v1164
        %1170 = vmatprep.subr.mxu0 0.0
        %1171 = vmatpush1.msra.mxu0 %v1163
        %1172 = vmatprep.subr.mxu0 0.0
        %1173 = vmatpush1.msra.mxu0 %v1162
        %1174 = vmatprep.subr.mxu0 0.0
        %1175 = vmatpush1.msra.mxu0 %v1161
        %1176 = vmatprep.subr.mxu0 0.0
        %1177 = vmatpush1.msra.mxu0 %v1160
        %1178 = vmatprep.subr.mxu0 0.0
        %1179 = vmatpush1.msra.mxu0 %v1159
        %1180 = vmatprep.subr.mxu0 0.0
        %1181 = vmatpush1.msra.mxu0 %v1158
        %1182 = vmatprep.subr.mxu0 0.0
        %1183 = vmatpush1.msra.mxu0 %v1157
        %1184 = vmatprep.subr.mxu0 0.0
        %1185 = vmatpush1.msra.mxu0 %v1156
        %1186 = vmatprep.subr.mxu0 0.0
        %1187 = vmatpush1.msra.mxu0 %v1155
        %1188 = vmatprep.subr.mxu0 0.0
        %1189 = vmatpush1.msra.mxu0 %v1154
        %1190 = vmatprep.subr.mxu0 0.0
        %1191 = vmatpush1.msra.mxu0 %v1153
        %1192 = vmatprep.subr.mxu0 0.0
        %1193 = vmatpush1.msra.mxu0 %v1152
        %1194 = vmatprep.subr.mxu0 0.0
        %1195 = vmatpush1.msra.mxu0 %v1151
        %1196 = vmatprep.subr.mxu0 0.0
        %1197 = vmatpush1.msra.mxu0 %v1150
        %1198 = vmatprep.subr.mxu0 0.0
        %1199 = vmatpush2.msra.mxu0 0.0
        %1200 = vmatprep.subr.mxu0 0.0
        %1201 = vmatpush2.msra.mxu0 0.0
        %1202 = vmatprep.subr.mxu0 0.0
        %1203 = vmatpush2.msra.mxu0 0.0
        %1204 = vmatprep.subr.mxu0 0.0
        %1205 = vmatpush2.msra.mxu0 0.0
        %1206 = vmatprep.subr.mxu0 0.0
        %1207 = vmatpush2.msra.mxu0 0.0
        %1208 = vmatprep.subr.mxu0 0.0
        %1209 = vmatpush2.msra.mxu0 0.0
        %1210 = vmatprep.subr.mxu0 0.0
        %1211 = vmatpush2.msra.mxu0 0.0
        %1212 = vmatprep.subr.mxu0 0.0
        %1213 = vmatpush2.msra.mxu0 0.0
        %1214 = vmatprep.subr.mxu0 0.0
        %1215 = vmatpush2.msra.mxu0 0.0
        %1216 = vmatprep.subr.mxu0 0.0
        %1217 = vmatpush2.msra.mxu0 0.0
        %1218 = vmatprep.subr.mxu0 0.0
        %1219 = vmatpush2.msra.mxu0 0.0
        %1220 = vmatprep.subr.mxu0 0.0
        %1221 = vmatpush2.msra.mxu0 0.0
        %1222 = vmatprep.subr.mxu0 0.0
        %1223 = vmatpush2.msra.mxu0 0.0
        %1224 = vmatprep.subr.mxu0 0.0
        %1225 = vmatpush2.msra.mxu0 0.0
        %1226 = vmatprep.subr.mxu0 0.0
        %1227 = vmatpush2.msra.mxu0 0.0
        %1228 = vmatprep.subr.mxu0 0.0
        %1229 = vmatpush2.msra.mxu0 0.0
        %1230 = vmatprep.mubr.f32.mxu0 0.0
        %1231 = vmatmul.mubr.f32.gmra.mxu0 %v1147
        %v1232 = vpop.f32.mrf.mxu0
        %v1233 = vadd.f32 0.0, %v1232
        %v1234 = vpop.f32.mrf.mxu0
        %1235 = vmatprep.mubr.f32.mxu0 0.0
        %1236 = vmatmul.mubr.f32.gmra.mxu0 %v1148
        %v1237 = vpop.f32.mrf.mxu0
        %v1238 = vadd.f32 0.0, %v1237
        %v1239 = vpop.f32.mrf.mxu0
        %1240 = vdwg.mxu0
        %1241 = vmatprep.subr.mxu0 0.0
        %1242 = vmatpush1.msra.mxu0 %v1146
        %1243 = vmatprep.subr.mxu0 0.0
        %1244 = vmatpush1.msra.mxu0 %v1145
        %1245 = vmatprep.subr.mxu0 0.0
        %1246 = vmatpush1.msra.mxu0 %v1144
        %1247 = vmatprep.subr.mxu0 0.0
        %1248 = vmatpush1.msra.mxu0 %v1143
        %1249 = vmatprep.subr.mxu0 0.0
        %1250 = vmatpush1.msra.mxu0 %v1142
        %1251 = vmatprep.subr.mxu0 0.0
        %1252 = vmatpush1.msra.mxu0 %v1141
        %1253 = vmatprep.subr.mxu0 0.0
        %1254 = vmatpush1.msra.mxu0 %v1140
        %1255 = vmatprep.subr.mxu0 0.0
        %1256 = vmatpush1.msra.mxu0 %v1139
        %1257 = vmatprep.subr.mxu0 0.0
        %1258 = vmatpush1.msra.mxu0 %v1138
        %1259 = vmatprep.subr.mxu0 0.0
        %1260 = vmatpush1.msra.mxu0 %v1137
        %1261 = vmatprep.subr.mxu0 0.0
        %1262 = vmatpush1.msra.mxu0 %v1136
        %1263 = vmatprep.subr.mxu0 0.0
        %1264 = vmatpush1.msra.mxu0 %v1135
        %1265 = vmatprep.subr.mxu0 0.0
        %1266 = vmatpush1.msra.mxu0 %v1134
        %1267 = vmatprep.subr.mxu0 0.0
        %1268 = vmatpush1.msra.mxu0 %v1133
        %1269 = vmatprep.subr.mxu0 0.0
        %1270 = vmatpush1.msra.mxu0 %v1132
        %1271 = vmatprep.subr.mxu0 0.0
        %1272 = vmatpush1.msra.mxu0 %v1131
        %1273 = vmatprep.subr.mxu0 0.0
        %1274 = vmatpush2.msra.mxu0 0.0
        %1275 = vmatprep.subr.mxu0 0.0
        %1276 = vmatpush2.msra.mxu0 0.0
        %1277 = vmatprep.subr.mxu0 0.0
        %1278 = vmatpush2.msra.mxu0 0.0
        %1279 = vmatprep.subr.mxu0 0.0
        %1280 = vmatpush2.msra.mxu0 0.0
        %1281 = vmatprep.subr.mxu0 0.0
        %1282 = vmatpush2.msra.mxu0 0.0
        %1283 = vmatprep.subr.mxu0 0.0
        %1284 = vmatpush2.msra.mxu0 0.0
        %1285 = vmatprep.subr.mxu0 0.0
        %1286 = vmatpush2.msra.mxu0 0.0
        %1287 = vmatprep.subr.mxu0 0.0
        %1288 = vmatpush2.msra.mxu0 0.0
        %1289 = vmatprep.subr.mxu0 0.0
        %1290 = vmatpush2.msra.mxu0 0.0
        %1291 = vmatprep.subr.mxu0 0.0
        %1292 = vmatpush2.msra.mxu0 0.0
        %1293 = vmatprep.subr.mxu0 0.0
        %1294 = vmatpush2.msra.mxu0 0.0
        %1295 = vmatprep.subr.mxu0 0.0
        %1296 = vmatpush2.msra.mxu0 0.0
        %1297 = vmatprep.subr.mxu0 0.0
        %1298 = vmatpush2.msra.mxu0 0.0
        %1299 = vmatprep.subr.mxu0 0.0
        %1300 = vmatpush2.msra.mxu0 0.0
        %1301 = vmatprep.subr.mxu0 0.0
        %1302 = vmatpush2.msra.mxu0 0.0
        %1303 = vmatprep.subr.mxu0 0.0
        %1304 = vmatpush2.msra.mxu0 0.0
        %1305 = vmatprep.mubr.f32.mxu0 0.0
        %1306 = vmatmul.mubr.f32.gmra.mxu0 %v1129
        %v1307 = vpop.f32.mrf.mxu0
        %v1308 = vadd.f32 %v1233, %v1307
        %v1309 = vpop.f32.mrf.mxu0
        %1310 = vmatprep.mubr.f32.mxu0 0.0
        %1311 = vmatmul.mubr.f32.gmra.mxu0 %v1130
        %v1312 = vpop.f32.mrf.mxu0
        %v1313 = vadd.f32 %v1238, %v1312
        %v1314 = vpop.f32.mrf.mxu0
        %1315 = vdwg.mxu0
        %v1316 = vld [vmem:[#allocation2 + $0x9] sm:$0xff]
        %v1317 = vld [vmem:[#allocation2 + $0x11] sm:$0xff]
        %s1318 = scalar_lea.vmem %s3, 256
        %v1319 = vld [vmem:[%s1318] sm:$0xff]
        %v1320 = vld [vmem:[%s1318 + $0x8] sm:$0xff]
        %v1321 = vld [vmem:[%s1318 + $0x10] sm:$0xff]
        %v1322 = vld [vmem:[%s1318 + $0x18] sm:$0xff]
        %v1323 = vld [vmem:[%s1318 + $0x20] sm:$0xff]
        %v1324 = vld [vmem:[%s1318 + $0x28] sm:$0xff]
        %v1325 = vld [vmem:[%s1318 + $0x30] sm:$0xff]
        %v1326 = vld [vmem:[%s1318 + $0x38] sm:$0xff]
        %v1327 = vld [vmem:[%s1318 + $0x40] sm:$0xff]
        %v1328 = vld [vmem:[%s1318 + $0x48] sm:$0xff]
        %v1329 = vld [vmem:[%s1318 + $0x50] sm:$0xff]
        %v1330 = vld [vmem:[%s1318 + $0x58] sm:$0xff]
        %v1331 = vld [vmem:[%s1318 + $0x60] sm:$0xff]
        %v1332 = vld [vmem:[%s1318 + $0x68] sm:$0xff]
        %v1333 = vld [vmem:[%s1318 + $0x70] sm:$0xff]
        %v1334 = vld [vmem:[%s1318 + $0x78] sm:$0xff]
        %1335 = vmatprep.subr.mxu0 0.0
        %1336 = vmatpush1.msra.mxu0 %v1334
        %1337 = vmatprep.subr.mxu0 0.0
        %1338 = vmatpush1.msra.mxu0 %v1333
        %1339 = vmatprep.subr.mxu0 0.0
        %1340 = vmatpush1.msra.mxu0 %v1332
        %1341 = vmatprep.subr.mxu0 0.0
        %1342 = vmatpush1.msra.mxu0 %v1331
        %1343 = vmatprep.subr.mxu0 0.0
        %1344 = vmatpush1.msra.mxu0 %v1330
        %1345 = vmatprep.subr.mxu0 0.0
        %1346 = vmatpush1.msra.mxu0 %v1329
        %1347 = vmatprep.subr.mxu0 0.0
        %1348 = vmatpush1.msra.mxu0 %v1328
        %1349 = vmatprep.subr.mxu0 0.0
        %1350 = vmatpush1.msra.mxu0 %v1327
        %1351 = vmatprep.subr.mxu0 0.0
        %1352 = vmatpush1.msra.mxu0 %v1326
        %1353 = vmatprep.subr.mxu0 0.0
        %1354 = vmatpush1.msra.mxu0 %v1325
        %1355 = vmatprep.subr.mxu0 0.0
        %1356 = vmatpush1.msra.mxu0 %v1324
        %1357 = vmatprep.subr.mxu0 0.0
        %1358 = vmatpush1.msra.mxu0 %v1323
        %1359 = vmatprep.subr.mxu0 0.0
        %1360 = vmatpush1.msra.mxu0 %v1322
        %1361 = vmatprep.subr.mxu0 0.0
        %1362 = vmatpush1.msra.mxu0 %v1321
        %1363 = vmatprep.subr.mxu0 0.0
        %1364 = vmatpush1.msra.mxu0 %v1320
        %1365 = vmatprep.subr.mxu0 0.0
        %1366 = vmatpush1.msra.mxu0 %v1319
        %1367 = vmatprep.subr.mxu0 0.0
        %1368 = vmatpush2.msra.mxu0 0.0
        %1369 = vmatprep.subr.mxu0 0.0
        %1370 = vmatpush2.msra.mxu0 0.0
        %1371 = vmatprep.subr.mxu0 0.0
        %1372 = vmatpush2.msra.mxu0 0.0
        %1373 = vmatprep.subr.mxu0 0.0
        %1374 = vmatpush2.msra.mxu0 0.0
        %1375 = vmatprep.subr.mxu0 0.0
        %1376 = vmatpush2.msra.mxu0 0.0
        %1377 = vmatprep.subr.mxu0 0.0
        %1378 = vmatpush2.msra.mxu0 0.0
        %1379 = vmatprep.subr.mxu0 0.0
        %1380 = vmatpush2.msra.mxu0 0.0
        %1381 = vmatprep.subr.mxu0 0.0
        %1382 = vmatpush2.msra.mxu0 0.0
        %1383 = vmatprep.subr.mxu0 0.0
        %1384 = vmatpush2.msra.mxu0 0.0
        %1385 = vmatprep.subr.mxu0 0.0
        %1386 = vmatpush2.msra.mxu0 0.0
        %1387 = vmatprep.subr.mxu0 0.0
        %1388 = vmatpush2.msra.mxu0 0.0
        %1389 = vmatprep.subr.mxu0 0.0
        %1390 = vmatpush2.msra.mxu0 0.0
        %1391 = vmatprep.subr.mxu0 0.0
        %1392 = vmatpush2.msra.mxu0 0.0
        %1393 = vmatprep.subr.mxu0 0.0
        %1394 = vmatpush2.msra.mxu0 0.0
        %1395 = vmatprep.subr.mxu0 0.0
        %1396 = vmatpush2.msra.mxu0 0.0
        %1397 = vmatprep.subr.mxu0 0.0
        %1398 = vmatpush2.msra.mxu0 0.0
        %1399 = vmatprep.mubr.f32.mxu0 0.0
        %1400 = vmatmul.mubr.f32.gmra.mxu0 %v1316
        %v1401 = vpop.f32.mrf.mxu0
        %v1402 = vadd.f32 0.0, %v1401
        %v1403 = vpop.f32.mrf.mxu0
        %1404 = vmatprep.mubr.f32.mxu0 0.0
        %1405 = vmatmul.mubr.f32.gmra.mxu0 %v1317
        %v1406 = vpop.f32.mrf.mxu0
        %v1407 = vadd.f32 0.0, %v1406
        %v1408 = vpop.f32.mrf.mxu0
        %1409 = vdwg.mxu0
        %v1410 = vadd.f32 %v1308, %v1402
        %v1411 = vadd.f32 %v1313, %v1407
        %v1412 = vld [vmem:[%s4] sm:$0x1]
        %v1414 = vlaneseq
        %v1415 = vshrl.u32 %v1414, 7
        %v1416 = vsub.s32 0, %v1415
        %v1417 = vrot.slane %v1412, %v1416
        %v1419 = vadd.f32 %v1410, %v1417
        %v1420 = vadd.f32 %v1411, %v1417
        %v1421 = vmax.f32 %v1419, 0.0
        %v1422 = vmax.f32 %v1420, 0.0
        %1423 = vst [vmem:[#allocation2 + $0x8] sm:$0xff] %v1421
        %1424 = vst [vmem:[#allocation2 + $0x10] sm:$0xff] %v1422
        %v1425 = vld [vmem:[#allocation2 + $0x7] sm:$0xff]
        %v1426 = vld [vmem:[#allocation2 + $0xf] sm:$0xff]
        %v1427 = vld [vmem:[#allocation9] sm:$0xff]
        %v1428 = vld [vmem:[#allocation9 + $0x8] sm:$0xff]
        %v1429 = vld [vmem:[#allocation9 + $0x10] sm:$0xff]
        %v1430 = vld [vmem:[#allocation9 + $0x18] sm:$0xff]
        %v1431 = vld [vmem:[#allocation9 + $0x20] sm:$0xff]
        %v1432 = vld [vmem:[#allocation9 + $0x28] sm:$0xff]
        %v1433 = vld [vmem:[#allocation9 + $0x30] sm:$0xff]
        %v1434 = vld [vmem:[#allocation9 + $0x38] sm:$0xff]
        %v1435 = vld [vmem:[#allocation9 + $0x40] sm:$0xff]
        %v1436 = vld [vmem:[#allocation9 + $0x48] sm:$0xff]
        %v1437 = vld [vmem:[#allocation9 + $0x50] sm:$0xff]
        %v1438 = vld [vmem:[#allocation9 + $0x58] sm:$0xff]
        %v1439 = vld [vmem:[#allocation9 + $0x60] sm:$0xff]
        %v1440 = vld [vmem:[#allocation9 + $0x68] sm:$0xff]
        %v1441 = vld [vmem:[#allocation9 + $0x70] sm:$0xff]
        %v1442 = vld [vmem:[#allocation9 + $0x78] sm:$0xff]
        %v1443 = vld [vmem:[#allocation2 + $0x8] sm:$0xff]
        %v1444 = vld [vmem:[#allocation2 + $0x10] sm:$0xff]
        %s1445 = scalar_lea.vmem [#allocation9], 128
        %v1446 = vld [vmem:[%s1445] sm:$0xff]
        %v1447 = vld [vmem:[%s1445 + $0x8] sm:$0xff]
        %v1448 = vld [vmem:[%s1445 + $0x10] sm:$0xff]
        %v1449 = vld [vmem:[%s1445 + $0x18] sm:$0xff]
        %v1450 = vld [vmem:[%s1445 + $0x20] sm:$0xff]
        %v1451 = vld [vmem:[%s1445 + $0x28] sm:$0xff]
        %v1452 = vld [vmem:[%s1445 + $0x30] sm:$0xff]
        %v1453 = vld [vmem:[%s1445 + $0x38] sm:$0xff]
        %v1454 = vld [vmem:[%s1445 + $0x40] sm:$0xff]
        %v1455 = vld [vmem:[%s1445 + $0x48] sm:$0xff]
        %v1456 = vld [vmem:[%s1445 + $0x50] sm:$0xff]
        %v1457 = vld [vmem:[%s1445 + $0x58] sm:$0xff]
        %v1458 = vld [vmem:[%s1445 + $0x60] sm:$0xff]
        %v1459 = vld [vmem:[%s1445 + $0x68] sm:$0xff]
        %v1460 = vld [vmem:[%s1445 + $0x70] sm:$0xff]
        %v1461 = vld [vmem:[%s1445 + $0x78] sm:$0xff]
        %1462 = vmatprep.subr.mxu0 0.0
        %1463 = vmatpush1.msra.mxu0 %v1461
        %1464 = vmatprep.subr.mxu0 0.0
        %1465 = vmatpush1.msra.mxu0 %v1460
        %1466 = vmatprep.subr.mxu0 0.0
        %1467 = vmatpush1.msra.mxu0 %v1459
        %1468 = vmatprep.subr.mxu0 0.0
        %1469 = vmatpush1.msra.mxu0 %v1458
        %1470 = vmatprep.subr.mxu0 0.0
        %1471 = vmatpush1.msra.mxu0 %v1457
        %1472 = vmatprep.subr.mxu0 0.0
        %1473 = vmatpush1.msra.mxu0 %v1456
        %1474 = vmatprep.subr.mxu0 0.0
        %1475 = vmatpush1.msra.mxu0 %v1455
        %1476 = vmatprep.subr.mxu0 0.0
        %1477 = vmatpush1.msra.mxu0 %v1454
        %1478 = vmatprep.subr.mxu0 0.0
        %1479 = vmatpush1.msra.mxu0 %v1453
        %1480 = vmatprep.subr.mxu0 0.0
        %1481 = vmatpush1.msra.mxu0 %v1452
        %1482 = vmatprep.subr.mxu0 0.0
        %1483 = vmatpush1.msra.mxu0 %v1451
        %1484 = vmatprep.subr.mxu0 0.0
        %1485 = vmatpush1.msra.mxu0 %v1450
        %1486 = vmatprep.subr.mxu0 0.0
        %1487 = vmatpush1.msra.mxu0 %v1449
        %1488 = vmatprep.subr.mxu0 0.0
        %1489 = vmatpush1.msra.mxu0 %v1448
        %1490 = vmatprep.subr.mxu0 0.0
        %1491 = vmatpush1.msra.mxu0 %v1447
        %1492 = vmatprep.subr.mxu0 0.0
        %1493 = vmatpush1.msra.mxu0 %v1446
        %1494 = vmatprep.subr.mxu0 0.0
        %1495 = vmatpush2.msra.mxu0 0.0
        %1496 = vmatprep.subr.mxu0 0.0
        %1497 = vmatpush2.msra.mxu0 0.0
        %1498 = vmatprep.subr.mxu0 0.0
        %1499 = vmatpush2.msra.mxu0 0.0
        %1500 = vmatprep.subr.mxu0 0.0
        %1501 = vmatpush2.msra.mxu0 0.0
        %1502 = vmatprep.subr.mxu0 0.0
        %1503 = vmatpush2.msra.mxu0 0.0
        %1504 = vmatprep.subr.mxu0 0.0
        %1505 = vmatpush2.msra.mxu0 0.0
        %1506 = vmatprep.subr.mxu0 0.0
        %1507 = vmatpush2.msra.mxu0 0.0
        %1508 = vmatprep.subr.mxu0 0.0
        %1509 = vmatpush2.msra.mxu0 0.0
        %1510 = vmatprep.subr.mxu0 0.0
        %1511 = vmatpush2.msra.mxu0 0.0
        %1512 = vmatprep.subr.mxu0 0.0
        %1513 = vmatpush2.msra.mxu0 0.0
        %1514 = vmatprep.subr.mxu0 0.0
        %1515 = vmatpush2.msra.mxu0 0.0
        %1516 = vmatprep.subr.mxu0 0.0
        %1517 = vmatpush2.msra.mxu0 0.0
        %1518 = vmatprep.subr.mxu0 0.0
        %1519 = vmatpush2.msra.mxu0 0.0
        %1520 = vmatprep.subr.mxu0 0.0
        %1521 = vmatpush2.msra.mxu0 0.0
        %1522 = vmatprep.subr.mxu0 0.0
        %1523 = vmatpush2.msra.mxu0 0.0
        %1524 = vmatprep.subr.mxu0 0.0
        %1525 = vmatpush2.msra.mxu0 0.0
        %1526 = vmatprep.mubr.f32.mxu0 0.0
        %1527 = vmatmul.mubr.f32.gmra.mxu0 %v1443
        %v1528 = vpop.f32.mrf.mxu0
        %v1529 = vadd.f32 0.0, %v1528
        %v1530 = vpop.f32.mrf.mxu0
        %1531 = vmatprep.mubr.f32.mxu0 0.0
        %1532 = vmatmul.mubr.f32.gmra.mxu0 %v1444
        %v1533 = vpop.f32.mrf.mxu0
        %v1534 = vadd.f32 0.0, %v1533
        %v1535 = vpop.f32.mrf.mxu0
        %1536 = vdwg.mxu0
        %1537 = vmatprep.subr.mxu0 0.0
        %1538 = vmatpush1.msra.mxu0 %v1442
        %1539 = vmatprep.subr.mxu0 0.0
        %1540 = vmatpush1.msra.mxu0 %v1441
        %1541 = vmatprep.subr.mxu0 0.0
        %1542 = vmatpush1.msra.mxu0 %v1440
        %1543 = vmatprep.subr.mxu0 0.0
        %1544 = vmatpush1.msra.mxu0 %v1439
        %1545 = vmatprep.subr.mxu0 0.0
        %1546 = vmatpush1.msra.mxu0 %v1438
        %1547 = vmatprep.subr.mxu0 0.0
        %1548 = vmatpush1.msra.mxu0 %v1437
        %1549 = vmatprep.subr.mxu0 0.0
        %1550 = vmatpush1.msra.mxu0 %v1436
        %1551 = vmatprep.subr.mxu0 0.0
        %1552 = vmatpush1.msra.mxu0 %v1435
        %1553 = vmatprep.subr.mxu0 0.0
        %1554 = vmatpush1.msra.mxu0 %v1434
        %1555 = vmatprep.subr.mxu0 0.0
        %1556 = vmatpush1.msra.mxu0 %v1433
        %1557 = vmatprep.subr.mxu0 0.0
        %1558 = vmatpush1.msra.mxu0 %v1432
        %1559 = vmatprep.subr.mxu0 0.0
        %1560 = vmatpush1.msra.mxu0 %v1431
        %1561 = vmatprep.subr.mxu0 0.0
        %1562 = vmatpush1.msra.mxu0 %v1430
        %1563 = vmatprep.subr.mxu0 0.0
        %1564 = vmatpush1.msra.mxu0 %v1429
        %1565 = vmatprep.subr.mxu0 0.0
        %1566 = vmatpush1.msra.mxu0 %v1428
        %1567 = vmatprep.subr.mxu0 0.0
        %1568 = vmatpush1.msra.mxu0 %v1427
        %1569 = vmatprep.subr.mxu0 0.0
        %1570 = vmatpush2.msra.mxu0 0.0
        %1571 = vmatprep.subr.mxu0 0.0
        %1572 = vmatpush2.msra.mxu0 0.0
        %1573 = vmatprep.subr.mxu0 0.0
        %1574 = vmatpush2.msra.mxu0 0.0
        %1575 = vmatprep.subr.mxu0 0.0
        %1576 = vmatpush2.msra.mxu0 0.0
        %1577 = vmatprep.subr.mxu0 0.0
        %1578 = vmatpush2.msra.mxu0 0.0
        %1579 = vmatprep.subr.mxu0 0.0
        %1580 = vmatpush2.msra.mxu0 0.0
        %1581 = vmatprep.subr.mxu0 0.0
        %1582 = vmatpush2.msra.mxu0 0.0
        %1583 = vmatprep.subr.mxu0 0.0
        %1584 = vmatpush2.msra.mxu0 0.0
        %1585 = vmatprep.subr.mxu0 0.0
        %1586 = vmatpush2.msra.mxu0 0.0
        %1587 = vmatprep.subr.mxu0 0.0
        %1588 = vmatpush2.msra.mxu0 0.0
        %1589 = vmatprep.subr.mxu0 0.0
        %1590 = vmatpush2.msra.mxu0 0.0
        %1591 = vmatprep.subr.mxu0 0.0
        %1592 = vmatpush2.msra.mxu0 0.0
        %1593 = vmatprep.subr.mxu0 0.0
        %1594 = vmatpush2.msra.mxu0 0.0
        %1595 = vmatprep.subr.mxu0 0.0
        %1596 = vmatpush2.msra.mxu0 0.0
        %1597 = vmatprep.subr.mxu0 0.0
        %1598 = vmatpush2.msra.mxu0 0.0
        %1599 = vmatprep.subr.mxu0 0.0
        %1600 = vmatpush2.msra.mxu0 0.0
        %1601 = vmatprep.mubr.f32.mxu0 0.0
        %1602 = vmatmul.mubr.f32.gmra.mxu0 %v1425
        %v1603 = vpop.f32.mrf.mxu0
        %v1604 = vadd.f32 %v1529, %v1603
        %v1605 = vpop.f32.mrf.mxu0
        %1606 = vmatprep.mubr.f32.mxu0 0.0
        %1607 = vmatmul.mubr.f32.gmra.mxu0 %v1426
        %v1608 = vpop.f32.mrf.mxu0
        %v1609 = vadd.f32 %v1534, %v1608
        %v1610 = vpop.f32.mrf.mxu0
        %1611 = vdwg.mxu0
        %v1612 = vld [vmem:[#allocation2 + $0x9] sm:$0xff]
        %v1613 = vld [vmem:[#allocation2 + $0x11] sm:$0xff]
        %s1614 = scalar_lea.vmem [#allocation9], 256
        %v1615 = vld [vmem:[%s1614] sm:$0xff]
        %v1616 = vld [vmem:[%s1614 + $0x8] sm:$0xff]
        %v1617 = vld [vmem:[%s1614 + $0x10] sm:$0xff]
        %v1618 = vld [vmem:[%s1614 + $0x18] sm:$0xff]
        %v1619 = vld [vmem:[%s1614 + $0x20] sm:$0xff]
        %v1620 = vld [vmem:[%s1614 + $0x28] sm:$0xff]
        %v1621 = vld [vmem:[%s1614 + $0x30] sm:$0xff]
        %v1622 = vld [vmem:[%s1614 + $0x38] sm:$0xff]
        %v1623 = vld [vmem:[%s1614 + $0x40] sm:$0xff]
        %v1624 = vld [vmem:[%s1614 + $0x48] sm:$0xff]
        %v1625 = vld [vmem:[%s1614 + $0x50] sm:$0xff]
        %v1626 = vld [vmem:[%s1614 + $0x58] sm:$0xff]
        %v1627 = vld [vmem:[%s1614 + $0x60] sm:$0xff]
        %v1628 = vld [vmem:[%s1614 + $0x68] sm:$0xff]
        %v1629 = vld [vmem:[%s1614 + $0x70] sm:$0xff]
        %v1630 = vld [vmem:[%s1614 + $0x78] sm:$0xff]
        %1631 = vmatprep.subr.mxu0 0.0
        %1632 = vmatpush1.msra.mxu0 %v1630
        %1633 = vmatprep.subr.mxu0 0.0
        %1634 = vmatpush1.msra.mxu0 %v1629
        %1635 = vmatprep.subr.mxu0 0.0
        %1636 = vmatpush1.msra.mxu0 %v1628
        %1637 = vmatprep.subr.mxu0 0.0
        %1638 = vmatpush1.msra.mxu0 %v1627
        %1639 = vmatprep.subr.mxu0 0.0
        %1640 = vmatpush1.msra.mxu0 %v1626
        %1641 = vmatprep.subr.mxu0 0.0
        %1642 = vmatpush1.msra.mxu0 %v1625
        %1643 = vmatprep.subr.mxu0 0.0
        %1644 = vmatpush1.msra.mxu0 %v1624
        %1645 = vmatprep.subr.mxu0 0.0
        %1646 = vmatpush1.msra.mxu0 %v1623
        %1647 = vmatprep.subr.mxu0 0.0
        %1648 = vmatpush1.msra.mxu0 %v1622
        %1649 = vmatprep.subr.mxu0 0.0
        %1650 = vmatpush1.msra.mxu0 %v1621
        %1651 = vmatprep.subr.mxu0 0.0
        %1652 = vmatpush1.msra.mxu0 %v1620
        %1653 = vmatprep.subr.mxu0 0.0
        %1654 = vmatpush1.msra.mxu0 %v1619
        %1655 = vmatprep.subr.mxu0 0.0
        %1656 = vmatpush1.msra.mxu0 %v1618
        %1657 = vmatprep.subr.mxu0 0.0
        %1658 = vmatpush1.msra.mxu0 %v1617
        %1659 = vmatprep.subr.mxu0 0.0
        %1660 = vmatpush1.msra.mxu0 %v1616
        %1661 = vmatprep.subr.mxu0 0.0
        %1662 = vmatpush1.msra.mxu0 %v1615
        %1663 = vmatprep.subr.mxu0 0.0
        %1664 = vmatpush2.msra.mxu0 0.0
        %1665 = vmatprep.subr.mxu0 0.0
        %1666 = vmatpush2.msra.mxu0 0.0
        %1667 = vmatprep.subr.mxu0 0.0
        %1668 = vmatpush2.msra.mxu0 0.0
        %1669 = vmatprep.subr.mxu0 0.0
        %1670 = vmatpush2.msra.mxu0 0.0
        %1671 = vmatprep.subr.mxu0 0.0
        %1672 = vmatpush2.msra.mxu0 0.0
        %1673 = vmatprep.subr.mxu0 0.0
        %1674 = vmatpush2.msra.mxu0 0.0
        %1675 = vmatprep.subr.mxu0 0.0
        %1676 = vmatpush2.msra.mxu0 0.0
        %1677 = vmatprep.subr.mxu0 0.0
        %1678 = vmatpush2.msra.mxu0 0.0
        %1679 = vmatprep.subr.mxu0 0.0
        %1680 = vmatpush2.msra.mxu0 0.0
        %1681 = vmatprep.subr.mxu0 0.0
        %1682 = vmatpush2.msra.mxu0 0.0
        %1683 = vmatprep.subr.mxu0 0.0
        %1684 = vmatpush2.msra.mxu0 0.0
        %1685 = vmatprep.subr.mxu0 0.0
        %1686 = vmatpush2.msra.mxu0 0.0
        %1687 = vmatprep.subr.mxu0 0.0
        %1688 = vmatpush2.msra.mxu0 0.0
        %1689 = vmatprep.subr.mxu0 0.0
        %1690 = vmatpush2.msra.mxu0 0.0
        %1691 = vmatprep.subr.mxu0 0.0
        %1692 = vmatpush2.msra.mxu0 0.0
        %1693 = vmatprep.subr.mxu0 0.0
        %1694 = vmatpush2.msra.mxu0 0.0
        %1695 = vmatprep.mubr.f32.mxu0 0.0
        %1696 = vmatmul.mubr.f32.gmra.mxu0 %v1612
        %v1697 = vpop.f32.mrf.mxu0
        %v1698 = vadd.f32 0.0, %v1697
        %v1699 = vpop.f32.mrf.mxu0
        %1700 = vmatprep.mubr.f32.mxu0 0.0
        %1701 = vmatmul.mubr.f32.gmra.mxu0 %v1613
        %v1702 = vpop.f32.mrf.mxu0
        %v1703 = vadd.f32 0.0, %v1702
        %v1704 = vpop.f32.mrf.mxu0
        %1705 = vdwg.mxu0
        %v1706 = vadd.f32 %v1604, %v1698
        %v1707 = vadd.f32 %v1609, %v1703
        %v1708 = vld [vmem:[%s6] sm:$0x1]
        %v1710 = vlaneseq
        %v1711 = vshrl.u32 %v1710, 7
        %v1712 = vsub.s32 0, %v1711
        %v1713 = vrot.slane %v1708, %v1712
        %v1715 = vadd.f32 %v1706, %v1713
        %v1716 = vadd.f32 %v1707, %v1713
        %v1717 = vmax.f32 %v1715, 0.0
        %v1718 = vmax.f32 %v1716, 0.0
        %1719 = vst [vmem:[#allocation2 + $0x8] sm:$0xff] %v1717
        %1720 = vst [vmem:[#allocation2 + $0x10] sm:$0xff] %v1718
        %v1721 = vld [vmem:[#allocation2 + $0x6] sm:$0xff]
        %v1722 = vld [vmem:[#allocation2 + $0xe] sm:$0xff]
        %v1723 = vld [vmem:[#allocation10] sm:$0xff]
        %v1724 = vld [vmem:[#allocation10 + $0x8] sm:$0xff]
        %v1725 = vld [vmem:[#allocation10 + $0x10] sm:$0xff]
        %v1726 = vld [vmem:[#allocation10 + $0x18] sm:$0xff]
        %v1727 = vld [vmem:[#allocation10 + $0x20] sm:$0xff]
        %v1728 = vld [vmem:[#allocation10 + $0x28] sm:$0xff]
        %v1729 = vld [vmem:[#allocation10 + $0x30] sm:$0xff]
        %v1730 = vld [vmem:[#allocation10 + $0x38] sm:$0xff]
        %v1731 = vld [vmem:[#allocation10 + $0x40] sm:$0xff]
        %v1732 = vld [vmem:[#allocation10 + $0x48] sm:$0xff]
        %v1733 = vld [vmem:[#allocation10 + $0x50] sm:$0xff]
        %v1734 = vld [vmem:[#allocation10 + $0x58] sm:$0xff]
        %v1735 = vld [vmem:[#allocation10 + $0x60] sm:$0xff]
        %v1736 = vld [vmem:[#allocation10 + $0x68] sm:$0xff]
        %v1737 = vld [vmem:[#allocation10 + $0x70] sm:$0xff]
        %v1738 = vld [vmem:[#allocation10 + $0x78] sm:$0xff]
        %v1739 = vld [vmem:[#allocation2 + $0x7] sm:$0xff]
        %v1740 = vld [vmem:[#allocation2 + $0xf] sm:$0xff]
        %s1741 = scalar_lea.vmem [#allocation10], 128
        %v1742 = vld [vmem:[%s1741] sm:$0xff]
        %v1743 = vld [vmem:[%s1741 + $0x8] sm:$0xff]
        %v1744 = vld [vmem:[%s1741 + $0x10] sm:$0xff]
        %v1745 = vld [vmem:[%s1741 + $0x18] sm:$0xff]
        %v1746 = vld [vmem:[%s1741 + $0x20] sm:$0xff]
        %v1747 = vld [vmem:[%s1741 + $0x28] sm:$0xff]
        %v1748 = vld [vmem:[%s1741 + $0x30] sm:$0xff]
        %v1749 = vld [vmem:[%s1741 + $0x38] sm:$0xff]
        %v1750 = vld [vmem:[%s1741 + $0x40] sm:$0xff]
        %v1751 = vld [vmem:[%s1741 + $0x48] sm:$0xff]
        %v1752 = vld [vmem:[%s1741 + $0x50] sm:$0xff]
        %v1753 = vld [vmem:[%s1741 + $0x58] sm:$0xff]
        %v1754 = vld [vmem:[%s1741 + $0x60] sm:$0xff]
        %v1755 = vld [vmem:[%s1741 + $0x68] sm:$0xff]
        %v1756 = vld [vmem:[%s1741 + $0x70] sm:$0xff]
        %v1757 = vld [vmem:[%s1741 + $0x78] sm:$0xff]
        %1758 = vmatprep.subr.mxu0 0.0
        %1759 = vmatpush1.msra.mxu0 %v1757
        %1760 = vmatprep.subr.mxu0 0.0
        %1761 = vmatpush1.msra.mxu0 %v1756
        %1762 = vmatprep.subr.mxu0 0.0
        %1763 = vmatpush1.msra.mxu0 %v1755
        %1764 = vmatprep.subr.mxu0 0.0
        %1765 = vmatpush1.msra.mxu0 %v1754
        %1766 = vmatprep.subr.mxu0 0.0
        %1767 = vmatpush1.msra.mxu0 %v1753
        %1768 = vmatprep.subr.mxu0 0.0
        %1769 = vmatpush1.msra.mxu0 %v1752
        %1770 = vmatprep.subr.mxu0 0.0
        %1771 = vmatpush1.msra.mxu0 %v1751
        %1772 = vmatprep.subr.mxu0 0.0
        %1773 = vmatpush1.msra.mxu0 %v1750
        %1774 = vmatprep.subr.mxu0 0.0
        %1775 = vmatpush1.msra.mxu0 %v1749
        %1776 = vmatprep.subr.mxu0 0.0
        %1777 = vmatpush1.msra.mxu0 %v1748
        %1778 = vmatprep.subr.mxu0 0.0
        %1779 = vmatpush1.msra.mxu0 %v1747
        %1780 = vmatprep.subr.mxu0 0.0
        %1781 = vmatpush1.msra.mxu0 %v1746
        %1782 = vmatprep.subr.mxu0 0.0
        %1783 = vmatpush1.msra.mxu0 %v1745
        %1784 = vmatprep.subr.mxu0 0.0
        %1785 = vmatpush1.msra.mxu0 %v1744
        %1786 = vmatprep.subr.mxu0 0.0
        %1787 = vmatpush1.msra.mxu0 %v1743
        %1788 = vmatprep.subr.mxu0 0.0
        %1789 = vmatpush1.msra.mxu0 %v1742
        %1790 = vmatprep.subr.mxu0 0.0
        %1791 = vmatpush2.msra.mxu0 0.0
        %1792 = vmatprep.subr.mxu0 0.0
        %1793 = vmatpush2.msra.mxu0 0.0
        %1794 = vmatprep.subr.mxu0 0.0
        %1795 = vmatpush2.msra.mxu0 0.0
        %1796 = vmatprep.subr.mxu0 0.0
        %1797 = vmatpush2.msra.mxu0 0.0
        %1798 = vmatprep.subr.mxu0 0.0
        %1799 = vmatpush2.msra.mxu0 0.0
        %1800 = vmatprep.subr.mxu0 0.0
        %1801 = vmatpush2.msra.mxu0 0.0
        %1802 = vmatprep.subr.mxu0 0.0
        %1803 = vmatpush2.msra.mxu0 0.0
        %1804 = vmatprep.subr.mxu0 0.0
        %1805 = vmatpush2.msra.mxu0 0.0
        %1806 = vmatprep.subr.mxu0 0.0
        %1807 = vmatpush2.msra.mxu0 0.0
        %1808 = vmatprep.subr.mxu0 0.0
        %1809 = vmatpush2.msra.mxu0 0.0
        %1810 = vmatprep.subr.mxu0 0.0
        %1811 = vmatpush2.msra.mxu0 0.0
        %1812 = vmatprep.subr.mxu0 0.0
        %1813 = vmatpush2.msra.mxu0 0.0
        %1814 = vmatprep.subr.mxu0 0.0
        %1815 = vmatpush2.msra.mxu0 0.0
        %1816 = vmatprep.subr.mxu0 0.0
        %1817 = vmatpush2.msra.mxu0 0.0
        %1818 = vmatprep.subr.mxu0 0.0
        %1819 = vmatpush2.msra.mxu0 0.0
        %1820 = vmatprep.subr.mxu0 0.0
        %1821 = vmatpush2.msra.mxu0 0.0
        %1822 = vmatprep.mubr.f32.mxu0 0.0
        %1823 = vmatmul.mubr.f32.gmra.mxu0 %v1739
        %v1824 = vpop.f32.mrf.mxu0
        %v1825 = vadd.f32 0.0, %v1824
        %v1826 = vpop.f32.mrf.mxu0
        %1827 = vmatprep.mubr.f32.mxu0 0.0
        %1828 = vmatmul.mubr.f32.gmra.mxu0 %v1740
        %v1829 = vpop.f32.mrf.mxu0
        %v1830 = vadd.f32 0.0, %v1829
        %v1831 = vpop.f32.mrf.mxu0
        %1832 = vdwg.mxu0
        %1833 = vmatprep.subr.mxu0 0.0
        %1834 = vmatpush1.msra.mxu0 %v1738
        %1835 = vmatprep.subr.mxu0 0.0
        %1836 = vmatpush1.msra.mxu0 %v1737
        %1837 = vmatprep.subr.mxu0 0.0
        %1838 = vmatpush1.msra.mxu0 %v1736
        %1839 = vmatprep.subr.mxu0 0.0
        %1840 = vmatpush1.msra.mxu0 %v1735
        %1841 = vmatprep.subr.mxu0 0.0
        %1842 = vmatpush1.msra.mxu0 %v1734
        %1843 = vmatprep.subr.mxu0 0.0
        %1844 = vmatpush1.msra.mxu0 %v1733
        %1845 = vmatprep.subr.mxu0 0.0
        %1846 = vmatpush1.msra.mxu0 %v1732
        %1847 = vmatprep.subr.mxu0 0.0
        %1848 = vmatpush1.msra.mxu0 %v1731
        %1849 = vmatprep.subr.mxu0 0.0
        %1850 = vmatpush1.msra.mxu0 %v1730
        %1851 = vmatprep.subr.mxu0 0.0
        %1852 = vmatpush1.msra.mxu0 %v1729
        %1853 = vmatprep.subr.mxu0 0.0
        %1854 = vmatpush1.msra.mxu0 %v1728
        %1855 = vmatprep.subr.mxu0 0.0
        %1856 = vmatpush1.msra.mxu0 %v1727
        %1857 = vmatprep.subr.mxu0 0.0
        %1858 = vmatpush1.msra.mxu0 %v1726
        %1859 = vmatprep.subr.mxu0 0.0
        %1860 = vmatpush1.msra.mxu0 %v1725
        %1861 = vmatprep.subr.mxu0 0.0
        %1862 = vmatpush1.msra.mxu0 %v1724
        %1863 = vmatprep.subr.mxu0 0.0
        %1864 = vmatpush1.msra.mxu0 %v1723
        %1865 = vmatprep.subr.mxu0 0.0
        %1866 = vmatpush2.msra.mxu0 0.0
        %1867 = vmatprep.subr.mxu0 0.0
        %1868 = vmatpush2.msra.mxu0 0.0
        %1869 = vmatprep.subr.mxu0 0.0
        %1870 = vmatpush2.msra.mxu0 0.0
        %1871 = vmatprep.subr.mxu0 0.0
        %1872 = vmatpush2.msra.mxu0 0.0
        %1873 = vmatprep.subr.mxu0 0.0
        %1874 = vmatpush2.msra.mxu0 0.0
        %1875 = vmatprep.subr.mxu0 0.0
        %1876 = vmatpush2.msra.mxu0 0.0
        %1877 = vmatprep.subr.mxu0 0.0
        %1878 = vmatpush2.msra.mxu0 0.0
        %1879 = vmatprep.subr.mxu0 0.0
        %1880 = vmatpush2.msra.mxu0 0.0
        %1881 = vmatprep.subr.mxu0 0.0
        %1882 = vmatpush2.msra.mxu0 0.0
        %1883 = vmatprep.subr.mxu0 0.0
        %1884 = vmatpush2.msra.mxu0 0.0
        %1885 = vmatprep.subr.mxu0 0.0
        %1886 = vmatpush2.msra.mxu0 0.0
        %1887 = vmatprep.subr.mxu0 0.0
        %1888 = vmatpush2.msra.mxu0 0.0
        %1889 = vmatprep.subr.mxu0 0.0
        %1890 = vmatpush2.msra.mxu0 0.0
        %1891 = vmatprep.subr.mxu0 0.0
        %1892 = vmatpush2.msra.mxu0 0.0
        %1893 = vmatprep.subr.mxu0 0.0
        %1894 = vmatpush2.msra.mxu0 0.0
        %1895 = vmatprep.subr.mxu0 0.0
        %1896 = vmatpush2.msra.mxu0 0.0
        %1897 = vmatprep.mubr.f32.mxu0 0.0
        %1898 = vmatmul.mubr.f32.gmra.mxu0 %v1721
        %v1899 = vpop.f32.mrf.mxu0
        %v1900 = vadd.f32 %v1825, %v1899
        %v1901 = vpop.f32.mrf.mxu0
        %1902 = vmatprep.mubr.f32.mxu0 0.0
        %1903 = vmatmul.mubr.f32.gmra.mxu0 %v1722
        %v1904 = vpop.f32.mrf.mxu0
        %v1905 = vadd.f32 %v1830, %v1904
        %v1906 = vpop.f32.mrf.mxu0
        %1907 = vdwg.mxu0
        %v1908 = vld [vmem:[#allocation2 + $0x8] sm:$0xff]
        %v1909 = vld [vmem:[#allocation2 + $0x10] sm:$0xff]
        %s1910 = scalar_lea.vmem [#allocation10], 256
        %v1911 = vld [vmem:[%s1910] sm:$0xff]
        %v1912 = vld [vmem:[%s1910 + $0x8] sm:$0xff]
        %v1913 = vld [vmem:[%s1910 + $0x10] sm:$0xff]
        %v1914 = vld [vmem:[%s1910 + $0x18] sm:$0xff]
        %v1915 = vld [vmem:[%s1910 + $0x20] sm:$0xff]
        %v1916 = vld [vmem:[%s1910 + $0x28] sm:$0xff]
        %v1917 = vld [vmem:[%s1910 + $0x30] sm:$0xff]
        %v1918 = vld [vmem:[%s1910 + $0x38] sm:$0xff]
        %v1919 = vld [vmem:[%s1910 + $0x40] sm:$0xff]
        %v1920 = vld [vmem:[%s1910 + $0x48] sm:$0xff]
        %v1921 = vld [vmem:[%s1910 + $0x50] sm:$0xff]
        %v1922 = vld [vmem:[%s1910 + $0x58] sm:$0xff]
        %v1923 = vld [vmem:[%s1910 + $0x60] sm:$0xff]
        %v1924 = vld [vmem:[%s1910 + $0x68] sm:$0xff]
        %v1925 = vld [vmem:[%s1910 + $0x70] sm:$0xff]
        %v1926 = vld [vmem:[%s1910 + $0x78] sm:$0xff]
        %1927 = vmatprep.subr.mxu0 0.0
        %1928 = vmatpush1.msra.mxu0 %v1926
        %1929 = vmatprep.subr.mxu0 0.0
        %1930 = vmatpush1.msra.mxu0 %v1925
        %1931 = vmatprep.subr.mxu0 0.0
        %1932 = vmatpush1.msra.mxu0 %v1924
        %1933 = vmatprep.subr.mxu0 0.0
        %1934 = vmatpush1.msra.mxu0 %v1923
        %1935 = vmatprep.subr.mxu0 0.0
        %1936 = vmatpush1.msra.mxu0 %v1922
        %1937 = vmatprep.subr.mxu0 0.0
        %1938 = vmatpush1.msra.mxu0 %v1921
        %1939 = vmatprep.subr.mxu0 0.0
        %1940 = vmatpush1.msra.mxu0 %v1920
        %1941 = vmatprep.subr.mxu0 0.0
        %1942 = vmatpush1.msra.mxu0 %v1919
        %1943 = vmatprep.subr.mxu0 0.0
        %1944 = vmatpush1.msra.mxu0 %v1918
        %1945 = vmatprep.subr.mxu0 0.0
        %1946 = vmatpush1.msra.mxu0 %v1917
        %1947 = vmatprep.subr.mxu0 0.0
        %1948 = vmatpush1.msra.mxu0 %v1916
        %1949 = vmatprep.subr.mxu0 0.0
        %1950 = vmatpush1.msra.mxu0 %v1915
        %1951 = vmatprep.subr.mxu0 0.0
        %1952 = vmatpush1.msra.mxu0 %v1914
        %1953 = vmatprep.subr.mxu0 0.0
        %1954 = vmatpush1.msra.mxu0 %v1913
        %1955 = vmatprep.subr.mxu0 0.0
        %1956 = vmatpush1.msra.mxu0 %v1912
        %1957 = vmatprep.subr.mxu0 0.0
        %1958 = vmatpush1.msra.mxu0 %v1911
        %1959 = vmatprep.subr.mxu0 0.0
        %1960 = vmatpush2.msra.mxu0 0.0
        %1961 = vmatprep.subr.mxu0 0.0
        %1962 = vmatpush2.msra.mxu0 0.0
        %1963 = vmatprep.subr.mxu0 0.0
        %1964 = vmatpush2.msra.mxu0 0.0
        %1965 = vmatprep.subr.mxu0 0.0
        %1966 = vmatpush2.msra.mxu0 0.0
        %1967 = vmatprep.subr.mxu0 0.0
        %1968 = vmatpush2.msra.mxu0 0.0
        %1969 = vmatprep.subr.mxu0 0.0
        %1970 = vmatpush2.msra.mxu0 0.0
        %1971 = vmatprep.subr.mxu0 0.0
        %1972 = vmatpush2.msra.mxu0 0.0
        %1973 = vmatprep.subr.mxu0 0.0
        %1974 = vmatpush2.msra.mxu0 0.0
        %1975 = vmatprep.subr.mxu0 0.0
        %1976 = vmatpush2.msra.mxu0 0.0
        %1977 = vmatprep.subr.mxu0 0.0
        %1978 = vmatpush2.msra.mxu0 0.0
        %1979 = vmatprep.subr.mxu0 0.0
        %1980 = vmatpush2.msra.mxu0 0.0
        %1981 = vmatprep.subr.mxu0 0.0
        %1982 = vmatpush2.msra.mxu0 0.0
        %1983 = vmatprep.subr.mxu0 0.0
        %1984 = vmatpush2.msra.mxu0 0.0
        %1985 = vmatprep.subr.mxu0 0.0
        %1986 = vmatpush2.msra.mxu0 0.0
        %1987 = vmatprep.subr.mxu0 0.0
        %1988 = vmatpush2.msra.mxu0 0.0
        %1989 = vmatprep.subr.mxu0 0.0
        %1990 = vmatpush2.msra.mxu0 0.0
        %1991 = vmatprep.mubr.f32.mxu0 0.0
        %1992 = vmatmul.mubr.f32.gmra.mxu0 %v1908
        %v1993 = vpop.f32.mrf.mxu0
        %v1994 = vadd.f32 0.0, %v1993
        %v1995 = vpop.f32.mrf.mxu0
        %1996 = vmatprep.mubr.f32.mxu0 0.0
        %1997 = vmatmul.mubr.f32.gmra.mxu0 %v1909
        %v1998 = vpop.f32.mrf.mxu0
        %v1999 = vadd.f32 0.0, %v1998
        %v2000 = vpop.f32.mrf.mxu0
        %2001 = vdwg.mxu0
        %v2002 = vadd.f32 %v1900, %v1994
        %v2003 = vadd.f32 %v1905, %v1999
        %v2004 = vld [vmem:[#allocation2 + $0x9] sm:$0xff]
        %v2005 = vld [vmem:[#allocation2 + $0x11] sm:$0xff]
        %s2006 = scalar_lea.vmem [#allocation10], 384
        %v2007 = vld [vmem:[%s2006] sm:$0xff]
        %v2008 = vld [vmem:[%s2006 + $0x8] sm:$0xff]
        %v2009 = vld [vmem:[%s2006 + $0x10] sm:$0xff]
        %v2010 = vld [vmem:[%s2006 + $0x18] sm:$0xff]
        %v2011 = vld [vmem:[%s2006 + $0x20] sm:$0xff]
        %v2012 = vld [vmem:[%s2006 + $0x28] sm:$0xff]
        %v2013 = vld [vmem:[%s2006 + $0x30] sm:$0xff]
        %v2014 = vld [vmem:[%s2006 + $0x38] sm:$0xff]
        %v2015 = vld [vmem:[%s2006 + $0x40] sm:$0xff]
        %v2016 = vld [vmem:[%s2006 + $0x48] sm:$0xff]
        %v2017 = vld [vmem:[%s2006 + $0x50] sm:$0xff]
        %v2018 = vld [vmem:[%s2006 + $0x58] sm:$0xff]
        %v2019 = vld [vmem:[%s2006 + $0x60] sm:$0xff]
        %v2020 = vld [vmem:[%s2006 + $0x68] sm:$0xff]
        %v2021 = vld [vmem:[%s2006 + $0x70] sm:$0xff]
        %v2022 = vld [vmem:[%s2006 + $0x78] sm:$0xff]
        %2023 = vmatprep.subr.mxu0 0.0
        %2024 = vmatpush1.msra.mxu0 %v2022
        %2025 = vmatprep.subr.mxu0 0.0
        %2026 = vmatpush1.msra.mxu0 %v2021
        %2027 = vmatprep.subr.mxu0 0.0
        %2028 = vmatpush1.msra.mxu0 %v2020
        %2029 = vmatprep.subr.mxu0 0.0
        %2030 = vmatpush1.msra.mxu0 %v2019
        %2031 = vmatprep.subr.mxu0 0.0
        %2032 = vmatpush1.msra.mxu0 %v2018
        %2033 = vmatprep.subr.mxu0 0.0
        %2034 = vmatpush1.msra.mxu0 %v2017
        %2035 = vmatprep.subr.mxu0 0.0
        %2036 = vmatpush1.msra.mxu0 %v2016
        %2037 = vmatprep.subr.mxu0 0.0
        %2038 = vmatpush1.msra.mxu0 %v2015
        %2039 = vmatprep.subr.mxu0 0.0
        %2040 = vmatpush1.msra.mxu0 %v2014
        %2041 = vmatprep.subr.mxu0 0.0
        %2042 = vmatpush1.msra.mxu0 %v2013
        %2043 = vmatprep.subr.mxu0 0.0
        %2044 = vmatpush1.msra.mxu0 %v2012
        %2045 = vmatprep.subr.mxu0 0.0
        %2046 = vmatpush1.msra.mxu0 %v2011
        %2047 = vmatprep.subr.mxu0 0.0
        %2048 = vmatpush1.msra.mxu0 %v2010
        %2049 = vmatprep.subr.mxu0 0.0
        %2050 = vmatpush1.msra.mxu0 %v2009
        %2051 = vmatprep.subr.mxu0 0.0
        %2052 = vmatpush1.msra.mxu0 %v2008
        %2053 = vmatprep.subr.mxu0 0.0
        %2054 = vmatpush1.msra.mxu0 %v2007
        %2055 = vmatprep.subr.mxu0 0.0
        %2056 = vmatpush2.msra.mxu0 0.0
        %2057 = vmatprep.subr.mxu0 0.0
        %2058 = vmatpush2.msra.mxu0 0.0
        %2059 = vmatprep.subr.mxu0 0.0
        %2060 = vmatpush2.msra.mxu0 0.0
        %2061 = vmatprep.subr.mxu0 0.0
        %2062 = vmatpush2.msra.mxu0 0.0
        %2063 = vmatprep.subr.mxu0 0.0
        %2064 = vmatpush2.msra.mxu0 0.0
        %2065 = vmatprep.subr.mxu0 0.0
        %2066 = vmatpush2.msra.mxu0 0.0
        %2067 = vmatprep.subr.mxu0 0.0
        %2068 = vmatpush2.msra.mxu0 0.0
        %2069 = vmatprep.subr.mxu0 0.0
        %2070 = vmatpush2.msra.mxu0 0.0
        %2071 = vmatprep.subr.mxu0 0.0
        %2072 = vmatpush2.msra.mxu0 0.0
        %2073 = vmatprep.subr.mxu0 0.0
        %2074 = vmatpush2.msra.mxu0 0.0
        %2075 = vmatprep.subr.mxu0 0.0
        %2076 = vmatpush2.msra.mxu0 0.0
        %2077 = vmatprep.subr.mxu0 0.0
        %2078 = vmatpush2.msra.mxu0 0.0
        %2079 = vmatprep.subr.mxu0 0.0
        %2080 = vmatpush2.msra.mxu0 0.0
        %2081 = vmatprep.subr.mxu0 0.0
        %2082 = vmatpush2.msra.mxu0 0.0
        %2083 = vmatprep.subr.mxu0 0.0
        %2084 = vmatpush2.msra.mxu0 0.0
        %2085 = vmatprep.subr.mxu0 0.0
        %2086 = vmatpush2.msra.mxu0 0.0
        %2087 = vmatprep.mubr.f32.mxu0 0.0
        %2088 = vmatmul.mubr.f32.gmra.mxu0 %v2004
        %v2089 = vpop.f32.mrf.mxu0
        %v2090 = vadd.f32 0.0, %v2089
        %v2091 = vpop.f32.mrf.mxu0
        %2092 = vmatprep.mubr.f32.mxu0 0.0
        %2093 = vmatmul.mubr.f32.gmra.mxu0 %v2005
        %v2094 = vpop.f32.mrf.mxu0
        %v2095 = vadd.f32 0.0, %v2094
        %v2096 = vpop.f32.mrf.mxu0
        %2097 = vdwg.mxu0
        %v2098 = vadd.f32 %v2002, %v2090
        %v2099 = vadd.f32 %v2003, %v2095
        %v2100 = vld [vmem:[#allocation2 + $0xa] sm:$0xff]
        %v2101 = vld [vmem:[#allocation2 + $0x12] sm:$0xff]
        %s2102 = scalar_lea.vmem [#allocation10], 512
        %v2103 = vld [vmem:[%s2102] sm:$0xff]
        %v2104 = vld [vmem:[%s2102 + $0x8] sm:$0xff]
        %v2105 = vld [vmem:[%s2102 + $0x10] sm:$0xff]
        %v2106 = vld [vmem:[%s2102 + $0x18] sm:$0xff]
        %v2107 = vld [vmem:[%s2102 + $0x20] sm:$0xff]
        %v2108 = vld [vmem:[%s2102 + $0x28] sm:$0xff]
        %v2109 = vld [vmem:[%s2102 + $0x30] sm:$0xff]
        %v2110 = vld [vmem:[%s2102 + $0x38] sm:$0xff]
        %v2111 = vld [vmem:[%s2102 + $0x40] sm:$0xff]
        %v2112 = vld [vmem:[%s2102 + $0x48] sm:$0xff]
        %v2113 = vld [vmem:[%s2102 + $0x50] sm:$0xff]
        %v2114 = vld [vmem:[%s2102 + $0x58] sm:$0xff]
        %v2115 = vld [vmem:[%s2102 + $0x60] sm:$0xff]
        %v2116 = vld [vmem:[%s2102 + $0x68] sm:$0xff]
        %v2117 = vld [vmem:[%s2102 + $0x70] sm:$0xff]
        %v2118 = vld [vmem:[%s2102 + $0x78] sm:$0xff]
        %2119 = vmatprep.subr.mxu0 0.0
        %2120 = vmatpush1.msra.mxu0 %v2118
        %2121 = vmatprep.subr.mxu0 0.0
        %2122 = vmatpush1.msra.mxu0 %v2117
        %2123 = vmatprep.subr.mxu0 0.0
        %2124 = vmatpush1.msra.mxu0 %v2116
        %2125 = vmatprep.subr.mxu0 0.0
        %2126 = vmatpush1.msra.mxu0 %v2115
        %2127 = vmatprep.subr.mxu0 0.0
        %2128 = vmatpush1.msra.mxu0 %v2114
        %2129 = vmatprep.subr.mxu0 0.0
        %2130 = vmatpush1.msra.mxu0 %v2113
        %2131 = vmatprep.subr.mxu0 0.0
        %2132 = vmatpush1.msra.mxu0 %v2112
        %2133 = vmatprep.subr.mxu0 0.0
        %2134 = vmatpush1.msra.mxu0 %v2111
        %2135 = vmatprep.subr.mxu0 0.0
        %2136 = vmatpush1.msra.mxu0 %v2110
        %2137 = vmatprep.subr.mxu0 0.0
        %2138 = vmatpush1.msra.mxu0 %v2109
        %2139 = vmatprep.subr.mxu0 0.0
        %2140 = vmatpush1.msra.mxu0 %v2108
        %2141 = vmatprep.subr.mxu0 0.0
        %2142 = vmatpush1.msra.mxu0 %v2107
        %2143 = vmatprep.subr.mxu0 0.0
        %2144 = vmatpush1.msra.mxu0 %v2106
        %2145 = vmatprep.subr.mxu0 0.0
        %2146 = vmatpush1.msra.mxu0 %v2105
        %2147 = vmatprep.subr.mxu0 0.0
        %2148 = vmatpush1.msra.mxu0 %v2104
        %2149 = vmatprep.subr.mxu0 0.0
        %2150 = vmatpush1.msra.mxu0 %v2103
        %2151 = vmatprep.subr.mxu0 0.0
        %2152 = vmatpush2.msra.mxu0 0.0
        %2153 = vmatprep.subr.mxu0 0.0
        %2154 = vmatpush2.msra.mxu0 0.0
        %2155 = vmatprep.subr.mxu0 0.0
        %2156 = vmatpush2.msra.mxu0 0.0
        %2157 = vmatprep.subr.mxu0 0.0
        %2158 = vmatpush2.msra.mxu0 0.0
        %2159 = vmatprep.subr.mxu0 0.0
        %2160 = vmatpush2.msra.mxu0 0.0
        %2161 = vmatprep.subr.mxu0 0.0
        %2162 = vmatpush2.msra.mxu0 0.0
        %2163 = vmatprep.subr.mxu0 0.0
        %2164 = vmatpush2.msra.mxu0 0.0
        %2165 = vmatprep.subr.mxu0 0.0
        %2166 = vmatpush2.msra.mxu0 0.0
        %2167 = vmatprep.subr.mxu0 0.0
        %2168 = vmatpush2.msra.mxu0 0.0
        %2169 = vmatprep.subr.mxu0 0.0
        %2170 = vmatpush2.msra.mxu0 0.0
        %2171 = vmatprep.subr.mxu0 0.0
        %2172 = vmatpush2.msra.mxu0 0.0
        %2173 = vmatprep.subr.mxu0 0.0
        %2174 = vmatpush2.msra.mxu0 0.0
        %2175 = vmatprep.subr.mxu0 0.0
        %2176 = vmatpush2.msra.mxu0 0.0
        %2177 = vmatprep.subr.mxu0 0.0
        %2178 = vmatpush2.msra.mxu0 0.0
        %2179 = vmatprep.subr.mxu0 0.0
        %2180 = vmatpush2.msra.mxu0 0.0
        %2181 = vmatprep.subr.mxu0 0.0
        %2182 = vmatpush2.msra.mxu0 0.0
        %2183 = vmatprep.mubr.f32.mxu0 0.0
        %2184 = vmatmul.mubr.f32.gmra.mxu0 %v2100
        %v2185 = vpop.f32.mrf.mxu0
        %v2186 = vadd.f32 0.0, %v2185
        %v2187 = vpop.f32.mrf.mxu0
        %2188 = vmatprep.mubr.f32.mxu0 0.0
        %2189 = vmatmul.mubr.f32.gmra.mxu0 %v2101
        %v2190 = vpop.f32.mrf.mxu0
        %v2191 = vadd.f32 0.0, %v2190
        %v2192 = vpop.f32.mrf.mxu0
        %2193 = vdwg.mxu0
        %v2194 = vadd.f32 %v2098, %v2186
        %v2195 = vadd.f32 %v2099, %v2191
        %v2196 = vld [vmem:[%s8] sm:$0x1]
        %v2198 = vlaneseq
        %v2199 = vshrl.u32 %v2198, 7
        %v2200 = vsub.s32 0, %v2199
        %v2201 = vrot.slane %v2196, %v2200
        %v2203 = vadd.f32 %v2194, %v2201
        %v2204 = vadd.f32 %v2195, %v2201
        %v2205 = vmax.f32 %v2203, 0.0
        %v2206 = vmax.f32 %v2204, 0.0
        %2207 = vst [vmem:[#allocation2 + $0x8] sm:$0xff] %v2205
        %2208 = vst [vmem:[#allocation2 + $0x10] sm:$0xff] %v2206
        %v2209 = vld [vmem:[#allocation2 + $0x6] sm:$0xff]
        %v2210 = vld [vmem:[#allocation2 + $0xe] sm:$0xff]
        %v2211 = vld [vmem:[#allocation12] sm:$0xff]
        %v2212 = vld [vmem:[#allocation12 + $0x8] sm:$0xff]
        %v2213 = vld [vmem:[#allocation12 + $0x10] sm:$0xff]
        %v2214 = vld [vmem:[#allocation12 + $0x18] sm:$0xff]
        %v2215 = vld [vmem:[#allocation12 + $0x20] sm:$0xff]
        %v2216 = vld [vmem:[#allocation12 + $0x28] sm:$0xff]
        %v2217 = vld [vmem:[#allocation12 + $0x30] sm:$0xff]
        %v2218 = vld [vmem:[#allocation12 + $0x38] sm:$0xff]
        %v2219 = vld [vmem:[#allocation12 + $0x40] sm:$0xff]
        %v2220 = vld [vmem:[#allocation12 + $0x48] sm:$0xff]
        %v2221 = vld [vmem:[#allocation12 + $0x50] sm:$0xff]
        %v2222 = vld [vmem:[#allocation12 + $0x58] sm:$0xff]
        %v2223 = vld [vmem:[#allocation12 + $0x60] sm:$0xff]
        %v2224 = vld [vmem:[#allocation12 + $0x68] sm:$0xff]
        %v2225 = vld [vmem:[#allocation12 + $0x70] sm:$0xff]
        %v2226 = vld [vmem:[#allocation12 + $0x78] sm:$0xff]
        %v2227 = vld [vmem:[#allocation2 + $0x7] sm:$0xff]
        %v2228 = vld [vmem:[#allocation2 + $0xf] sm:$0xff]
        %s2229 = scalar_lea.vmem [#allocation12], 128
        %v2230 = vld [vmem:[%s2229] sm:$0xff]
        %v2231 = vld [vmem:[%s2229 + $0x8] sm:$0xff]
        %v2232 = vld [vmem:[%s2229 + $0x10] sm:$0xff]
        %v2233 = vld [vmem:[%s2229 + $0x18] sm:$0xff]
        %v2234 = vld [vmem:[%s2229 + $0x20] sm:$0xff]
        %v2235 = vld [vmem:[%s2229 + $0x28] sm:$0xff]
        %v2236 = vld [vmem:[%s2229 + $0x30] sm:$0xff]
        %v2237 = vld [vmem:[%s2229 + $0x38] sm:$0xff]
        %v2238 = vld [vmem:[%s2229 + $0x40] sm:$0xff]
        %v2239 = vld [vmem:[%s2229 + $0x48] sm:$0xff]
        %v2240 = vld [vmem:[%s2229 + $0x50] sm:$0xff]
        %v2241 = vld [vmem:[%s2229 + $0x58] sm:$0xff]
        %v2242 = vld [vmem:[%s2229 + $0x60] sm:$0xff]
        %v2243 = vld [vmem:[%s2229 + $0x68] sm:$0xff]
        %v2244 = vld [vmem:[%s2229 + $0x70] sm:$0xff]
        %v2245 = vld [vmem:[%s2229 + $0x78] sm:$0xff]
        %2246 = vmatprep.subr.mxu0 0.0
        %2247 = vmatpush1.msra.mxu0 %v2245
        %2248 = vmatprep.subr.mxu0 0.0
        %2249 = vmatpush1.msra.mxu0 %v2244
        %2250 = vmatprep.subr.mxu0 0.0
        %2251 = vmatpush1.msra.mxu0 %v2243
        %2252 = vmatprep.subr.mxu0 0.0
        %2253 = vmatpush1.msra.mxu0 %v2242
        %2254 = vmatprep.subr.mxu0 0.0
        %2255 = vmatpush1.msra.mxu0 %v2241
        %2256 = vmatprep.subr.mxu0 0.0
        %2257 = vmatpush1.msra.mxu0 %v2240
        %2258 = vmatprep.subr.mxu0 0.0
        %2259 = vmatpush1.msra.mxu0 %v2239
        %2260 = vmatprep.subr.mxu0 0.0
        %2261 = vmatpush1.msra.mxu0 %v2238
        %2262 = vmatprep.subr.mxu0 0.0
        %2263 = vmatpush1.msra.mxu0 %v2237
        %2264 = vmatprep.subr.mxu0 0.0
        %2265 = vmatpush1.msra.mxu0 %v2236
        %2266 = vmatprep.subr.mxu0 0.0
        %2267 = vmatpush1.msra.mxu0 %v2235
        %2268 = vmatprep.subr.mxu0 0.0
        %2269 = vmatpush1.msra.mxu0 %v2234
        %2270 = vmatprep.subr.mxu0 0.0
        %2271 = vmatpush1.msra.mxu0 %v2233
        %2272 = vmatprep.subr.mxu0 0.0
        %2273 = vmatpush1.msra.mxu0 %v2232
        %2274 = vmatprep.subr.mxu0 0.0
        %2275 = vmatpush1.msra.mxu0 %v2231
        %2276 = vmatprep.subr.mxu0 0.0
        %2277 = vmatpush1.msra.mxu0 %v2230
        %2278 = vmatprep.subr.mxu0 0.0
        %2279 = vmatpush2.msra.mxu0 0.0
        %2280 = vmatprep.subr.mxu0 0.0
        %2281 = vmatpush2.msra.mxu0 0.0
        %2282 = vmatprep.subr.mxu0 0.0
        %2283 = vmatpush2.msra.mxu0 0.0
        %2284 = vmatprep.subr.mxu0 0.0
        %2285 = vmatpush2.msra.mxu0 0.0
        %2286 = vmatprep.subr.mxu0 0.0
        %2287 = vmatpush2.msra.mxu0 0.0
        %2288 = vmatprep.subr.mxu0 0.0
        %2289 = vmatpush2.msra.mxu0 0.0
        %2290 = vmatprep.subr.mxu0 0.0
        %2291 = vmatpush2.msra.mxu0 0.0
        %2292 = vmatprep.subr.mxu0 0.0
        %2293 = vmatpush2.msra.mxu0 0.0
        %2294 = vmatprep.subr.mxu0 0.0
        %2295 = vmatpush2.msra.mxu0 0.0
        %2296 = vmatprep.subr.mxu0 0.0
        %2297 = vmatpush2.msra.mxu0 0.0
        %2298 = vmatprep.subr.mxu0 0.0
        %2299 = vmatpush2.msra.mxu0 0.0
        %2300 = vmatprep.subr.mxu0 0.0
        %2301 = vmatpush2.msra.mxu0 0.0
        %2302 = vmatprep.subr.mxu0 0.0
        %2303 = vmatpush2.msra.mxu0 0.0
        %2304 = vmatprep.subr.mxu0 0.0
        %2305 = vmatpush2.msra.mxu0 0.0
        %2306 = vmatprep.subr.mxu0 0.0
        %2307 = vmatpush2.msra.mxu0 0.0
        %2308 = vmatprep.subr.mxu0 0.0
        %2309 = vmatpush2.msra.mxu0 0.0
        %2310 = vmatprep.mubr.f32.mxu0 0.0
        %2311 = vmatmul.mubr.f32.gmra.mxu0 %v2227
        %v2312 = vpop.f32.mrf.mxu0
        %v2313 = vadd.f32 0.0, %v2312
        %v2314 = vpop.f32.mrf.mxu0
        %2315 = vmatprep.mubr.f32.mxu0 0.0
        %2316 = vmatmul.mubr.f32.gmra.mxu0 %v2228
        %v2317 = vpop.f32.mrf.mxu0
        %v2318 = vadd.f32 0.0, %v2317
        %v2319 = vpop.f32.mrf.mxu0
        %2320 = vdwg.mxu0
        %2321 = vmatprep.subr.mxu0 0.0
        %2322 = vmatpush1.msra.mxu0 %v2226
        %2323 = vmatprep.subr.mxu0 0.0
        %2324 = vmatpush1.msra.mxu0 %v2225
        %2325 = vmatprep.subr.mxu0 0.0
        %2326 = vmatpush1.msra.mxu0 %v2224
        %2327 = vmatprep.subr.mxu0 0.0
        %2328 = vmatpush1.msra.mxu0 %v2223
        %2329 = vmatprep.subr.mxu0 0.0
        %2330 = vmatpush1.msra.mxu0 %v2222
        %2331 = vmatprep.subr.mxu0 0.0
        %2332 = vmatpush1.msra.mxu0 %v2221
        %2333 = vmatprep.subr.mxu0 0.0
        %2334 = vmatpush1.msra.mxu0 %v2220
        %2335 = vmatprep.subr.mxu0 0.0
        %2336 = vmatpush1.msra.mxu0 %v2219
        %2337 = vmatprep.subr.mxu0 0.0
        %2338 = vmatpush1.msra.mxu0 %v2218
        %2339 = vmatprep.subr.mxu0 0.0
        %2340 = vmatpush1.msra.mxu0 %v2217
        %2341 = vmatprep.subr.mxu0 0.0
        %2342 = vmatpush1.msra.mxu0 %v2216
        %2343 = vmatprep.subr.mxu0 0.0
        %2344 = vmatpush1.msra.mxu0 %v2215
        %2345 = vmatprep.subr.mxu0 0.0
        %2346 = vmatpush1.msra.mxu0 %v2214
        %2347 = vmatprep.subr.mxu0 0.0
        %2348 = vmatpush1.msra.mxu0 %v2213
        %2349 = vmatprep.subr.mxu0 0.0
        %2350 = vmatpush1.msra.mxu0 %v2212
        %2351 = vmatprep.subr.mxu0 0.0
        %2352 = vmatpush1.msra.mxu0 %v2211
        %2353 = vmatprep.subr.mxu0 0.0
        %2354 = vmatpush2.msra.mxu0 0.0
        %2355 = vmatprep.subr.mxu0 0.0
        %2356 = vmatpush2.msra.mxu0 0.0
        %2357 = vmatprep.subr.mxu0 0.0
        %2358 = vmatpush2.msra.mxu0 0.0
        %2359 = vmatprep.subr.mxu0 0.0
        %2360 = vmatpush2.msra.mxu0 0.0
        %2361 = vmatprep.subr.mxu0 0.0
        %2362 = vmatpush2.msra.mxu0 0.0
        %2363 = vmatprep.subr.mxu0 0.0
        %2364 = vmatpush2.msra.mxu0 0.0
        %2365 = vmatprep.subr.mxu0 0.0
        %2366 = vmatpush2.msra.mxu0 0.0
        %2367 = vmatprep.subr.mxu0 0.0
        %2368 = vmatpush2.msra.mxu0 0.0
        %2369 = vmatprep.subr.mxu0 0.0
        %2370 = vmatpush2.msra.mxu0 0.0
        %2371 = vmatprep.subr.mxu0 0.0
        %2372 = vmatpush2.msra.mxu0 0.0
        %2373 = vmatprep.subr.mxu0 0.0
        %2374 = vmatpush2.msra.mxu0 0.0
        %2375 = vmatprep.subr.mxu0 0.0
        %2376 = vmatpush2.msra.mxu0 0.0
        %2377 = vmatprep.subr.mxu0 0.0
        %2378 = vmatpush2.msra.mxu0 0.0
        %2379 = vmatprep.subr.mxu0 0.0
        %2380 = vmatpush2.msra.mxu0 0.0
        %2381 = vmatprep.subr.mxu0 0.0
        %2382 = vmatpush2.msra.mxu0 0.0
        %2383 = vmatprep.subr.mxu0 0.0
        %2384 = vmatpush2.msra.mxu0 0.0
        %2385 = vmatprep.mubr.f32.mxu0 0.0
        %2386 = vmatmul.mubr.f32.gmra.mxu0 %v2209
        %v2387 = vpop.f32.mrf.mxu0
        %v2388 = vadd.f32 %v2313, %v2387
        %v2389 = vpop.f32.mrf.mxu0
        %2390 = vmatprep.mubr.f32.mxu0 0.0
        %2391 = vmatmul.mubr.f32.gmra.mxu0 %v2210
        %v2392 = vpop.f32.mrf.mxu0
        %v2393 = vadd.f32 %v2318, %v2392
        %v2394 = vpop.f32.mrf.mxu0
        %2395 = vdwg.mxu0
        %v2396 = vld [vmem:[#allocation2 + $0x8] sm:$0xff]
        %v2397 = vld [vmem:[#allocation2 + $0x10] sm:$0xff]
        %s2398 = scalar_lea.vmem [#allocation12], 256
        %v2399 = vld [vmem:[%s2398] sm:$0xff]
        %v2400 = vld [vmem:[%s2398 + $0x8] sm:$0xff]
        %v2401 = vld [vmem:[%s2398 + $0x10] sm:$0xff]
        %v2402 = vld [vmem:[%s2398 + $0x18] sm:$0xff]
        %v2403 = vld [vmem:[%s2398 + $0x20] sm:$0xff]
        %v2404 = vld [vmem:[%s2398 + $0x28] sm:$0xff]
        %v2405 = vld [vmem:[%s2398 + $0x30] sm:$0xff]
        %v2406 = vld [vmem:[%s2398 + $0x38] sm:$0xff]
        %v2407 = vld [vmem:[%s2398 + $0x40] sm:$0xff]
        %v2408 = vld [vmem:[%s2398 + $0x48] sm:$0xff]
        %v2409 = vld [vmem:[%s2398 + $0x50] sm:$0xff]
        %v2410 = vld [vmem:[%s2398 + $0x58] sm:$0xff]
        %v2411 = vld [vmem:[%s2398 + $0x60] sm:$0xff]
        %v2412 = vld [vmem:[%s2398 + $0x68] sm:$0xff]
        %v2413 = vld [vmem:[%s2398 + $0x70] sm:$0xff]
        %v2414 = vld [vmem:[%s2398 + $0x78] sm:$0xff]
        %2415 = vmatprep.subr.mxu0 0.0
        %2416 = vmatpush1.msra.mxu0 %v2414
        %2417 = vmatprep.subr.mxu0 0.0
        %2418 = vmatpush1.msra.mxu0 %v2413
        %2419 = vmatprep.subr.mxu0 0.0
        %2420 = vmatpush1.msra.mxu0 %v2412
        %2421 = vmatprep.subr.mxu0 0.0
        %2422 = vmatpush1.msra.mxu0 %v2411
        %2423 = vmatprep.subr.mxu0 0.0
        %2424 = vmatpush1.msra.mxu0 %v2410
        %2425 = vmatprep.subr.mxu0 0.0
        %2426 = vmatpush1.msra.mxu0 %v2409
        %2427 = vmatprep.subr.mxu0 0.0
        %2428 = vmatpush1.msra.mxu0 %v2408
        %2429 = vmatprep.subr.mxu0 0.0
        %2430 = vmatpush1.msra.mxu0 %v2407
        %2431 = vmatprep.subr.mxu0 0.0
        %2432 = vmatpush1.msra.mxu0 %v2406
        %2433 = vmatprep.subr.mxu0 0.0
        %2434 = vmatpush1.msra.mxu0 %v2405
        %2435 = vmatprep.subr.mxu0 0.0
        %2436 = vmatpush1.msra.mxu0 %v2404
        %2437 = vmatprep.subr.mxu0 0.0
        %2438 = vmatpush1.msra.mxu0 %v2403
        %2439 = vmatprep.subr.mxu0 0.0
        %2440 = vmatpush1.msra.mxu0 %v2402
        %2441 = vmatprep.subr.mxu0 0.0
        %2442 = vmatpush1.msra.mxu0 %v2401
        %2443 = vmatprep.subr.mxu0 0.0
        %2444 = vmatpush1.msra.mxu0 %v2400
        %2445 = vmatprep.subr.mxu0 0.0
        %2446 = vmatpush1.msra.mxu0 %v2399
        %2447 = vmatprep.subr.mxu0 0.0
        %2448 = vmatpush2.msra.mxu0 0.0
        %2449 = vmatprep.subr.mxu0 0.0
        %2450 = vmatpush2.msra.mxu0 0.0
        %2451 = vmatprep.subr.mxu0 0.0
        %2452 = vmatpush2.msra.mxu0 0.0
        %2453 = vmatprep.subr.mxu0 0.0
        %2454 = vmatpush2.msra.mxu0 0.0
        %2455 = vmatprep.subr.mxu0 0.0
        %2456 = vmatpush2.msra.mxu0 0.0
        %2457 = vmatprep.subr.mxu0 0.0
        %2458 = vmatpush2.msra.mxu0 0.0
        %2459 = vmatprep.subr.mxu0 0.0
        %2460 = vmatpush2.msra.mxu0 0.0
        %2461 = vmatprep.subr.mxu0 0.0
        %2462 = vmatpush2.msra.mxu0 0.0
        %2463 = vmatprep.subr.mxu0 0.0
        %2464 = vmatpush2.msra.mxu0 0.0
        %2465 = vmatprep.subr.mxu0 0.0
        %2466 = vmatpush2.msra.mxu0 0.0
        %2467 = vmatprep.subr.mxu0 0.0
        %2468 = vmatpush2.msra.mxu0 0.0
        %2469 = vmatprep.subr.mxu0 0.0
        %2470 = vmatpush2.msra.mxu0 0.0
        %2471 = vmatprep.subr.mxu0 0.0
        %2472 = vmatpush2.msra.mxu0 0.0
        %2473 = vmatprep.subr.mxu0 0.0
        %2474 = vmatpush2.msra.mxu0 0.0
        %2475 = vmatprep.subr.mxu0 0.0
        %2476 = vmatpush2.msra.mxu0 0.0
        %2477 = vmatprep.subr.mxu0 0.0
        %2478 = vmatpush2.msra.mxu0 0.0
        %2479 = vmatprep.mubr.f32.mxu0 0.0
        %2480 = vmatmul.mubr.f32.gmra.mxu0 %v2396
        %v2481 = vpop.f32.mrf.mxu0
        %v2482 = vadd.f32 0.0, %v2481
        %v2483 = vpop.f32.mrf.mxu0
        %2484 = vmatprep.mubr.f32.mxu0 0.0
        %2485 = vmatmul.mubr.f32.gmra.mxu0 %v2397
        %v2486 = vpop.f32.mrf.mxu0
        %v2487 = vadd.f32 0.0, %v2486
        %v2488 = vpop.f32.mrf.mxu0
        %2489 = vdwg.mxu0
        %v2490 = vadd.f32 %v2388, %v2482
        %v2491 = vadd.f32 %v2393, %v2487
        %v2492 = vld [vmem:[#allocation2 + $0x9] sm:$0xff]
        %v2493 = vld [vmem:[#allocation2 + $0x11] sm:$0xff]
        %s2494 = scalar_lea.vmem [#allocation12], 384
        %v2495 = vld [vmem:[%s2494] sm:$0xff]
        %v2496 = vld [vmem:[%s2494 + $0x8] sm:$0xff]
        %v2497 = vld [vmem:[%s2494 + $0x10] sm:$0xff]
        %v2498 = vld [vmem:[%s2494 + $0x18] sm:$0xff]
        %v2499 = vld [vmem:[%s2494 + $0x20] sm:$0xff]
        %v2500 = vld [vmem:[%s2494 + $0x28] sm:$0xff]
        %v2501 = vld [vmem:[%s2494 + $0x30] sm:$0xff]
        %v2502 = vld [vmem:[%s2494 + $0x38] sm:$0xff]
        %v2503 = vld [vmem:[%s2494 + $0x40] sm:$0xff]
        %v2504 = vld [vmem:[%s2494 + $0x48] sm:$0xff]
        %v2505 = vld [vmem:[%s2494 + $0x50] sm:$0xff]
        %v2506 = vld [vmem:[%s2494 + $0x58] sm:$0xff]
        %v2507 = vld [vmem:[%s2494 + $0x60] sm:$0xff]
        %v2508 = vld [vmem:[%s2494 + $0x68] sm:$0xff]
        %v2509 = vld [vmem:[%s2494 + $0x70] sm:$0xff]
        %v2510 = vld [vmem:[%s2494 + $0x78] sm:$0xff]
        %2511 = vmatprep.subr.mxu0 0.0
        %2512 = vmatpush1.msra.mxu0 %v2510
        %2513 = vmatprep.subr.mxu0 0.0
        %2514 = vmatpush1.msra.mxu0 %v2509
        %2515 = vmatprep.subr.mxu0 0.0
        %2516 = vmatpush1.msra.mxu0 %v2508
        %2517 = vmatprep.subr.mxu0 0.0
        %2518 = vmatpush1.msra.mxu0 %v2507
        %2519 = vmatprep.subr.mxu0 0.0
        %2520 = vmatpush1.msra.mxu0 %v2506
        %2521 = vmatprep.subr.mxu0 0.0
        %2522 = vmatpush1.msra.mxu0 %v2505
        %2523 = vmatprep.subr.mxu0 0.0
        %2524 = vmatpush1.msra.mxu0 %v2504
        %2525 = vmatprep.subr.mxu0 0.0
        %2526 = vmatpush1.msra.mxu0 %v2503
        %2527 = vmatprep.subr.mxu0 0.0
        %2528 = vmatpush1.msra.mxu0 %v2502
        %2529 = vmatprep.subr.mxu0 0.0
        %2530 = vmatpush1.msra.mxu0 %v2501
        %2531 = vmatprep.subr.mxu0 0.0
        %2532 = vmatpush1.msra.mxu0 %v2500
        %2533 = vmatprep.subr.mxu0 0.0
        %2534 = vmatpush1.msra.mxu0 %v2499
        %2535 = vmatprep.subr.mxu0 0.0
        %2536 = vmatpush1.msra.mxu0 %v2498
        %2537 = vmatprep.subr.mxu0 0.0
        %2538 = vmatpush1.msra.mxu0 %v2497
        %2539 = vmatprep.subr.mxu0 0.0
        %2540 = vmatpush1.msra.mxu0 %v2496
        %2541 = vmatprep.subr.mxu0 0.0
        %2542 = vmatpush1.msra.mxu0 %v2495
        %2543 = vmatprep.subr.mxu0 0.0
        %2544 = vmatpush2.msra.mxu0 0.0
        %2545 = vmatprep.subr.mxu0 0.0
        %2546 = vmatpush2.msra.mxu0 0.0
        %2547 = vmatprep.subr.mxu0 0.0
        %2548 = vmatpush2.msra.mxu0 0.0
        %2549 = vmatprep.subr.mxu0 0.0
        %2550 = vmatpush2.msra.mxu0 0.0
        %2551 = vmatprep.subr.mxu0 0.0
        %2552 = vmatpush2.msra.mxu0 0.0
        %2553 = vmatprep.subr.mxu0 0.0
        %2554 = vmatpush2.msra.mxu0 0.0
        %2555 = vmatprep.subr.mxu0 0.0
        %2556 = vmatpush2.msra.mxu0 0.0
        %2557 = vmatprep.subr.mxu0 0.0
        %2558 = vmatpush2.msra.mxu0 0.0
        %2559 = vmatprep.subr.mxu0 0.0
        %2560 = vmatpush2.msra.mxu0 0.0
        %2561 = vmatprep.subr.mxu0 0.0
        %2562 = vmatpush2.msra.mxu0 0.0
        %2563 = vmatprep.subr.mxu0 0.0
        %2564 = vmatpush2.msra.mxu0 0.0
        %2565 = vmatprep.subr.mxu0 0.0
        %2566 = vmatpush2.msra.mxu0 0.0
        %2567 = vmatprep.subr.mxu0 0.0
        %2568 = vmatpush2.msra.mxu0 0.0
        %2569 = vmatprep.subr.mxu0 0.0
        %2570 = vmatpush2.msra.mxu0 0.0
        %2571 = vmatprep.subr.mxu0 0.0
        %2572 = vmatpush2.msra.mxu0 0.0
        %2573 = vmatprep.subr.mxu0 0.0
        %2574 = vmatpush2.msra.mxu0 0.0
        %2575 = vmatprep.mubr.f32.mxu0 0.0
        %2576 = vmatmul.mubr.f32.gmra.mxu0 %v2492
        %v2577 = vpop.f32.mrf.mxu0
        %v2578 = vadd.f32 0.0, %v2577
        %v2579 = vpop.f32.mrf.mxu0
        %2580 = vmatprep.mubr.f32.mxu0 0.0
        %2581 = vmatmul.mubr.f32.gmra.mxu0 %v2493
        %v2582 = vpop.f32.mrf.mxu0
        %v2583 = vadd.f32 0.0, %v2582
        %v2584 = vpop.f32.mrf.mxu0
        %2585 = vdwg.mxu0
        %v2586 = vadd.f32 %v2490, %v2578
        %v2587 = vadd.f32 %v2491, %v2583
        %v2588 = vld [vmem:[#allocation2 + $0xa] sm:$0xff]
        %v2589 = vld [vmem:[#allocation2 + $0x12] sm:$0xff]
        %s2590 = scalar_lea.vmem [#allocation12], 512
        %v2591 = vld [vmem:[%s2590] sm:$0xff]
        %v2592 = vld [vmem:[%s2590 + $0x8] sm:$0xff]
        %v2593 = vld [vmem:[%s2590 + $0x10] sm:$0xff]
        %v2594 = vld [vmem:[%s2590 + $0x18] sm:$0xff]
        %v2595 = vld [vmem:[%s2590 + $0x20] sm:$0xff]
        %v2596 = vld [vmem:[%s2590 + $0x28] sm:$0xff]
        %v2597 = vld [vmem:[%s2590 + $0x30] sm:$0xff]
        %v2598 = vld [vmem:[%s2590 + $0x38] sm:$0xff]
        %v2599 = vld [vmem:[%s2590 + $0x40] sm:$0xff]
        %v2600 = vld [vmem:[%s2590 + $0x48] sm:$0xff]
        %v2601 = vld [vmem:[%s2590 + $0x50] sm:$0xff]
        %v2602 = vld [vmem:[%s2590 + $0x58] sm:$0xff]
        %v2603 = vld [vmem:[%s2590 + $0x60] sm:$0xff]
        %v2604 = vld [vmem:[%s2590 + $0x68] sm:$0xff]
        %v2605 = vld [vmem:[%s2590 + $0x70] sm:$0xff]
        %v2606 = vld [vmem:[%s2590 + $0x78] sm:$0xff]
        %2607 = vmatprep.subr.mxu0 0.0
        %2608 = vmatpush1.msra.mxu0 %v2606
        %2609 = vmatprep.subr.mxu0 0.0
        %2610 = vmatpush1.msra.mxu0 %v2605
        %2611 = vmatprep.subr.mxu0 0.0
        %2612 = vmatpush1.msra.mxu0 %v2604
        %2613 = vmatprep.subr.mxu0 0.0
        %2614 = vmatpush1.msra.mxu0 %v2603
        %2615 = vmatprep.subr.mxu0 0.0
        %2616 = vmatpush1.msra.mxu0 %v2602
        %2617 = vmatprep.subr.mxu0 0.0
        %2618 = vmatpush1.msra.mxu0 %v2601
        %2619 = vmatprep.subr.mxu0 0.0
        %2620 = vmatpush1.msra.mxu0 %v2600
        %2621 = vmatprep.subr.mxu0 0.0
        %2622 = vmatpush1.msra.mxu0 %v2599
        %2623 = vmatprep.subr.mxu0 0.0
        %2624 = vmatpush1.msra.mxu0 %v2598
        %2625 = vmatprep.subr.mxu0 0.0
        %2626 = vmatpush1.msra.mxu0 %v2597
        %2627 = vmatprep.subr.mxu0 0.0
        %2628 = vmatpush1.msra.mxu0 %v2596
        %2629 = vmatprep.subr.mxu0 0.0
        %2630 = vmatpush1.msra.mxu0 %v2595
        %2631 = vmatprep.subr.mxu0 0.0
        %2632 = vmatpush1.msra.mxu0 %v2594
        %2633 = vmatprep.subr.mxu0 0.0
        %2634 = vmatpush1.msra.mxu0 %v2593
        %2635 = vmatprep.subr.mxu0 0.0
        %2636 = vmatpush1.msra.mxu0 %v2592
        %2637 = vmatprep.subr.mxu0 0.0
        %2638 = vmatpush1.msra.mxu0 %v2591
        %2639 = vmatprep.subr.mxu0 0.0
        %2640 = vmatpush2.msra.mxu0 0.0
        %2641 = vmatprep.subr.mxu0 0.0
        %2642 = vmatpush2.msra.mxu0 0.0
        %2643 = vmatprep.subr.mxu0 0.0
        %2644 = vmatpush2.msra.mxu0 0.0
        %2645 = vmatprep.subr.mxu0 0.0
        %2646 = vmatpush2.msra.mxu0 0.0
        %2647 = vmatprep.subr.mxu0 0.0
        %2648 = vmatpush2.msra.mxu0 0.0
        %2649 = vmatprep.subr.mxu0 0.0
        %2650 = vmatpush2.msra.mxu0 0.0
        %2651 = vmatprep.subr.mxu0 0.0
        %2652 = vmatpush2.msra.mxu0 0.0
        %2653 = vmatprep.subr.mxu0 0.0
        %2654 = vmatpush2.msra.mxu0 0.0
        %2655 = vmatprep.subr.mxu0 0.0
        %2656 = vmatpush2.msra.mxu0 0.0
        %2657 = vmatprep.subr.mxu0 0.0
        %2658 = vmatpush2.msra.mxu0 0.0
        %2659 = vmatprep.subr.mxu0 0.0
        %2660 = vmatpush2.msra.mxu0 0.0
        %2661 = vmatprep.subr.mxu0 0.0
        %2662 = vmatpush2.msra.mxu0 0.0
        %2663 = vmatprep.subr.mxu0 0.0
        %2664 = vmatpush2.msra.mxu0 0.0
        %2665 = vmatprep.subr.mxu0 0.0
        %2666 = vmatpush2.msra.mxu0 0.0
        %2667 = vmatprep.subr.mxu0 0.0
        %2668 = vmatpush2.msra.mxu0 0.0
        %2669 = vmatprep.subr.mxu0 0.0
        %2670 = vmatpush2.msra.mxu0 0.0
        %2671 = vmatprep.mubr.f32.mxu0 0.0
        %2672 = vmatmul.mubr.f32.gmra.mxu0 %v2588
        %v2673 = vpop.f32.mrf.mxu0
        %v2674 = vadd.f32 0.0, %v2673
        %v2675 = vpop.f32.mrf.mxu0
        %2676 = vmatprep.mubr.f32.mxu0 0.0
        %2677 = vmatmul.mubr.f32.gmra.mxu0 %v2589
        %v2678 = vpop.f32.mrf.mxu0
        %v2679 = vadd.f32 0.0, %v2678
        %v2680 = vpop.f32.mrf.mxu0
        %2681 = vdwg.mxu0
        %v2682 = vadd.f32 %v2586, %v2674
        %v2683 = vadd.f32 %v2587, %v2679
        %v2684 = vld [vmem:[%s10] sm:$0x1]
        %v2686 = vlaneseq
        %v2687 = vshrl.u32 %v2686, 7
        %v2688 = vsub.s32 0, %v2687
        %v2689 = vrot.slane %v2684, %v2688
        %v2691 = vadd.f32 %v2682, %v2689
        %v2692 = vadd.f32 %v2683, %v2689
        %v2693 = vmax.f32 %v2691, 0.0
        %v2694 = vmax.f32 %v2692, 0.0
        %2695 = vst [vmem:[#allocation2 + $0x8] sm:$0xff] %v2693
        %2696 = vst [vmem:[#allocation2 + $0x10] sm:$0xff] %v2694
        %v2697 = vld [vmem:[#allocation2 + $0x6] sm:$0xff]
        %v2698 = vld [vmem:[#allocation2 + $0xe] sm:$0xff]
        %v2699 = vld [vmem:[#allocation13] sm:$0xff]
        %v2700 = vld [vmem:[#allocation13 + $0x8] sm:$0xff]
        %v2701 = vld [vmem:[#allocation13 + $0x10] sm:$0xff]
        %v2702 = vld [vmem:[#allocation13 + $0x18] sm:$0xff]
        %v2703 = vld [vmem:[#allocation13 + $0x20] sm:$0xff]
        %v2704 = vld [vmem:[#allocation13 + $0x28] sm:$0xff]
        %v2705 = vld [vmem:[#allocation13 + $0x30] sm:$0xff]
        %v2706 = vld [vmem:[#allocation13 + $0x38] sm:$0xff]
        %v2707 = vld [vmem:[#allocation13 + $0x40] sm:$0xff]
        %v2708 = vld [vmem:[#allocation13 + $0x48] sm:$0xff]
        %v2709 = vld [vmem:[#allocation13 + $0x50] sm:$0xff]
        %v2710 = vld [vmem:[#allocation13 + $0x58] sm:$0xff]
        %v2711 = vld [vmem:[#allocation13 + $0x60] sm:$0xff]
        %v2712 = vld [vmem:[#allocation13 + $0x68] sm:$0xff]
        %v2713 = vld [vmem:[#allocation13 + $0x70] sm:$0xff]
        %v2714 = vld [vmem:[#allocation13 + $0x78] sm:$0xff]
        %v2715 = vld [vmem:[#allocation2 + $0x8] sm:$0xff]
        %v2716 = vld [vmem:[#allocation2 + $0x10] sm:$0xff]
        %s2717 = scalar_lea.vmem [#allocation13], 128
        %v2718 = vld [vmem:[%s2717] sm:$0xff]
        %v2719 = vld [vmem:[%s2717 + $0x8] sm:$0xff]
        %v2720 = vld [vmem:[%s2717 + $0x10] sm:$0xff]
        %v2721 = vld [vmem:[%s2717 + $0x18] sm:$0xff]
        %v2722 = vld [vmem:[%s2717 + $0x20] sm:$0xff]
        %v2723 = vld [vmem:[%s2717 + $0x28] sm:$0xff]
        %v2724 = vld [vmem:[%s2717 + $0x30] sm:$0xff]
        %v2725 = vld [vmem:[%s2717 + $0x38] sm:$0xff]
        %v2726 = vld [vmem:[%s2717 + $0x40] sm:$0xff]
        %v2727 = vld [vmem:[%s2717 + $0x48] sm:$0xff]
        %v2728 = vld [vmem:[%s2717 + $0x50] sm:$0xff]
        %v2729 = vld [vmem:[%s2717 + $0x58] sm:$0xff]
        %v2730 = vld [vmem:[%s2717 + $0x60] sm:$0xff]
        %v2731 = vld [vmem:[%s2717 + $0x68] sm:$0xff]
        %v2732 = vld [vmem:[%s2717 + $0x70] sm:$0xff]
        %v2733 = vld [vmem:[%s2717 + $0x78] sm:$0xff]
        %2734 = vmatprep.subr.mxu0 0.0
        %2735 = vmatpush1.msra.mxu0 %v2733
        %2736 = vmatprep.subr.mxu0 0.0
        %2737 = vmatpush1.msra.mxu0 %v2732
        %2738 = vmatprep.subr.mxu0 0.0
        %2739 = vmatpush1.msra.mxu0 %v2731
        %2740 = vmatprep.subr.mxu0 0.0
        %2741 = vmatpush1.msra.mxu0 %v2730
        %2742 = vmatprep.subr.mxu0 0.0
        %2743 = vmatpush1.msra.mxu0 %v2729
        %2744 = vmatprep.subr.mxu0 0.0
        %2745 = vmatpush1.msra.mxu0 %v2728
        %2746 = vmatprep.subr.mxu0 0.0
        %2747 = vmatpush1.msra.mxu0 %v2727
        %2748 = vmatprep.subr.mxu0 0.0
        %2749 = vmatpush1.msra.mxu0 %v2726
        %2750 = vmatprep.subr.mxu0 0.0
        %2751 = vmatpush1.msra.mxu0 %v2725
        %2752 = vmatprep.subr.mxu0 0.0
        %2753 = vmatpush1.msra.mxu0 %v2724
        %2754 = vmatprep.subr.mxu0 0.0
        %2755 = vmatpush1.msra.mxu0 %v2723
        %2756 = vmatprep.subr.mxu0 0.0
        %2757 = vmatpush1.msra.mxu0 %v2722
        %2758 = vmatprep.subr.mxu0 0.0
        %2759 = vmatpush1.msra.mxu0 %v2721
        %2760 = vmatprep.subr.mxu0 0.0
        %2761 = vmatpush1.msra.mxu0 %v2720
        %2762 = vmatprep.subr.mxu0 0.0
        %2763 = vmatpush1.msra.mxu0 %v2719
        %2764 = vmatprep.subr.mxu0 0.0
        %2765 = vmatpush1.msra.mxu0 %v2718
        %2766 = vmatprep.subr.mxu0 0.0
        %2767 = vmatpush2.msra.mxu0 0.0
        %2768 = vmatprep.subr.mxu0 0.0
        %2769 = vmatpush2.msra.mxu0 0.0
        %2770 = vmatprep.subr.mxu0 0.0
        %2771 = vmatpush2.msra.mxu0 0.0
        %2772 = vmatprep.subr.mxu0 0.0
        %2773 = vmatpush2.msra.mxu0 0.0
        %2774 = vmatprep.subr.mxu0 0.0
        %2775 = vmatpush2.msra.mxu0 0.0
        %2776 = vmatprep.subr.mxu0 0.0
        %2777 = vmatpush2.msra.mxu0 0.0
        %2778 = vmatprep.subr.mxu0 0.0
        %2779 = vmatpush2.msra.mxu0 0.0
        %2780 = vmatprep.subr.mxu0 0.0
        %2781 = vmatpush2.msra.mxu0 0.0
        %2782 = vmatprep.subr.mxu0 0.0
        %2783 = vmatpush2.msra.mxu0 0.0
        %2784 = vmatprep.subr.mxu0 0.0
        %2785 = vmatpush2.msra.mxu0 0.0
        %2786 = vmatprep.subr.mxu0 0.0
        %2787 = vmatpush2.msra.mxu0 0.0
        %2788 = vmatprep.subr.mxu0 0.0
        %2789 = vmatpush2.msra.mxu0 0.0
        %2790 = vmatprep.subr.mxu0 0.0
        %2791 = vmatpush2.msra.mxu0 0.0
        %2792 = vmatprep.subr.mxu0 0.0
        %2793 = vmatpush2.msra.mxu0 0.0
        %2794 = vmatprep.subr.mxu0 0.0
        %2795 = vmatpush2.msra.mxu0 0.0
        %2796 = vmatprep.subr.mxu0 0.0
        %2797 = vmatpush2.msra.mxu0 0.0
        %2798 = vmatprep.mubr.f32.mxu0 0.0
        %2799 = vmatmul.mubr.f32.gmra.mxu0 %v2715
        %v2800 = vpop.f32.mrf.mxu0
        %v2801 = vadd.f32 0.0, %v2800
        %v2802 = vpop.f32.mrf.mxu0
        %2803 = vmatprep.mubr.f32.mxu0 0.0
        %2804 = vmatmul.mubr.f32.gmra.mxu0 %v2716
        %v2805 = vpop.f32.mrf.mxu0
        %v2806 = vadd.f32 0.0, %v2805
        %v2807 = vpop.f32.mrf.mxu0
        %2808 = vdwg.mxu0
        %2809 = vmatprep.subr.mxu0 0.0
        %2810 = vmatpush1.msra.mxu0 %v2714
        %2811 = vmatprep.subr.mxu0 0.0
        %2812 = vmatpush1.msra.mxu0 %v2713
        %2813 = vmatprep.subr.mxu0 0.0
        %2814 = vmatpush1.msra.mxu0 %v2712
        %2815 = vmatprep.subr.mxu0 0.0
        %2816 = vmatpush1.msra.mxu0 %v2711
        %2817 = vmatprep.subr.mxu0 0.0
        %2818 = vmatpush1.msra.mxu0 %v2710
        %2819 = vmatprep.subr.mxu0 0.0
        %2820 = vmatpush1.msra.mxu0 %v2709
        %2821 = vmatprep.subr.mxu0 0.0
        %2822 = vmatpush1.msra.mxu0 %v2708
        %2823 = vmatprep.subr.mxu0 0.0
        %2824 = vmatpush1.msra.mxu0 %v2707
        %2825 = vmatprep.subr.mxu0 0.0
        %2826 = vmatpush1.msra.mxu0 %v2706
        %2827 = vmatprep.subr.mxu0 0.0
        %2828 = vmatpush1.msra.mxu0 %v2705
        %2829 = vmatprep.subr.mxu0 0.0
        %2830 = vmatpush1.msra.mxu0 %v2704
        %2831 = vmatprep.subr.mxu0 0.0
        %2832 = vmatpush1.msra.mxu0 %v2703
        %2833 = vmatprep.subr.mxu0 0.0
        %2834 = vmatpush1.msra.mxu0 %v2702
        %2835 = vmatprep.subr.mxu0 0.0
        %2836 = vmatpush1.msra.mxu0 %v2701
        %2837 = vmatprep.subr.mxu0 0.0
        %2838 = vmatpush1.msra.mxu0 %v2700
        %2839 = vmatprep.subr.mxu0 0.0
        %2840 = vmatpush1.msra.mxu0 %v2699
        %2841 = vmatprep.subr.mxu0 0.0
        %2842 = vmatpush2.msra.mxu0 0.0
        %2843 = vmatprep.subr.mxu0 0.0
        %2844 = vmatpush2.msra.mxu0 0.0
        %2845 = vmatprep.subr.mxu0 0.0
        %2846 = vmatpush2.msra.mxu0 0.0
        %2847 = vmatprep.subr.mxu0 0.0
        %2848 = vmatpush2.msra.mxu0 0.0
        %2849 = vmatprep.subr.mxu0 0.0
        %2850 = vmatpush2.msra.mxu0 0.0
        %2851 = vmatprep.subr.mxu0 0.0
        %2852 = vmatpush2.msra.mxu0 0.0
        %2853 = vmatprep.subr.mxu0 0.0
        %2854 = vmatpush2.msra.mxu0 0.0
        %2855 = vmatprep.subr.mxu0 0.0
        %2856 = vmatpush2.msra.mxu0 0.0
        %2857 = vmatprep.subr.mxu0 0.0
        %2858 = vmatpush2.msra.mxu0 0.0
        %2859 = vmatprep.subr.mxu0 0.0
        %2860 = vmatpush2.msra.mxu0 0.0
        %2861 = vmatprep.subr.mxu0 0.0
        %2862 = vmatpush2.msra.mxu0 0.0
        %2863 = vmatprep.subr.mxu0 0.0
        %2864 = vmatpush2.msra.mxu0 0.0
        %2865 = vmatprep.subr.mxu0 0.0
        %2866 = vmatpush2.msra.mxu0 0.0
        %2867 = vmatprep.subr.mxu0 0.0
        %2868 = vmatpush2.msra.mxu0 0.0
        %2869 = vmatprep.subr.mxu0 0.0
        %2870 = vmatpush2.msra.mxu0 0.0
        %2871 = vmatprep.subr.mxu0 0.0
        %2872 = vmatpush2.msra.mxu0 0.0
        %2873 = vmatprep.mubr.f32.mxu0 0.0
        %2874 = vmatmul.mubr.f32.gmra.mxu0 %v2697
        %v2875 = vpop.f32.mrf.mxu0
        %v2876 = vadd.f32 %v2801, %v2875
        %v2877 = vpop.f32.mrf.mxu0
        %2878 = vmatprep.mubr.f32.mxu0 0.0
        %2879 = vmatmul.mubr.f32.gmra.mxu0 %v2698
        %v2880 = vpop.f32.mrf.mxu0
        %v2881 = vadd.f32 %v2806, %v2880
        %v2882 = vpop.f32.mrf.mxu0
        %2883 = vdwg.mxu0
        %v2884 = vld [vmem:[#allocation2 + $0xa] sm:$0xff]
        %v2885 = vld [vmem:[#allocation2 + $0x12] sm:$0xff]
        %s2886 = scalar_lea.vmem [#allocation13], 256
        %v2887 = vld [vmem:[%s2886] sm:$0xff]
        %v2888 = vld [vmem:[%s2886 + $0x8] sm:$0xff]
        %v2889 = vld [vmem:[%s2886 + $0x10] sm:$0xff]
        %v2890 = vld [vmem:[%s2886 + $0x18] sm:$0xff]
        %v2891 = vld [vmem:[%s2886 + $0x20] sm:$0xff]
        %v2892 = vld [vmem:[%s2886 + $0x28] sm:$0xff]
        %v2893 = vld [vmem:[%s2886 + $0x30] sm:$0xff]
        %v2894 = vld [vmem:[%s2886 + $0x38] sm:$0xff]
        %v2895 = vld [vmem:[%s2886 + $0x40] sm:$0xff]
        %v2896 = vld [vmem:[%s2886 + $0x48] sm:$0xff]
        %v2897 = vld [vmem:[%s2886 + $0x50] sm:$0xff]
        %v2898 = vld [vmem:[%s2886 + $0x58] sm:$0xff]
        %v2899 = vld [vmem:[%s2886 + $0x60] sm:$0xff]
        %v2900 = vld [vmem:[%s2886 + $0x68] sm:$0xff]
        %v2901 = vld [vmem:[%s2886 + $0x70] sm:$0xff]
        %v2902 = vld [vmem:[%s2886 + $0x78] sm:$0xff]
        %2903 = vmatprep.subr.mxu0 0.0
        %2904 = vmatpush1.msra.mxu0 %v2902
        %2905 = vmatprep.subr.mxu0 0.0
        %2906 = vmatpush1.msra.mxu0 %v2901
        %2907 = vmatprep.subr.mxu0 0.0
        %2908 = vmatpush1.msra.mxu0 %v2900
        %2909 = vmatprep.subr.mxu0 0.0
        %2910 = vmatpush1.msra.mxu0 %v2899
        %2911 = vmatprep.subr.mxu0 0.0
        %2912 = vmatpush1.msra.mxu0 %v2898
        %2913 = vmatprep.subr.mxu0 0.0
        %2914 = vmatpush1.msra.mxu0 %v2897
        %2915 = vmatprep.subr.mxu0 0.0
        %2916 = vmatpush1.msra.mxu0 %v2896
        %2917 = vmatprep.subr.mxu0 0.0
        %2918 = vmatpush1.msra.mxu0 %v2895
        %2919 = vmatprep.subr.mxu0 0.0
        %2920 = vmatpush1.msra.mxu0 %v2894
        %2921 = vmatprep.subr.mxu0 0.0
        %2922 = vmatpush1.msra.mxu0 %v2893
        %2923 = vmatprep.subr.mxu0 0.0
        %2924 = vmatpush1.msra.mxu0 %v2892
        %2925 = vmatprep.subr.mxu0 0.0
        %2926 = vmatpush1.msra.mxu0 %v2891
        %2927 = vmatprep.subr.mxu0 0.0
        %2928 = vmatpush1.msra.mxu0 %v2890
        %2929 = vmatprep.subr.mxu0 0.0
        %2930 = vmatpush1.msra.mxu0 %v2889
        %2931 = vmatprep.subr.mxu0 0.0
        %2932 = vmatpush1.msra.mxu0 %v2888
        %2933 = vmatprep.subr.mxu0 0.0
        %2934 = vmatpush1.msra.mxu0 %v2887
        %2935 = vmatprep.subr.mxu0 0.0
        %2936 = vmatpush2.msra.mxu0 0.0
        %2937 = vmatprep.subr.mxu0 0.0
        %2938 = vmatpush2.msra.mxu0 0.0
        %2939 = vmatprep.subr.mxu0 0.0
        %2940 = vmatpush2.msra.mxu0 0.0
        %2941 = vmatprep.subr.mxu0 0.0
        %2942 = vmatpush2.msra.mxu0 0.0
        %2943 = vmatprep.subr.mxu0 0.0
        %2944 = vmatpush2.msra.mxu0 0.0
        %2945 = vmatprep.subr.mxu0 0.0
        %2946 = vmatpush2.msra.mxu0 0.0
        %2947 = vmatprep.subr.mxu0 0.0
        %2948 = vmatpush2.msra.mxu0 0.0
        %2949 = vmatprep.subr.mxu0 0.0
        %2950 = vmatpush2.msra.mxu0 0.0
        %2951 = vmatprep.subr.mxu0 0.0
        %2952 = vmatpush2.msra.mxu0 0.0
        %2953 = vmatprep.subr.mxu0 0.0
        %2954 = vmatpush2.msra.mxu0 0.0
        %2955 = vmatprep.subr.mxu0 0.0
        %2956 = vmatpush2.msra.mxu0 0.0
        %2957 = vmatprep.subr.mxu0 0.0
        %2958 = vmatpush2.msra.mxu0 0.0
        %2959 = vmatprep.subr.mxu0 0.0
        %2960 = vmatpush2.msra.mxu0 0.0
        %2961 = vmatprep.subr.mxu0 0.0
        %2962 = vmatpush2.msra.mxu0 0.0
        %2963 = vmatprep.subr.mxu0 0.0
        %2964 = vmatpush2.msra.mxu0 0.0
        %2965 = vmatprep.subr.mxu0 0.0
        %2966 = vmatpush2.msra.mxu0 0.0
        %2967 = vmatprep.mubr.f32.mxu0 0.0
        %2968 = vmatmul.mubr.f32.gmra.mxu0 %v2884
        %v2969 = vpop.f32.mrf.mxu0
        %v2970 = vadd.f32 0.0, %v2969
        %v2971 = vpop.f32.mrf.mxu0
        %2972 = vmatprep.mubr.f32.mxu0 0.0
        %2973 = vmatmul.mubr.f32.gmra.mxu0 %v2885
        %v2974 = vpop.f32.mrf.mxu0
        %v2975 = vadd.f32 0.0, %v2974
        %v2976 = vpop.f32.mrf.mxu0
        %2977 = vdwg.mxu0
        %v2978 = vadd.f32 %v2876, %v2970
        %v2979 = vadd.f32 %v2881, %v2975
        %v2980 = vld [vmem:[%s12] sm:$0x1]
        %v2982 = vlaneseq
        %v2983 = vshrl.u32 %v2982, 7
        %v2984 = vsub.s32 0, %v2983
        %v2985 = vrot.slane %v2980, %v2984
        %v2987 = vadd.f32 %v2978, %v2985
        %v2988 = vadd.f32 %v2979, %v2985
        %v2989 = vmax.f32 %v2987, 0.0
        %v2990 = vmax.f32 %v2988, 0.0
        %2991 = vst [vmem:[#allocation2 + $0x8] sm:$0xff] %v2989
        %2992 = vst [vmem:[#allocation2 + $0x10] sm:$0xff] %v2990
        %v2993 = vld [vmem:[#allocation2 + $0x4] sm:$0xff]
        %v2994 = vld [vmem:[#allocation2 + $0xc] sm:$0xff]
        %v2995 = vld [vmem:[#allocation15] sm:$0xff]
        %v2996 = vld [vmem:[#allocation15 + $0x8] sm:$0xff]
        %v2997 = vld [vmem:[#allocation15 + $0x10] sm:$0xff]
        %v2998 = vld [vmem:[#allocation15 + $0x18] sm:$0xff]
        %v2999 = vld [vmem:[#allocation15 + $0x20] sm:$0xff]
        %v3000 = vld [vmem:[#allocation15 + $0x28] sm:$0xff]
        %v3001 = vld [vmem:[#allocation15 + $0x30] sm:$0xff]
        %v3002 = vld [vmem:[#allocation15 + $0x38] sm:$0xff]
        %v3003 = vld [vmem:[#allocation15 + $0x40] sm:$0xff]
        %v3004 = vld [vmem:[#allocation15 + $0x48] sm:$0xff]
        %v3005 = vld [vmem:[#allocation15 + $0x50] sm:$0xff]
        %v3006 = vld [vmem:[#allocation15 + $0x58] sm:$0xff]
        %v3007 = vld [vmem:[#allocation15 + $0x60] sm:$0xff]
        %v3008 = vld [vmem:[#allocation15 + $0x68] sm:$0xff]
        %v3009 = vld [vmem:[#allocation15 + $0x70] sm:$0xff]
        %v3010 = vld [vmem:[#allocation15 + $0x78] sm:$0xff]
        %v3011 = vld [vmem:[#allocation2 + $0x6] sm:$0xff]
        %v3012 = vld [vmem:[#allocation2 + $0xe] sm:$0xff]
        %s3013 = scalar_lea.vmem [#allocation15], 128
        %v3014 = vld [vmem:[%s3013] sm:$0xff]
        %v3015 = vld [vmem:[%s3013 + $0x8] sm:$0xff]
        %v3016 = vld [vmem:[%s3013 + $0x10] sm:$0xff]
        %v3017 = vld [vmem:[%s3013 + $0x18] sm:$0xff]
        %v3018 = vld [vmem:[%s3013 + $0x20] sm:$0xff]
        %v3019 = vld [vmem:[%s3013 + $0x28] sm:$0xff]
        %v3020 = vld [vmem:[%s3013 + $0x30] sm:$0xff]
        %v3021 = vld [vmem:[%s3013 + $0x38] sm:$0xff]
        %v3022 = vld [vmem:[%s3013 + $0x40] sm:$0xff]
        %v3023 = vld [vmem:[%s3013 + $0x48] sm:$0xff]
        %v3024 = vld [vmem:[%s3013 + $0x50] sm:$0xff]
        %v3025 = vld [vmem:[%s3013 + $0x58] sm:$0xff]
        %v3026 = vld [vmem:[%s3013 + $0x60] sm:$0xff]
        %v3027 = vld [vmem:[%s3013 + $0x68] sm:$0xff]
        %v3028 = vld [vmem:[%s3013 + $0x70] sm:$0xff]
        %v3029 = vld [vmem:[%s3013 + $0x78] sm:$0xff]
        %3030 = vmatprep.subr.mxu0 0.0
        %3031 = vmatpush1.msra.mxu0 %v3029
        %3032 = vmatprep.subr.mxu0 0.0
        %3033 = vmatpush1.msra.mxu0 %v3028
        %3034 = vmatprep.subr.mxu0 0.0
        %3035 = vmatpush1.msra.mxu0 %v3027
        %3036 = vmatprep.subr.mxu0 0.0
        %3037 = vmatpush1.msra.mxu0 %v3026
        %3038 = vmatprep.subr.mxu0 0.0
        %3039 = vmatpush1.msra.mxu0 %v3025
        %3040 = vmatprep.subr.mxu0 0.0
        %3041 = vmatpush1.msra.mxu0 %v3024
        %3042 = vmatprep.subr.mxu0 0.0
        %3043 = vmatpush1.msra.mxu0 %v3023
        %3044 = vmatprep.subr.mxu0 0.0
        %3045 = vmatpush1.msra.mxu0 %v3022
        %3046 = vmatprep.subr.mxu0 0.0
        %3047 = vmatpush1.msra.mxu0 %v3021
        %3048 = vmatprep.subr.mxu0 0.0
        %3049 = vmatpush1.msra.mxu0 %v3020
        %3050 = vmatprep.subr.mxu0 0.0
        %3051 = vmatpush1.msra.mxu0 %v3019
        %3052 = vmatprep.subr.mxu0 0.0
        %3053 = vmatpush1.msra.mxu0 %v3018
        %3054 = vmatprep.subr.mxu0 0.0
        %3055 = vmatpush1.msra.mxu0 %v3017
        %3056 = vmatprep.subr.mxu0 0.0
        %3057 = vmatpush1.msra.mxu0 %v3016
        %3058 = vmatprep.subr.mxu0 0.0
        %3059 = vmatpush1.msra.mxu0 %v3015
        %3060 = vmatprep.subr.mxu0 0.0
        %3061 = vmatpush1.msra.mxu0 %v3014
        %3062 = vmatprep.subr.mxu0 0.0
        %3063 = vmatpush2.msra.mxu0 0.0
        %3064 = vmatprep.subr.mxu0 0.0
        %3065 = vmatpush2.msra.mxu0 0.0
        %3066 = vmatprep.subr.mxu0 0.0
        %3067 = vmatpush2.msra.mxu0 0.0
        %3068 = vmatprep.subr.mxu0 0.0
        %3069 = vmatpush2.msra.mxu0 0.0
        %3070 = vmatprep.subr.mxu0 0.0
        %3071 = vmatpush2.msra.mxu0 0.0
        %3072 = vmatprep.subr.mxu0 0.0
        %3073 = vmatpush2.msra.mxu0 0.0
        %3074 = vmatprep.subr.mxu0 0.0
        %3075 = vmatpush2.msra.mxu0 0.0
        %3076 = vmatprep.subr.mxu0 0.0
        %3077 = vmatpush2.msra.mxu0 0.0
        %3078 = vmatprep.subr.mxu0 0.0
        %3079 = vmatpush2.msra.mxu0 0.0
        %3080 = vmatprep.subr.mxu0 0.0
        %3081 = vmatpush2.msra.mxu0 0.0
        %3082 = vmatprep.subr.mxu0 0.0
        %3083 = vmatpush2.msra.mxu0 0.0
        %3084 = vmatprep.subr.mxu0 0.0
        %3085 = vmatpush2.msra.mxu0 0.0
        %3086 = vmatprep.subr.mxu0 0.0
        %3087 = vmatpush2.msra.mxu0 0.0
        %3088 = vmatprep.subr.mxu0 0.0
        %3089 = vmatpush2.msra.mxu0 0.0
        %3090 = vmatprep.subr.mxu0 0.0
        %3091 = vmatpush2.msra.mxu0 0.0
        %3092 = vmatprep.subr.mxu0 0.0
        %3093 = vmatpush2.msra.mxu0 0.0
        %3094 = vmatprep.mubr.f32.mxu0 0.0
        %3095 = vmatmul.mubr.f32.gmra.mxu0 %v3011
        %v3096 = vpop.f32.mrf.mxu0
        %v3097 = vadd.f32 0.0, %v3096
        %v3098 = vpop.f32.mrf.mxu0
        %3099 = vmatprep.mubr.f32.mxu0 0.0
        %3100 = vmatmul.mubr.f32.gmra.mxu0 %v3012
        %v3101 = vpop.f32.mrf.mxu0
        %v3102 = vadd.f32 0.0, %v3101
        %v3103 = vpop.f32.mrf.mxu0
        %3104 = vdwg.mxu0
        %3105 = vmatprep.subr.mxu0 0.0
        %3106 = vmatpush1.msra.mxu0 %v3010
        %3107 = vmatprep.subr.mxu0 0.0
        %3108 = vmatpush1.msra.mxu0 %v3009
        %3109 = vmatprep.subr.mxu0 0.0
        %3110 = vmatpush1.msra.mxu0 %v3008
        %3111 = vmatprep.subr.mxu0 0.0
        %3112 = vmatpush1.msra.mxu0 %v3007
        %3113 = vmatprep.subr.mxu0 0.0
        %3114 = vmatpush1.msra.mxu0 %v3006
        %3115 = vmatprep.subr.mxu0 0.0
        %3116 = vmatpush1.msra.mxu0 %v3005
        %3117 = vmatprep.subr.mxu0 0.0
        %3118 = vmatpush1.msra.mxu0 %v3004
        %3119 = vmatprep.subr.mxu0 0.0
        %3120 = vmatpush1.msra.mxu0 %v3003
        %3121 = vmatprep.subr.mxu0 0.0
        %3122 = vmatpush1.msra.mxu0 %v3002
        %3123 = vmatprep.subr.mxu0 0.0
        %3124 = vmatpush1.msra.mxu0 %v3001
        %3125 = vmatprep.subr.mxu0 0.0
        %3126 = vmatpush1.msra.mxu0 %v3000
        %3127 = vmatprep.subr.mxu0 0.0
        %3128 = vmatpush1.msra.mxu0 %v2999
        %3129 = vmatprep.subr.mxu0 0.0
        %3130 = vmatpush1.msra.mxu0 %v2998
        %3131 = vmatprep.subr.mxu0 0.0
        %3132 = vmatpush1.msra.mxu0 %v2997
        %3133 = vmatprep.subr.mxu0 0.0
        %3134 = vmatpush1.msra.mxu0 %v2996
        %3135 = vmatprep.subr.mxu0 0.0
        %3136 = vmatpush1.msra.mxu0 %v2995
        %3137 = vmatprep.subr.mxu0 0.0
        %3138 = vmatpush2.msra.mxu0 0.0
        %3139 = vmatprep.subr.mxu0 0.0
        %3140 = vmatpush2.msra.mxu0 0.0
        %3141 = vmatprep.subr.mxu0 0.0
        %3142 = vmatpush2.msra.mxu0 0.0
        %3143 = vmatprep.subr.mxu0 0.0
        %3144 = vmatpush2.msra.mxu0 0.0
        %3145 = vmatprep.subr.mxu0 0.0
        %3146 = vmatpush2.msra.mxu0 0.0
        %3147 = vmatprep.subr.mxu0 0.0
        %3148 = vmatpush2.msra.mxu0 0.0
        %3149 = vmatprep.subr.mxu0 0.0
        %3150 = vmatpush2.msra.mxu0 0.0
        %3151 = vmatprep.subr.mxu0 0.0
        %3152 = vmatpush2.msra.mxu0 0.0
        %3153 = vmatprep.subr.mxu0 0.0
        %3154 = vmatpush2.msra.mxu0 0.0
        %3155 = vmatprep.subr.mxu0 0.0
        %3156 = vmatpush2.msra.mxu0 0.0
        %3157 = vmatprep.subr.mxu0 0.0
        %3158 = vmatpush2.msra.mxu0 0.0
        %3159 = vmatprep.subr.mxu0 0.0
        %3160 = vmatpush2.msra.mxu0 0.0
        %3161 = vmatprep.subr.mxu0 0.0
        %3162 = vmatpush2.msra.mxu0 0.0
        %3163 = vmatprep.subr.mxu0 0.0
        %3164 = vmatpush2.msra.mxu0 0.0
        %3165 = vmatprep.subr.mxu0 0.0
        %3166 = vmatpush2.msra.mxu0 0.0
        %3167 = vmatprep.subr.mxu0 0.0
        %3168 = vmatpush2.msra.mxu0 0.0
        %3169 = vmatprep.mubr.f32.mxu0 0.0
        %3170 = vmatmul.mubr.f32.gmra.mxu0 %v2993
        %v3171 = vpop.f32.mrf.mxu0
        %v3172 = vadd.f32 %v3097, %v3171
        %v3173 = vpop.f32.mrf.mxu0
        %3174 = vmatprep.mubr.f32.mxu0 0.0
        %3175 = vmatmul.mubr.f32.gmra.mxu0 %v2994
        %v3176 = vpop.f32.mrf.mxu0
        %v3177 = vadd.f32 %v3102, %v3176
        %v3178 = vpop.f32.mrf.mxu0
        %3179 = vdwg.mxu0
        %v3180 = vld [vmem:[#allocation2 + $0x8] sm:$0xff]
        %v3181 = vld [vmem:[#allocation2 + $0x10] sm:$0xff]
        %s3182 = scalar_lea.vmem [#allocation15], 256
        %v3183 = vld [vmem:[%s3182] sm:$0xff]
        %v3184 = vld [vmem:[%s3182 + $0x8] sm:$0xff]
        %v3185 = vld [vmem:[%s3182 + $0x10] sm:$0xff]
        %v3186 = vld [vmem:[%s3182 + $0x18] sm:$0xff]
        %v3187 = vld [vmem:[%s3182 + $0x20] sm:$0xff]
        %v3188 = vld [vmem:[%s3182 + $0x28] sm:$0xff]
        %v3189 = vld [vmem:[%s3182 + $0x30] sm:$0xff]
        %v3190 = vld [vmem:[%s3182 + $0x38] sm:$0xff]
        %v3191 = vld [vmem:[%s3182 + $0x40] sm:$0xff]
        %v3192 = vld [vmem:[%s3182 + $0x48] sm:$0xff]
        %v3193 = vld [vmem:[%s3182 + $0x50] sm:$0xff]
        %v3194 = vld [vmem:[%s3182 + $0x58] sm:$0xff]
        %v3195 = vld [vmem:[%s3182 + $0x60] sm:$0xff]
        %v3196 = vld [vmem:[%s3182 + $0x68] sm:$0xff]
        %v3197 = vld [vmem:[%s3182 + $0x70] sm:$0xff]
        %v3198 = vld [vmem:[%s3182 + $0x78] sm:$0xff]
        %3199 = vmatprep.subr.mxu0 0.0
        %3200 = vmatpush1.msra.mxu0 %v3198
        %3201 = vmatprep.subr.mxu0 0.0
        %3202 = vmatpush1.msra.mxu0 %v3197
        %3203 = vmatprep.subr.mxu0 0.0
        %3204 = vmatpush1.msra.mxu0 %v3196
        %3205 = vmatprep.subr.mxu0 0.0
        %3206 = vmatpush1.msra.mxu0 %v3195
        %3207 = vmatprep.subr.mxu0 0.0
        %3208 = vmatpush1.msra.mxu0 %v3194
        %3209 = vmatprep.subr.mxu0 0.0
        %3210 = vmatpush1.msra.mxu0 %v3193
        %3211 = vmatprep.subr.mxu0 0.0
        %3212 = vmatpush1.msra.mxu0 %v3192
        %3213 = vmatprep.subr.mxu0 0.0
        %3214 = vmatpush1.msra.mxu0 %v3191
        %3215 = vmatprep.subr.mxu0 0.0
        %3216 = vmatpush1.msra.mxu0 %v3190
        %3217 = vmatprep.subr.mxu0 0.0
        %3218 = vmatpush1.msra.mxu0 %v3189
        %3219 = vmatprep.subr.mxu0 0.0
        %3220 = vmatpush1.msra.mxu0 %v3188
        %3221 = vmatprep.subr.mxu0 0.0
        %3222 = vmatpush1.msra.mxu0 %v3187
        %3223 = vmatprep.subr.mxu0 0.0
        %3224 = vmatpush1.msra.mxu0 %v3186
        %3225 = vmatprep.subr.mxu0 0.0
        %3226 = vmatpush1.msra.mxu0 %v3185
        %3227 = vmatprep.subr.mxu0 0.0
        %3228 = vmatpush1.msra.mxu0 %v3184
        %3229 = vmatprep.subr.mxu0 0.0
        %3230 = vmatpush1.msra.mxu0 %v3183
        %3231 = vmatprep.subr.mxu0 0.0
        %3232 = vmatpush2.msra.mxu0 0.0
        %3233 = vmatprep.subr.mxu0 0.0
        %3234 = vmatpush2.msra.mxu0 0.0
        %3235 = vmatprep.subr.mxu0 0.0
        %3236 = vmatpush2.msra.mxu0 0.0
        %3237 = vmatprep.subr.mxu0 0.0
        %3238 = vmatpush2.msra.mxu0 0.0
        %3239 = vmatprep.subr.mxu0 0.0
        %3240 = vmatpush2.msra.mxu0 0.0
        %3241 = vmatprep.subr.mxu0 0.0
        %3242 = vmatpush2.msra.mxu0 0.0
        %3243 = vmatprep.subr.mxu0 0.0
        %3244 = vmatpush2.msra.mxu0 0.0
        %3245 = vmatprep.subr.mxu0 0.0
        %3246 = vmatpush2.msra.mxu0 0.0
        %3247 = vmatprep.subr.mxu0 0.0
        %3248 = vmatpush2.msra.mxu0 0.0
        %3249 = vmatprep.subr.mxu0 0.0
        %3250 = vmatpush2.msra.mxu0 0.0
        %3251 = vmatprep.subr.mxu0 0.0
        %3252 = vmatpush2.msra.mxu0 0.0
        %3253 = vmatprep.subr.mxu0 0.0
        %3254 = vmatpush2.msra.mxu0 0.0
        %3255 = vmatprep.subr.mxu0 0.0
        %3256 = vmatpush2.msra.mxu0 0.0
        %3257 = vmatprep.subr.mxu0 0.0
        %3258 = vmatpush2.msra.mxu0 0.0
        %3259 = vmatprep.subr.mxu0 0.0
        %3260 = vmatpush2.msra.mxu0 0.0
        %3261 = vmatprep.subr.mxu0 0.0
        %3262 = vmatpush2.msra.mxu0 0.0
        %3263 = vmatprep.mubr.f32.mxu0 0.0
        %3264 = vmatmul.mubr.f32.gmra.mxu0 %v3180
        %v3265 = vpop.f32.mrf.mxu0
        %v3266 = vadd.f32 0.0, %v3265
        %v3267 = vpop.f32.mrf.mxu0
        %3268 = vmatprep.mubr.f32.mxu0 0.0
        %3269 = vmatmul.mubr.f32.gmra.mxu0 %v3181
        %v3270 = vpop.f32.mrf.mxu0
        %v3271 = vadd.f32 0.0, %v3270
        %v3272 = vpop.f32.mrf.mxu0
        %3273 = vdwg.mxu0
        %v3274 = vadd.f32 %v3172, %v3266
        %v3275 = vadd.f32 %v3177, %v3271
        %v3276 = vld [vmem:[#allocation2 + $0xa] sm:$0xff]
        %v3277 = vld [vmem:[#allocation2 + $0x12] sm:$0xff]
        %s3278 = scalar_lea.vmem [#allocation15], 384
        %v3279 = vld [vmem:[%s3278] sm:$0xff]
        %v3280 = vld [vmem:[%s3278 + $0x8] sm:$0xff]
        %v3281 = vld [vmem:[%s3278 + $0x10] sm:$0xff]
        %v3282 = vld [vmem:[%s3278 + $0x18] sm:$0xff]
        %v3283 = vld [vmem:[%s3278 + $0x20] sm:$0xff]
        %v3284 = vld [vmem:[%s3278 + $0x28] sm:$0xff]
        %v3285 = vld [vmem:[%s3278 + $0x30] sm:$0xff]
        %v3286 = vld [vmem:[%s3278 + $0x38] sm:$0xff]
        %v3287 = vld [vmem:[%s3278 + $0x40] sm:$0xff]
        %v3288 = vld [vmem:[%s3278 + $0x48] sm:$0xff]
        %v3289 = vld [vmem:[%s3278 + $0x50] sm:$0xff]
        %v3290 = vld [vmem:[%s3278 + $0x58] sm:$0xff]
        %v3291 = vld [vmem:[%s3278 + $0x60] sm:$0xff]
        %v3292 = vld [vmem:[%s3278 + $0x68] sm:$0xff]
        %v3293 = vld [vmem:[%s3278 + $0x70] sm:$0xff]
        %v3294 = vld [vmem:[%s3278 + $0x78] sm:$0xff]
        %3295 = vmatprep.subr.mxu0 0.0
        %3296 = vmatpush1.msra.mxu0 %v3294
        %3297 = vmatprep.subr.mxu0 0.0
        %3298 = vmatpush1.msra.mxu0 %v3293
        %3299 = vmatprep.subr.mxu0 0.0
        %3300 = vmatpush1.msra.mxu0 %v3292
        %3301 = vmatprep.subr.mxu0 0.0
        %3302 = vmatpush1.msra.mxu0 %v3291
        %3303 = vmatprep.subr.mxu0 0.0
        %3304 = vmatpush1.msra.mxu0 %v3290
        %3305 = vmatprep.subr.mxu0 0.0
        %3306 = vmatpush1.msra.mxu0 %v3289
        %3307 = vmatprep.subr.mxu0 0.0
        %3308 = vmatpush1.msra.mxu0 %v3288
        %3309 = vmatprep.subr.mxu0 0.0
        %3310 = vmatpush1.msra.mxu0 %v3287
        %3311 = vmatprep.subr.mxu0 0.0
        %3312 = vmatpush1.msra.mxu0 %v3286
        %3313 = vmatprep.subr.mxu0 0.0
        %3314 = vmatpush1.msra.mxu0 %v3285
        %3315 = vmatprep.subr.mxu0 0.0
        %3316 = vmatpush1.msra.mxu0 %v3284
        %3317 = vmatprep.subr.mxu0 0.0
        %3318 = vmatpush1.msra.mxu0 %v3283
        %3319 = vmatprep.subr.mxu0 0.0
        %3320 = vmatpush1.msra.mxu0 %v3282
        %3321 = vmatprep.subr.mxu0 0.0
        %3322 = vmatpush1.msra.mxu0 %v3281
        %3323 = vmatprep.subr.mxu0 0.0
        %3324 = vmatpush1.msra.mxu0 %v3280
        %3325 = vmatprep.subr.mxu0 0.0
        %3326 = vmatpush1.msra.mxu0 %v3279
        %3327 = vmatprep.subr.mxu0 0.0
        %3328 = vmatpush2.msra.mxu0 0.0
        %3329 = vmatprep.subr.mxu0 0.0
        %3330 = vmatpush2.msra.mxu0 0.0
        %3331 = vmatprep.subr.mxu0 0.0
        %3332 = vmatpush2.msra.mxu0 0.0
        %3333 = vmatprep.subr.mxu0 0.0
        %3334 = vmatpush2.msra.mxu0 0.0
        %3335 = vmatprep.subr.mxu0 0.0
        %3336 = vmatpush2.msra.mxu0 0.0
        %3337 = vmatprep.subr.mxu0 0.0
        %3338 = vmatpush2.msra.mxu0 0.0
        %3339 = vmatprep.subr.mxu0 0.0
        %3340 = vmatpush2.msra.mxu0 0.0
        %3341 = vmatprep.subr.mxu0 0.0
        %3342 = vmatpush2.msra.mxu0 0.0
        %3343 = vmatprep.subr.mxu0 0.0
        %3344 = vmatpush2.msra.mxu0 0.0
        %3345 = vmatprep.subr.mxu0 0.0
        %3346 = vmatpush2.msra.mxu0 0.0
        %3347 = vmatprep.subr.mxu0 0.0
        %3348 = vmatpush2.msra.mxu0 0.0
        %3349 = vmatprep.subr.mxu0 0.0
        %3350 = vmatpush2.msra.mxu0 0.0
        %3351 = vmatprep.subr.mxu0 0.0
        %3352 = vmatpush2.msra.mxu0 0.0
        %3353 = vmatprep.subr.mxu0 0.0
        %3354 = vmatpush2.msra.mxu0 0.0
        %3355 = vmatprep.subr.mxu0 0.0
        %3356 = vmatpush2.msra.mxu0 0.0
        %3357 = vmatprep.subr.mxu0 0.0
        %3358 = vmatpush2.msra.mxu0 0.0
        %3359 = vmatprep.mubr.f32.mxu0 0.0
        %3360 = vmatmul.mubr.f32.gmra.mxu0 %v3276
        %v3361 = vpop.f32.mrf.mxu0
        %v3362 = vadd.f32 0.0, %v3361
        %v3363 = vpop.f32.mrf.mxu0
        %3364 = vmatprep.mubr.f32.mxu0 0.0
        %3365 = vmatmul.mubr.f32.gmra.mxu0 %v3277
        %v3366 = vpop.f32.mrf.mxu0
        %v3367 = vadd.f32 0.0, %v3366
        %v3368 = vpop.f32.mrf.mxu0
        %3369 = vdwg.mxu0
        %v3370 = vadd.f32 %v3274, %v3362
        %v3371 = vadd.f32 %v3275, %v3367
        %v3372 = vld [vmem:[#allocation2 + $0xc] sm:$0xff]
        %v3373 = vld [vmem:[#allocation2 + $0x14] sm:$0xff]
        %s3374 = scalar_lea.vmem [#allocation15], 512
        %v3375 = vld [vmem:[%s3374] sm:$0xff]
        %v3376 = vld [vmem:[%s3374 + $0x8] sm:$0xff]
        %v3377 = vld [vmem:[%s3374 + $0x10] sm:$0xff]
        %v3378 = vld [vmem:[%s3374 + $0x18] sm:$0xff]
        %v3379 = vld [vmem:[%s3374 + $0x20] sm:$0xff]
        %v3380 = vld [vmem:[%s3374 + $0x28] sm:$0xff]
        %v3381 = vld [vmem:[%s3374 + $0x30] sm:$0xff]
        %v3382 = vld [vmem:[%s3374 + $0x38] sm:$0xff]
        %v3383 = vld [vmem:[%s3374 + $0x40] sm:$0xff]
        %v3384 = vld [vmem:[%s3374 + $0x48] sm:$0xff]
        %v3385 = vld [vmem:[%s3374 + $0x50] sm:$0xff]
        %v3386 = vld [vmem:[%s3374 + $0x58] sm:$0xff]
        %v3387 = vld [vmem:[%s3374 + $0x60] sm:$0xff]
        %v3388 = vld [vmem:[%s3374 + $0x68] sm:$0xff]
        %v3389 = vld [vmem:[%s3374 + $0x70] sm:$0xff]
        %v3390 = vld [vmem:[%s3374 + $0x78] sm:$0xff]
        %3391 = vmatprep.subr.mxu0 0.0
        %3392 = vmatpush1.msra.mxu0 %v3390
        %3393 = vmatprep.subr.mxu0 0.0
        %3394 = vmatpush1.msra.mxu0 %v3389
        %3395 = vmatprep.subr.mxu0 0.0
        %3396 = vmatpush1.msra.mxu0 %v3388
        %3397 = vmatprep.subr.mxu0 0.0
        %3398 = vmatpush1.msra.mxu0 %v3387
        %3399 = vmatprep.subr.mxu0 0.0
        %3400 = vmatpush1.msra.mxu0 %v3386
        %3401 = vmatprep.subr.mxu0 0.0
        %3402 = vmatpush1.msra.mxu0 %v3385
        %3403 = vmatprep.subr.mxu0 0.0
        %3404 = vmatpush1.msra.mxu0 %v3384
        %3405 = vmatprep.subr.mxu0 0.0
        %3406 = vmatpush1.msra.mxu0 %v3383
        %3407 = vmatprep.subr.mxu0 0.0
        %3408 = vmatpush1.msra.mxu0 %v3382
        %3409 = vmatprep.subr.mxu0 0.0
        %3410 = vmatpush1.msra.mxu0 %v3381
        %3411 = vmatprep.subr.mxu0 0.0
        %3412 = vmatpush1.msra.mxu0 %v3380
        %3413 = vmatprep.subr.mxu0 0.0
        %3414 = vmatpush1.msra.mxu0 %v3379
        %3415 = vmatprep.subr.mxu0 0.0
        %3416 = vmatpush1.msra.mxu0 %v3378
        %3417 = vmatprep.subr.mxu0 0.0
        %3418 = vmatpush1.msra.mxu0 %v3377
        %3419 = vmatprep.subr.mxu0 0.0
        %3420 = vmatpush1.msra.mxu0 %v3376
        %3421 = vmatprep.subr.mxu0 0.0
        %3422 = vmatpush1.msra.mxu0 %v3375
        %3423 = vmatprep.subr.mxu0 0.0
        %3424 = vmatpush2.msra.mxu0 0.0
        %3425 = vmatprep.subr.mxu0 0.0
        %3426 = vmatpush2.msra.mxu0 0.0
        %3427 = vmatprep.subr.mxu0 0.0
        %3428 = vmatpush2.msra.mxu0 0.0
        %3429 = vmatprep.subr.mxu0 0.0
        %3430 = vmatpush2.msra.mxu0 0.0
        %3431 = vmatprep.subr.mxu0 0.0
        %3432 = vmatpush2.msra.mxu0 0.0
        %3433 = vmatprep.subr.mxu0 0.0
        %3434 = vmatpush2.msra.mxu0 0.0
        %3435 = vmatprep.subr.mxu0 0.0
        %3436 = vmatpush2.msra.mxu0 0.0
        %3437 = vmatprep.subr.mxu0 0.0
        %3438 = vmatpush2.msra.mxu0 0.0
        %3439 = vmatprep.subr.mxu0 0.0
        %3440 = vmatpush2.msra.mxu0 0.0
        %3441 = vmatprep.subr.mxu0 0.0
        %3442 = vmatpush2.msra.mxu0 0.0
        %3443 = vmatprep.subr.mxu0 0.0
        %3444 = vmatpush2.msra.mxu0 0.0
        %3445 = vmatprep.subr.mxu0 0.0
        %3446 = vmatpush2.msra.mxu0 0.0
        %3447 = vmatprep.subr.mxu0 0.0
        %3448 = vmatpush2.msra.mxu0 0.0
        %3449 = vmatprep.subr.mxu0 0.0
        %3450 = vmatpush2.msra.mxu0 0.0
        %3451 = vmatprep.subr.mxu0 0.0
        %3452 = vmatpush2.msra.mxu0 0.0
        %3453 = vmatprep.subr.mxu0 0.0
        %3454 = vmatpush2.msra.mxu0 0.0
        %3455 = vmatprep.mubr.f32.mxu0 0.0
        %3456 = vmatmul.mubr.f32.gmra.mxu0 %v3372
        %v3457 = vpop.f32.mrf.mxu0
        %v3458 = vadd.f32 0.0, %v3457
        %v3459 = vpop.f32.mrf.mxu0
        %3460 = vmatprep.mubr.f32.mxu0 0.0
        %3461 = vmatmul.mubr.f32.gmra.mxu0 %v3373
        %v3462 = vpop.f32.mrf.mxu0
        %v3463 = vadd.f32 0.0, %v3462
        %v3464 = vpop.f32.mrf.mxu0
        %3465 = vdwg.mxu0
        %v3466 = vadd.f32 %v3370, %v3458
        %v3467 = vadd.f32 %v3371, %v3463
        %v3468 = vld [vmem:[%s14] sm:$0x1]
        %v3470 = vlaneseq
        %v3471 = vshrl.u32 %v3470, 7
        %v3472 = vsub.s32 0, %v3471
        %v3473 = vrot.slane %v3468, %v3472
        %v3475 = vadd.f32 %v3466, %v3473
        %v3476 = vadd.f32 %v3467, %v3473
        %3477 = vst [vmem:[#allocation2 + $0x8] sm:$0xff] %v3475
        %3478 = vst [vmem:[#allocation2 + $0x10] sm:$0xff] %v3476
        %v3479 = vld [vmem:[#allocation2 + $0x7] sm:$0xff]
        %v3480 = vld [vmem:[#allocation2 + $0xf] sm:$0xff]
        %3483 = vrot.lane.b32.xlu0 %v3479, 8
        %v3484 = vpop.permute.xlu0 %3483
        %3485 = vrot.lane.b32.xlu0 %v3480, 8
        %v3486 = vpop.permute.xlu0 %3485
        %v3489 = vld [vmem:[%s15] sm:$0xff]
        %v3490 = vld [vmem:[%s15 + $0x8] sm:$0xff]
        %v3491 = vadd.f32 %v3484, %v3489
        %v3492 = vadd.f32 %v3486, %v3490
        %s3493 = scalar_lea.vmem %s15, 16
        %v3494 = vld [vmem:[%s3493] sm:$0xff]
        %v3495 = vld [vmem:[%s3493 + $0x8] sm:$0xff]
        %v3496 = vadd.f32 %v3479, %v3494
        %v3497 = vadd.f32 %v3480, %v3495
        %v3498 = vmax.f32 %v3491, %v3496
        %v3499 = vmax.f32 %v3492, %v3497
        %3500 = vrot.lane.b32.xlu0 %v3479, 120
        %v3501 = vpop.permute.xlu0 %3500
        %3502 = vrot.lane.b32.xlu0 %v3480, 120
        %v3503 = vpop.permute.xlu0 %3502
        %s3506 = scalar_lea.vmem %s15, 32
        %v3507 = vld [vmem:[%s3506] sm:$0xff]
        %v3508 = vld [vmem:[%s3506 + $0x8] sm:$0xff]
        %v3509 = vadd.f32 %v3501, %v3507
        %v3510 = vadd.f32 %v3503, %v3508
        %v3511 = vmax.f32 %v3498, %v3509
        %v3512 = vmax.f32 %v3499, %v3510
        %v3513 = vld [vmem:[#allocation2 + $0x8] sm:$0xff]
        %v3514 = vld [vmem:[#allocation2 + $0x10] sm:$0xff]
        %3517 = vrot.lane.b32.xlu0 %v3513, 8
        %v3518 = vpop.permute.xlu0 %3517
        %3519 = vrot.lane.b32.xlu0 %v3514, 8
        %v3520 = vpop.permute.xlu0 %3519
        %s3523 = scalar_lea.vmem %s15, 48
        %v3524 = vld [vmem:[%s3523] sm:$0xff]
        %v3525 = vld [vmem:[%s3523 + $0x8] sm:$0xff]
        %v3526 = vadd.f32 %v3518, %v3524
        %v3527 = vadd.f32 %v3520, %v3525
        %v3528 = vmax.f32 %v3511, %v3526
        %v3529 = vmax.f32 %v3512, %v3527
        %s3530 = scalar_lea.vmem %s15, 64
        %v3531 = vld [vmem:[%s3530] sm:$0xff]
        %v3532 = vld [vmem:[%s3530 + $0x8] sm:$0xff]
        %v3533 = vadd.f32 %v3513, %v3531
        %v3534 = vadd.f32 %v3514, %v3532
        %v3535 = vmax.f32 %v3528, %v3533
        %v3536 = vmax.f32 %v3529, %v3534
        %3537 = vrot.lane.b32.xlu0 %v3513, 120
        %v3538 = vpop.permute.xlu0 %3537
        %3539 = vrot.lane.b32.xlu0 %v3514, 120
        %v3540 = vpop.permute.xlu0 %3539
        %s3543 = scalar_lea.vmem %s15, 80
        %v3544 = vld [vmem:[%s3543] sm:$0xff]
        %v3545 = vld [vmem:[%s3543 + $0x8] sm:$0xff]
        %v3546 = vadd.f32 %v3538, %v3544
        %v3547 = vadd.f32 %v3540, %v3545
        %v3548 = vmax.f32 %v3535, %v3546
        %v3549 = vmax.f32 %v3536, %v3547
        %v3550 = vld [vmem:[#allocation2 + $0x9] sm:$0xff]
        %v3551 = vld [vmem:[#allocation2 + $0x11] sm:$0xff]
        %3554 = vrot.lane.b32.xlu0 %v3550, 8
        %v3555 = vpop.permute.xlu0 %3554
        %3556 = vrot.lane.b32.xlu0 %v3551, 8
        %v3557 = vpop.permute.xlu0 %3556
        %s3560 = scalar_lea.vmem %s15, 96
        %v3561 = vld [vmem:[%s3560] sm:$0xff]
        %v3562 = vld [vmem:[%s3560 + $0x8] sm:$0xff]
        %v3563 = vadd.f32 %v3555, %v3561
        %v3564 = vadd.f32 %v3557, %v3562
        %v3565 = vmax.f32 %v3548, %v3563
        %v3566 = vmax.f32 %v3549, %v3564
        %s3567 = scalar_lea.vmem %s15, 112
        %v3568 = vld [vmem:[%s3567] sm:$0xff]
        %v3569 = vld [vmem:[%s3567 + $0x8] sm:$0xff]
        %v3570 = vadd.f32 %v3550, %v3568
        %v3571 = vadd.f32 %v3551, %v3569
        %v3572 = vmax.f32 %v3565, %v3570
        %v3573 = vmax.f32 %v3566, %v3571
        %3574 = vrot.lane.b32.xlu0 %v3550, 120
        %v3575 = vpop.permute.xlu0 %3574
        %3576 = vrot.lane.b32.xlu0 %v3551, 120
        %v3577 = vpop.permute.xlu0 %3576
        %s3580 = scalar_lea.vmem %s15, 128
        %v3581 = vld [vmem:[%s3580] sm:$0xff]
        %v3582 = vld [vmem:[%s3580 + $0x8] sm:$0xff]
        %v3583 = vadd.f32 %v3575, %v3581
        %v3584 = vadd.f32 %v3577, %v3582
        %v3585 = vmax.f32 %v3572, %v3583
        %v3586 = vmax.f32 %v3573, %v3584
        %v3587 = vld [vmem:[%s16] sm:$0x1]
        %v3589 = vlaneseq
        %v3590 = vshrl.u32 %v3589, 7
        %v3591 = vsub.s32 0, %v3590
        %v3592 = vrot.slane %v3587, %v3591
        %v3594 = vmul.f32 %v3585, %v3592
        %v3595 = vmul.f32 %v3586, %v3592
        %v3596 = vld [vmem:[%s17] sm:$0x1]
        %v3598 = vlaneseq
        %v3599 = vshrl.u32 %v3598, 7
        %v3600 = vsub.s32 0, %v3599
        %v3601 = vrot.slane %v3596, %v3600
        %v3603 = vadd.f32 %v3594, %v3601
        %v3604 = vadd.f32 %v3595, %v3601
        %3605 = vst [vmem:[#allocation2 + $0x8] sm:$0xff] %v3603
        %3606 = vst [vmem:[#allocation2 + $0x10] sm:$0xff] %v3604
        %v3607 = vld [vmem:[#allocation2 + $0x7] sm:$0xff]
        %v3608 = vld [vmem:[#allocation2 + $0xf] sm:$0xff]
        %v3609 = vld [vmem:[#allocation2 + $0x8] sm:$0xff]
        %v3610 = vld [vmem:[#allocation2 + $0x10] sm:$0xff]
        %v3611 = vadd.f32 %v3607, %v3609
        %v3612 = vadd.f32 %v3608, %v3610
        %v3613 = vld [vmem:[#allocation2 + $0x9] sm:$0xff]
        %v3614 = vld [vmem:[#allocation2 + $0x11] sm:$0xff]
        %v3615 = vadd.f32 %v3611, %v3613
        %v3616 = vadd.f32 %v3612, %v3614
        %v3617 = vld [vmem:[#allocation16] sm:$0xff]
        %v3618 = vld [vmem:[#allocation16 + $0x8] sm:$0xff]
        %v3619 = vld [vmem:[#allocation16 + $0x10] sm:$0xff]
        %v3620 = vld [vmem:[#allocation16 + $0x18] sm:$0xff]
        %v3621 = vld [vmem:[#allocation16 + $0x20] sm:$0xff]
        %v3622 = vld [vmem:[#allocation16 + $0x28] sm:$0xff]
        %v3623 = vld [vmem:[#allocation16 + $0x30] sm:$0xff]
        %v3624 = vld [vmem:[#allocation16 + $0x38] sm:$0xff]
        %v3625 = vld [vmem:[#allocation16 + $0x40] sm:$0xff]
        %v3626 = vld [vmem:[#allocation16 + $0x48] sm:$0xff]
        %v3627 = vld [vmem:[#allocation16 + $0x50] sm:$0xff]
        %v3628 = vld [vmem:[#allocation16 + $0x58] sm:$0xff]
        %v3629 = vld [vmem:[#allocation16 + $0x60] sm:$0xff]
        %v3630 = vld [vmem:[#allocation16 + $0x68] sm:$0xff]
        %v3631 = vld [vmem:[#allocation16 + $0x70] sm:$0xff]
        %v3632 = vld [vmem:[#allocation16 + $0x78] sm:$0xff]
        %3633 = vmatprep.subr.mxu0 0.0
        %3634 = vmatpush1.msra.mxu0 %v3632
        %3635 = vmatprep.subr.mxu0 0.0
        %3636 = vmatpush1.msra.mxu0 %v3631
        %3637 = vmatprep.subr.mxu0 0.0
        %3638 = vmatpush1.msra.mxu0 %v3630
        %3639 = vmatprep.subr.mxu0 0.0
        %3640 = vmatpush1.msra.mxu0 %v3629
        %3641 = vmatprep.subr.mxu0 0.0
        %3642 = vmatpush1.msra.mxu0 %v3628
        %3643 = vmatprep.subr.mxu0 0.0
        %3644 = vmatpush1.msra.mxu0 %v3627
        %3645 = vmatprep.subr.mxu0 0.0
        %3646 = vmatpush1.msra.mxu0 %v3626
        %3647 = vmatprep.subr.mxu0 0.0
        %3648 = vmatpush1.msra.mxu0 %v3625
        %3649 = vmatprep.subr.mxu0 0.0
        %3650 = vmatpush1.msra.mxu0 %v3624
        %3651 = vmatprep.subr.mxu0 0.0
        %3652 = vmatpush1.msra.mxu0 %v3623
        %3653 = vmatprep.subr.mxu0 0.0
        %3654 = vmatpush1.msra.mxu0 %v3622
        %3655 = vmatprep.subr.mxu0 0.0
        %3656 = vmatpush1.msra.mxu0 %v3621
        %3657 = vmatprep.subr.mxu0 0.0
        %3658 = vmatpush1.msra.mxu0 %v3620
        %3659 = vmatprep.subr.mxu0 0.0
        %3660 = vmatpush1.msra.mxu0 %v3619
        %3661 = vmatprep.subr.mxu0 0.0
        %3662 = vmatpush1.msra.mxu0 %v3618
        %3663 = vmatprep.subr.mxu0 0.0
        %3664 = vmatpush1.msra.mxu0 %v3617
        %3665 = vmatprep.subr.mxu0 0.0
        %3666 = vmatpush2.msra.mxu0 0.0
        %3667 = vmatprep.subr.mxu0 0.0
        %3668 = vmatpush2.msra.mxu0 0.0
        %3669 = vmatprep.subr.mxu0 0.0
        %3670 = vmatpush2.msra.mxu0 0.0
        %3671 = vmatprep.subr.mxu0 0.0
        %3672 = vmatpush2.msra.mxu0 0.0
        %3673 = vmatprep.subr.mxu0 0.0
        %3674 = vmatpush2.msra.mxu0 0.0
        %3675 = vmatprep.subr.mxu0 0.0
        %3676 = vmatpush2.msra.mxu0 0.0
        %3677 = vmatprep.subr.mxu0 0.0
        %3678 = vmatpush2.msra.mxu0 0.0
        %3679 = vmatprep.subr.mxu0 0.0
        %3680 = vmatpush2.msra.mxu0 0.0
        %3681 = vmatprep.subr.mxu0 0.0
        %3682 = vmatpush2.msra.mxu0 0.0
        %3683 = vmatprep.subr.mxu0 0.0
        %3684 = vmatpush2.msra.mxu0 0.0
        %3685 = vmatprep.subr.mxu0 0.0
        %3686 = vmatpush2.msra.mxu0 0.0
        %3687 = vmatprep.subr.mxu0 0.0
        %3688 = vmatpush2.msra.mxu0 0.0
        %3689 = vmatprep.subr.mxu0 0.0
        %3690 = vmatpush2.msra.mxu0 0.0
        %3691 = vmatprep.subr.mxu0 0.0
        %3692 = vmatpush2.msra.mxu0 0.0
        %3693 = vmatprep.subr.mxu0 0.0
        %3694 = vmatpush2.msra.mxu0 0.0
        %3695 = vmatprep.subr.mxu0 0.0
        %3696 = vmatpush2.msra.mxu0 0.0
        %3697 = vmatprep.mubr.f32.mxu0 0.0
        %3698 = vmatmul.mubr.f32.gmra.mxu0 %v3615
        %v3699 = vpop.f32.mrf.mxu0
        %v3700 = vadd.f32 0.0, %v3699
        %v3701 = vpop.f32.mrf.mxu0
        %3702 = vmatprep.mubr.f32.mxu0 0.0
        %3703 = vmatmul.mubr.f32.gmra.mxu0 %v3616
        %v3704 = vpop.f32.mrf.mxu0
        %v3705 = vadd.f32 0.0, %v3704
        %v3706 = vpop.f32.mrf.mxu0
        %3707 = vdwg.mxu0
        %v3708 = vld [vmem:[%s19] sm:$0xff]
        %v3709 = vld [vmem:[%s19 + $0x8] sm:$0xff]
        %v3710 = vmul.f32 %v3700, %v3708
        %v3711 = vmul.f32 %v3705, %v3709
        %v3712 = vld [vmem:[%s20] sm:$0x1]
        %v3714 = vlaneseq
        %v3715 = vshrl.u32 %v3714, 7
        %v3716 = vsub.s32 0, %v3715
        %v3717 = vrot.slane %v3712, %v3716
        %v3719 = vadd.f32 %v3710, %v3717
        %v3720 = vadd.f32 %v3711, %v3717
        %3721 = vst [vmem:[#allocation2 + $0x8] sm:$0xff] %v3719
        %3722 = vst [vmem:[#allocation2 + $0x10] sm:$0xff] %v3720
        %v3723 = vld [vmem:[#allocation2 + $0x8] sm:$0xff]
        %v3724 = vld [vmem:[#allocation2 + $0x10] sm:$0xff]
        %v3726 = vrot.slane %v3723, 1
        %v3728 = vadd.f32 %v3723, %v3726
        %v3729 = vrot.slane %v3723, 2
        %v3731 = vadd.f32 %v3728, %v3729
        %v3732 = vrot.slane %v3723, 3
        %v3734 = vadd.f32 %v3731, %v3732
        %v3735 = vld [vmem:[%s21] sm:$0xff]
        %v3736 = vld [vmem:[%s21 + $0x8] sm:$0xff]
        %v3737 = vld [vmem:[%s21 + $0x10] sm:$0xff]
        %v3738 = vld [vmem:[%s21 + $0x18] sm:$0xff]
        %v3739 = vld [vmem:[%s21 + $0x20] sm:$0xff]
        %v3740 = vld [vmem:[%s21 + $0x28] sm:$0xff]
        %v3741 = vld [vmem:[%s21 + $0x30] sm:$0xff]
        %v3742 = vld [vmem:[%s21 + $0x38] sm:$0xff]
        %v3743 = vld [vmem:[%s21 + $0x40] sm:$0xff]
        %v3744 = vld [vmem:[%s21 + $0x48] sm:$0xff]
        %v3745 = vld [vmem:[%s21 + $0x50] sm:$0xff]
        %v3746 = vld [vmem:[%s21 + $0x58] sm:$0xff]
        %v3747 = vld [vmem:[%s21 + $0x60] sm:$0xff]
        %v3748 = vld [vmem:[%s21 + $0x68] sm:$0xff]
        %v3749 = vld [vmem:[%s21 + $0x70] sm:$0xff]
        %v3750 = vld [vmem:[%s21 + $0x78] sm:$0xff]
        %s3751 = scalar_lea.vmem %s21, 128
        %v3752 = vld [vmem:[%s3751] sm:$0xff]
        %v3753 = vld [vmem:[%s3751 + $0x8] sm:$0xff]
        %v3754 = vld [vmem:[%s3751 + $0x10] sm:$0xff]
        %v3755 = vld [vmem:[%s3751 + $0x18] sm:$0xff]
        %v3756 = vld [vmem:[%s3751 + $0x20] sm:$0xff]
        %v3757 = vld [vmem:[%s3751 + $0x28] sm:$0xff]
        %v3758 = vld [vmem:[%s3751 + $0x30] sm:$0xff]
        %v3759 = vld [vmem:[%s3751 + $0x38] sm:$0xff]
        %v3760 = vld [vmem:[%s3751 + $0x40] sm:$0xff]
        %v3761 = vld [vmem:[%s3751 + $0x48] sm:$0xff]
        %v3762 = vld [vmem:[%s3751 + $0x50] sm:$0xff]
        %v3763 = vld [vmem:[%s3751 + $0x58] sm:$0xff]
        %v3764 = vld [vmem:[%s3751 + $0x60] sm:$0xff]
        %v3765 = vld [vmem:[%s3751 + $0x68] sm:$0xff]
        %v3766 = vld [vmem:[%s3751 + $0x70] sm:$0xff]
        %v3767 = vld [vmem:[%s3751 + $0x78] sm:$0xff]
        %v3769 = vrot.slane %v3734, 4
        %3771 = vmatprep.subr.mxu0 0.0
        %3772 = vmatpush1.msra.mxu0 %v3767
        %3773 = vmatprep.subr.mxu0 0.0
        %3774 = vmatpush1.msra.mxu0 %v3766
        %3775 = vmatprep.subr.mxu0 0.0
        %3776 = vmatpush1.msra.mxu0 %v3765
        %3777 = vmatprep.subr.mxu0 0.0
        %3778 = vmatpush1.msra.mxu0 %v3764
        %3779 = vmatprep.subr.mxu0 0.0
        %3780 = vmatpush1.msra.mxu0 %v3763
        %3781 = vmatprep.subr.mxu0 0.0
        %3782 = vmatpush1.msra.mxu0 %v3762
        %3783 = vmatprep.subr.mxu0 0.0
        %3784 = vmatpush1.msra.mxu0 %v3761
        %3785 = vmatprep.subr.mxu0 0.0
        %3786 = vmatpush1.msra.mxu0 %v3760
        %3787 = vmatprep.subr.mxu0 0.0
        %3788 = vmatpush1.msra.mxu0 %v3759
        %3789 = vmatprep.subr.mxu0 0.0
        %3790 = vmatpush1.msra.mxu0 %v3758
        %3791 = vmatprep.subr.mxu0 0.0
        %3792 = vmatpush1.msra.mxu0 %v3757
        %3793 = vmatprep.subr.mxu0 0.0
        %3794 = vmatpush1.msra.mxu0 %v3756
        %3795 = vmatprep.subr.mxu0 0.0
        %3796 = vmatpush1.msra.mxu0 %v3755
        %3797 = vmatprep.subr.mxu0 0.0
        %3798 = vmatpush1.msra.mxu0 %v3754
        %3799 = vmatprep.subr.mxu0 0.0
        %3800 = vmatpush1.msra.mxu0 %v3753
        %3801 = vmatprep.subr.mxu0 0.0
        %3802 = vmatpush1.msra.mxu0 %v3752
        %3803 = vmatprep.subr.mxu0 0.0
        %3804 = vmatpush2.msra.mxu0 0.0
        %3805 = vmatprep.subr.mxu0 0.0
        %3806 = vmatpush2.msra.mxu0 0.0
        %3807 = vmatprep.subr.mxu0 0.0
        %3808 = vmatpush2.msra.mxu0 0.0
        %3809 = vmatprep.subr.mxu0 0.0
        %3810 = vmatpush2.msra.mxu0 0.0
        %3811 = vmatprep.subr.mxu0 0.0
        %3812 = vmatpush2.msra.mxu0 0.0
        %3813 = vmatprep.subr.mxu0 0.0
        %3814 = vmatpush2.msra.mxu0 0.0
        %3815 = vmatprep.subr.mxu0 0.0
        %3816 = vmatpush2.msra.mxu0 0.0
        %3817 = vmatprep.subr.mxu0 0.0
        %3818 = vmatpush2.msra.mxu0 0.0
        %3819 = vmatprep.subr.mxu0 0.0
        %3820 = vmatpush2.msra.mxu0 0.0
        %3821 = vmatprep.subr.mxu0 0.0
        %3822 = vmatpush2.msra.mxu0 0.0
        %3823 = vmatprep.subr.mxu0 0.0
        %3824 = vmatpush2.msra.mxu0 0.0
        %3825 = vmatprep.subr.mxu0 0.0
        %3826 = vmatpush2.msra.mxu0 0.0
        %3827 = vmatprep.subr.mxu0 0.0
        %3828 = vmatpush2.msra.mxu0 0.0
        %3829 = vmatprep.subr.mxu0 0.0
        %3830 = vmatpush2.msra.mxu0 0.0
        %3831 = vmatprep.subr.mxu0 0.0
        %3832 = vmatpush2.msra.mxu0 0.0
        %3833 = vmatprep.subr.mxu0 0.0
        %3834 = vmatpush2.msra.mxu0 0.0
        %3835 = vmatprep.mubr.f32.mxu0 0.0
        %3836 = vmatmul.mubr.f32.gmra.mxu0 %v3769
        %v3837 = vpop.f32.mrf.mxu0
        %v3838 = vadd.f32 0.0, %v3837
        %v3839 = vpop.f32.mrf.mxu0
        %3840 = vdwg.mxu0
        %3841 = vmatprep.subr.mxu0 0.0
        %3842 = vmatpush1.msra.mxu0 %v3750
        %3843 = vmatprep.subr.mxu0 0.0
        %3844 = vmatpush1.msra.mxu0 %v3749
        %3845 = vmatprep.subr.mxu0 0.0
        %3846 = vmatpush1.msra.mxu0 %v3748
        %3847 = vmatprep.subr.mxu0 0.0
        %3848 = vmatpush1.msra.mxu0 %v3747
        %3849 = vmatprep.subr.mxu0 0.0
        %3850 = vmatpush1.msra.mxu0 %v3746
        %3851 = vmatprep.subr.mxu0 0.0
        %3852 = vmatpush1.msra.mxu0 %v3745
        %3853 = vmatprep.subr.mxu0 0.0
        %3854 = vmatpush1.msra.mxu0 %v3744
        %3855 = vmatprep.subr.mxu0 0.0
        %3856 = vmatpush1.msra.mxu0 %v3743
        %3857 = vmatprep.subr.mxu0 0.0
        %3858 = vmatpush1.msra.mxu0 %v3742
        %3859 = vmatprep.subr.mxu0 0.0
        %3860 = vmatpush1.msra.mxu0 %v3741
        %3861 = vmatprep.subr.mxu0 0.0
        %3862 = vmatpush1.msra.mxu0 %v3740
        %3863 = vmatprep.subr.mxu0 0.0
        %3864 = vmatpush1.msra.mxu0 %v3739
        %3865 = vmatprep.subr.mxu0 0.0
        %3866 = vmatpush1.msra.mxu0 %v3738
        %3867 = vmatprep.subr.mxu0 0.0
        %3868 = vmatpush1.msra.mxu0 %v3737
        %3869 = vmatprep.subr.mxu0 0.0
        %3870 = vmatpush1.msra.mxu0 %v3736
        %3871 = vmatprep.subr.mxu0 0.0
        %3872 = vmatpush1.msra.mxu0 %v3735
        %3873 = vmatprep.subr.mxu0 0.0
        %3874 = vmatpush2.msra.mxu0 0.0
        %3875 = vmatprep.subr.mxu0 0.0
        %3876 = vmatpush2.msra.mxu0 0.0
        %3877 = vmatprep.subr.mxu0 0.0
        %3878 = vmatpush2.msra.mxu0 0.0
        %3879 = vmatprep.subr.mxu0 0.0
        %3880 = vmatpush2.msra.mxu0 0.0
        %3881 = vmatprep.subr.mxu0 0.0
        %3882 = vmatpush2.msra.mxu0 0.0
        %3883 = vmatprep.subr.mxu0 0.0
        %3884 = vmatpush2.msra.mxu0 0.0
        %3885 = vmatprep.subr.mxu0 0.0
        %3886 = vmatpush2.msra.mxu0 0.0
        %3887 = vmatprep.subr.mxu0 0.0
        %3888 = vmatpush2.msra.mxu0 0.0
        %3889 = vmatprep.subr.mxu0 0.0
        %3890 = vmatpush2.msra.mxu0 0.0
        %3891 = vmatprep.subr.mxu0 0.0
        %3892 = vmatpush2.msra.mxu0 0.0
        %3893 = vmatprep.subr.mxu0 0.0
        %3894 = vmatpush2.msra.mxu0 0.0
        %3895 = vmatprep.subr.mxu0 0.0
        %3896 = vmatpush2.msra.mxu0 0.0
        %3897 = vmatprep.subr.mxu0 0.0
        %3898 = vmatpush2.msra.mxu0 0.0
        %3899 = vmatprep.subr.mxu0 0.0
        %3900 = vmatpush2.msra.mxu0 0.0
        %3901 = vmatprep.subr.mxu0 0.0
        %3902 = vmatpush2.msra.mxu0 0.0
        %3903 = vmatprep.subr.mxu0 0.0
        %3904 = vmatpush2.msra.mxu0 0.0
        %3905 = vmatprep.mubr.f32.mxu0 0.0
        %3906 = vmatmul.mubr.f32.gmra.mxu0 %v3734
        %v3907 = vpop.f32.mrf.mxu0
        %v3908 = vadd.f32 %v3838, %v3907
        %v3909 = vpop.f32.mrf.mxu0
        %3910 = vdwg.mxu0
        %v3912 = vrot.slane %v3724, 1
        %v3914 = vadd.f32 %v3724, %v3912
        %v3915 = vrot.slane %v3724, 2
        %v3917 = vadd.f32 %v3914, %v3915
        %v3918 = vrot.slane %v3724, 3
        %v3920 = vadd.f32 %v3917, %v3918
        %s3921 = scalar_lea.vmem %s21, 256
        %v3922 = vld [vmem:[%s3921] sm:$0xff]
        %v3923 = vld [vmem:[%s3921 + $0x8] sm:$0xff]
        %v3924 = vld [vmem:[%s3921 + $0x10] sm:$0xff]
        %v3925 = vld [vmem:[%s3921 + $0x18] sm:$0xff]
        %v3926 = vld [vmem:[%s3921 + $0x20] sm:$0xff]
        %v3927 = vld [vmem:[%s3921 + $0x28] sm:$0xff]
        %v3928 = vld [vmem:[%s3921 + $0x30] sm:$0xff]
        %v3929 = vld [vmem:[%s3921 + $0x38] sm:$0xff]
        %v3930 = vld [vmem:[%s3921 + $0x40] sm:$0xff]
        %v3931 = vld [vmem:[%s3921 + $0x48] sm:$0xff]
        %v3932 = vld [vmem:[%s3921 + $0x50] sm:$0xff]
        %v3933 = vld [vmem:[%s3921 + $0x58] sm:$0xff]
        %v3934 = vld [vmem:[%s3921 + $0x60] sm:$0xff]
        %v3935 = vld [vmem:[%s3921 + $0x68] sm:$0xff]
        %v3936 = vld [vmem:[%s3921 + $0x70] sm:$0xff]
        %v3937 = vld [vmem:[%s3921 + $0x78] sm:$0xff]
        %3938 = vmatprep.subr.mxu0 0.0
        %3939 = vmatpush1.msra.mxu0 %v3937
        %3940 = vmatprep.subr.mxu0 0.0
        %3941 = vmatpush1.msra.mxu0 %v3936
        %3942 = vmatprep.subr.mxu0 0.0
        %3943 = vmatpush1.msra.mxu0 %v3935
        %3944 = vmatprep.subr.mxu0 0.0
        %3945 = vmatpush1.msra.mxu0 %v3934
        %3946 = vmatprep.subr.mxu0 0.0
        %3947 = vmatpush1.msra.mxu0 %v3933
        %3948 = vmatprep.subr.mxu0 0.0
        %3949 = vmatpush1.msra.mxu0 %v3932
        %3950 = vmatprep.subr.mxu0 0.0
        %3951 = vmatpush1.msra.mxu0 %v3931
        %3952 = vmatprep.subr.mxu0 0.0
        %3953 = vmatpush1.msra.mxu0 %v3930
        %3954 = vmatprep.subr.mxu0 0.0
        %3955 = vmatpush1.msra.mxu0 %v3929
        %3956 = vmatprep.subr.mxu0 0.0
        %3957 = vmatpush1.msra.mxu0 %v3928
        %3958 = vmatprep.subr.mxu0 0.0
        %3959 = vmatpush1.msra.mxu0 %v3927
        %3960 = vmatprep.subr.mxu0 0.0
        %3961 = vmatpush1.msra.mxu0 %v3926
        %3962 = vmatprep.subr.mxu0 0.0
        %3963 = vmatpush1.msra.mxu0 %v3925
        %3964 = vmatprep.subr.mxu0 0.0
        %3965 = vmatpush1.msra.mxu0 %v3924
        %3966 = vmatprep.subr.mxu0 0.0
        %3967 = vmatpush1.msra.mxu0 %v3923
        %3968 = vmatprep.subr.mxu0 0.0
        %3969 = vmatpush1.msra.mxu0 %v3922
        %3970 = vmatprep.subr.mxu0 0.0
        %3971 = vmatpush2.msra.mxu0 0.0
        %3972 = vmatprep.subr.mxu0 0.0
        %3973 = vmatpush2.msra.mxu0 0.0
        %3974 = vmatprep.subr.mxu0 0.0
        %3975 = vmatpush2.msra.mxu0 0.0
        %3976 = vmatprep.subr.mxu0 0.0
        %3977 = vmatpush2.msra.mxu0 0.0
        %3978 = vmatprep.subr.mxu0 0.0
        %3979 = vmatpush2.msra.mxu0 0.0
        %3980 = vmatprep.subr.mxu0 0.0
        %3981 = vmatpush2.msra.mxu0 0.0
        %3982 = vmatprep.subr.mxu0 0.0
        %3983 = vmatpush2.msra.mxu0 0.0
        %3984 = vmatprep.subr.mxu0 0.0
        %3985 = vmatpush2.msra.mxu0 0.0
        %3986 = vmatprep.subr.mxu0 0.0
        %3987 = vmatpush2.msra.mxu0 0.0
        %3988 = vmatprep.subr.mxu0 0.0
        %3989 = vmatpush2.msra.mxu0 0.0
        %3990 = vmatprep.subr.mxu0 0.0
        %3991 = vmatpush2.msra.mxu0 0.0
        %3992 = vmatprep.subr.mxu0 0.0
        %3993 = vmatpush2.msra.mxu0 0.0
        %3994 = vmatprep.subr.mxu0 0.0
        %3995 = vmatpush2.msra.mxu0 0.0
        %3996 = vmatprep.subr.mxu0 0.0
        %3997 = vmatpush2.msra.mxu0 0.0
        %3998 = vmatprep.subr.mxu0 0.0
        %3999 = vmatpush2.msra.mxu0 0.0
        %4000 = vmatprep.subr.mxu0 0.0
        %4001 = vmatpush2.msra.mxu0 0.0
        %4002 = vmatprep.mubr.f32.mxu0 0.0
        %4003 = vmatmul.mubr.f32.gmra.mxu0 %v3920
        %v4004 = vpop.f32.mrf.mxu0
        %v4005 = vadd.f32 0.0, %v4004
        %v4006 = vpop.f32.mrf.mxu0
        %4007 = vdwg.mxu0
        %v4008 = vadd.f32 %v3908, %v4005
        %s4009 = scalar_lea.vmem %s21, 384
        %v4010 = vld [vmem:[%s4009] sm:$0xff]
        %v4011 = vld [vmem:[%s4009 + $0x8] sm:$0xff]
        %v4012 = vld [vmem:[%s4009 + $0x10] sm:$0xff]
        %v4013 = vld [vmem:[%s4009 + $0x18] sm:$0xff]
        %v4014 = vld [vmem:[%s4009 + $0x20] sm:$0xff]
        %v4015 = vld [vmem:[%s4009 + $0x28] sm:$0xff]
        %v4016 = vld [vmem:[%s4009 + $0x30] sm:$0xff]
        %v4017 = vld [vmem:[%s4009 + $0x38] sm:$0xff]
        %v4018 = vld [vmem:[%s4009 + $0x40] sm:$0xff]
        %v4019 = vld [vmem:[%s4009 + $0x48] sm:$0xff]
        %v4020 = vld [vmem:[%s4009 + $0x50] sm:$0xff]
        %v4021 = vld [vmem:[%s4009 + $0x58] sm:$0xff]
        %v4022 = vld [vmem:[%s4009 + $0x60] sm:$0xff]
        %v4023 = vld [vmem:[%s4009 + $0x68] sm:$0xff]
        %v4024 = vld [vmem:[%s4009 + $0x70] sm:$0xff]
        %v4025 = vld [vmem:[%s4009 + $0x78] sm:$0xff]
        %v4027 = vrot.slane %v3920, 4
        %4029 = vmatprep.subr.mxu0 0.0
        %4030 = vmatpush1.msra.mxu0 %v4025
        %4031 = vmatprep.subr.mxu0 0.0
        %4032 = vmatpush1.msra.mxu0 %v4024
        %4033 = vmatprep.subr.mxu0 0.0
        %4034 = vmatpush1.msra.mxu0 %v4023
        %4035 = vmatprep.subr.mxu0 0.0
        %4036 = vmatpush1.msra.mxu0 %v4022
        %4037 = vmatprep.subr.mxu0 0.0
        %4038 = vmatpush1.msra.mxu0 %v4021
        %4039 = vmatprep.subr.mxu0 0.0
        %4040 = vmatpush1.msra.mxu0 %v4020
        %4041 = vmatprep.subr.mxu0 0.0
        %4042 = vmatpush1.msra.mxu0 %v4019
        %4043 = vmatprep.subr.mxu0 0.0
        %4044 = vmatpush1.msra.mxu0 %v4018
        %4045 = vmatprep.subr.mxu0 0.0
        %4046 = vmatpush1.msra.mxu0 %v4017
        %4047 = vmatprep.subr.mxu0 0.0
        %4048 = vmatpush1.msra.mxu0 %v4016
        %4049 = vmatprep.subr.mxu0 0.0
        %4050 = vmatpush1.msra.mxu0 %v4015
        %4051 = vmatprep.subr.mxu0 0.0
        %4052 = vmatpush1.msra.mxu0 %v4014
        %4053 = vmatprep.subr.mxu0 0.0
        %4054 = vmatpush1.msra.mxu0 %v4013
        %4055 = vmatprep.subr.mxu0 0.0
        %4056 = vmatpush1.msra.mxu0 %v4012
        %4057 = vmatprep.subr.mxu0 0.0
        %4058 = vmatpush1.msra.mxu0 %v4011
        %4059 = vmatprep.subr.mxu0 0.0
        %4060 = vmatpush1.msra.mxu0 %v4010
        %4061 = vmatprep.subr.mxu0 0.0
        %4062 = vmatpush2.msra.mxu0 0.0
        %4063 = vmatprep.subr.mxu0 0.0
        %4064 = vmatpush2.msra.mxu0 0.0
        %4065 = vmatprep.subr.mxu0 0.0
        %4066 = vmatpush2.msra.mxu0 0.0
        %4067 = vmatprep.subr.mxu0 0.0
        %4068 = vmatpush2.msra.mxu0 0.0
        %4069 = vmatprep.subr.mxu0 0.0
        %4070 = vmatpush2.msra.mxu0 0.0
        %4071 = vmatprep.subr.mxu0 0.0
        %4072 = vmatpush2.msra.mxu0 0.0
        %4073 = vmatprep.subr.mxu0 0.0
        %4074 = vmatpush2.msra.mxu0 0.0
        %4075 = vmatprep.subr.mxu0 0.0
        %4076 = vmatpush2.msra.mxu0 0.0
        %4077 = vmatprep.subr.mxu0 0.0
        %4078 = vmatpush2.msra.mxu0 0.0
        %4079 = vmatprep.subr.mxu0 0.0
        %4080 = vmatpush2.msra.mxu0 0.0
        %4081 = vmatprep.subr.mxu0 0.0
        %4082 = vmatpush2.msra.mxu0 0.0
        %4083 = vmatprep.subr.mxu0 0.0
        %4084 = vmatpush2.msra.mxu0 0.0
        %4085 = vmatprep.subr.mxu0 0.0
        %4086 = vmatpush2.msra.mxu0 0.0
        %4087 = vmatprep.subr.mxu0 0.0
        %4088 = vmatpush2.msra.mxu0 0.0
        %4089 = vmatprep.subr.mxu0 0.0
        %4090 = vmatpush2.msra.mxu0 0.0
        %4091 = vmatprep.subr.mxu0 0.0
        %4092 = vmatpush2.msra.mxu0 0.0
        %4093 = vmatprep.mubr.f32.mxu0 0.0
        %4094 = vmatmul.mubr.f32.gmra.mxu0 %v4027
        %v4095 = vpop.f32.mrf.mxu0
        %v4096 = vadd.f32 0.0, %v4095
        %v4097 = vpop.f32.mrf.mxu0
        %4098 = vdwg.mxu0
        %v4099 = vadd.f32 %v4008, %v4096
        %v4100 = vld [vmem:[%s22] sm:$0x1]
        %v4101 = vadd.f32 %v4099, %v4100
        %vm4102 = vcmask 73728
        %4103 = vst.msk [vmem:[%s829] sm:$0x1] %vm4102, %v4101
        %s4104 = sand.u32 %s540, 1
        %s4105 = scalar_lea.sflag [#allocation6], %s4104
        %s4106 = sand.u32 %s540, 1
        %s4107 = scalar_lea.vmem [#allocation18], %s4106
        // Predicated region
        $region145: #{tpu_custom_call.1} parent=111 // pred_check
          %p4108 = pneg %p550
        $region146: #{tpu_custom_call.1} parent=111 // pred_check_branch
          %4110 = sbr.rel (%p4108) target = $region148
        $region147: #{tpu_custom_call.1} parent=111 // pred_region
          %s4112 = ssub.s32 16, 16
          %4113 = vsyncadd %s4105, %s4112
          %s4114 = smul.addr %s44, 16
          %s4115 = scalar_lea.hbm %s23, %s4114
          %s4117 = sshll.u32 %s4107, 4
          %s4118 = int_to_ptr.vmem [resolvable:$true] %s4117
          %4120 = dma.vmem_to_hbm [thread:$0]  %s4118, 16, %s4115, %s4105
        $region148: #{tpu_custom_call.1} parent=111 // pred_fallthru
          _
      $region112: #{tpu_custom_call.1} parent=5 // pred_fallthru
        _
      %p4121 = scmp.le.s32.totalorder 2, %s39
      // Predicated region
      $region149: #{tpu_custom_call.1} parent=5 // pred_check
        %p4122 = pneg %p4121
      $region150: #{tpu_custom_call.1} parent=5 // pred_check_branch
        %4124 = sbr.rel (%p4122) target = $region152
      $region151: #{tpu_custom_call.1} parent=5 // pred_region
        %s4125 = ssub.s32 %s39, 2
        // Predicated region
        $region153: #{tpu_custom_call.1} parent=151 // pred_check
          %p4126 = pneg %p556
        $region154: #{tpu_custom_call.1} parent=151 // pred_check_branch
          %4128 = sbr.rel (%p4126) target = $region156
        $region155: #{tpu_custom_call.1} parent=151 // pred_region
          %s4129 = sand.u32 %s541, 1
          %s4130 = scalar_lea.sflag [#allocation6], %s4129
          %s4131 = sand.u32 %s541, 1
          %s4132 = scalar_lea.vmem [#allocation18], %s4131
          %4133 = dma.done %s4130, 16
        $region156: #{tpu_custom_call.1} parent=151 // pred_fallthru
          _
      $region152: #{tpu_custom_call.1} parent=5 // pred_fallthru
        _
    $region6: #{tpu_custom_call.1} parent=1 // loop_footer
      %s43 = sadd.s32 1, %s39
    $region7: #{tpu_custom_call.1} parent=1 // loop_footer_branch
      %38 = sbr.rel target = $region3
    $region8: #{tpu_custom_call.1} parent=1 // loop_exit
      _
    %4134 = vsyncpa [#allocation5], 1
    %s4135 = scalar_lea.sflag [#allocation5], 1
    %4136 = vsyncpa %s4135, 1
    %4137 = vsyncpa [#allocation8], 1
    %4138 = vsyncpa [#allocation11], 1
    %4139 = vsyncpa [#allocation14], 1
    %4140 = vsyncpa [#allocation17], 1
    %4141 = vsyncpa [#allocation6], 1
    %s4142 = scalar_lea.sflag [#allocation6], 1
    %4143 = vsyncpa %s4142, 1

</llo_original>
